<compile_context>
chip_gen: v5e
topology: v5e:2x2
jax: 0.10.0
libtpu: 0.0.40
codegen_flags: <defaults>
</compile_context>

<pallas_src>
import math
import functools

import jax
import jax.numpy as jnp
from jax import lax
from jax.experimental import pallas as pl
from jax.experimental.pallas import tpu as pltpu


# ----------------------------------------------------------------------------
# In-kernel helpers
# ----------------------------------------------------------------------------
def _layernorm(z, g, b, eps):
    """LayerNorm over last dim. z: (S, D) f32; g, b: (1, D) f32."""
    mean = jnp.mean(z, axis=-1, keepdims=True)
    var = jnp.mean(jnp.square(z - mean), axis=-1, keepdims=True)
    return (z - mean) * lax.rsqrt(var + eps) * g + b


# ----------------------------------------------------------------------------
# Kernel 1: fc1 + positional encoding + full TransformerEncoder stack (fused)
# ----------------------------------------------------------------------------
def _encoder_stack_kernel(x_ref, fc1w_ref, fc1b_ref, pe_ref,
                          wqkv_ref, bqkv_ref, wo_ref, bo_ref,
                          ln1g_ref, ln1b_ref, w1_ref, b1_ref, w2_ref, b2_ref,
                          ln2g_ref, ln2b_ref, o_ref, *, nhead, eps):
    # --- fc1 projection + positional-encoding add (dropout -> identity) ---
    x = jnp.dot(x_ref[...].astype(jnp.float32), fc1w_ref[...],
                preferred_element_type=jnp.float32)
    x = x + fc1b_ref[...] + pe_ref[...]                       # (S, D)

    S, D = x.shape
    dh = D // nhead
    scale = 1.0 / math.sqrt(dh)
    num_layers = wqkv_ref.shape[0]
    contract_last = (((1,), (1,)), ((), ()))                  # (S,dh)x(S,dh)->(S,S)

    # --- static layer loop: everything stays on-chip ---
    for l in range(num_layers):
        # fused QKV projection (single MXU matmul)
        qkv = jnp.dot(x, wqkv_ref[l], preferred_element_type=jnp.float32) + bqkv_ref[l]
        q = qkv[:, :D] * scale
        k = qkv[:, D:2 * D]
        v = qkv[:, 2 * D:]

        # multi-head self-attention: static per-head loop
        heads = []
        for h in range(nhead):
            sl = slice(h * dh, (h + 1) * dh)
            s = lax.dot_general(q[:, sl], k[:, sl], contract_last,
                                preferred_element_type=jnp.float32)
            s = s - jnp.max(s, axis=-1, keepdims=True)
            p = jnp.exp(s)
            p = p * pl.reciprocal(jnp.sum(p, axis=-1, keepdims=True), approx=True)
            heads.append(jnp.dot(p, v[:, sl], preferred_element_type=jnp.float32))
        attn = jnp.concatenate(heads, axis=-1)                # (S, D) lane-dense
        attn = jnp.dot(attn, wo_ref[l], preferred_element_type=jnp.float32) + bo_ref[l]

        # dropout1 -> identity (inference); residual + LayerNorm1
        z = _layernorm(x + attn, ln1g_ref[l], ln1b_ref[l], eps)

        # feed-forward: lin1 + ReLU + lin2; (S, d_ff) intermediate stays in VMEM
        hmid = jnp.dot(z, w1_ref[l], preferred_element_type=jnp.float32) + b1_ref[l]
        hmid = jnp.maximum(hmid, 0.0)
        ff = jnp.dot(hmid, w2_ref[l], preferred_element_type=jnp.float32) + b2_ref[l]

        # dropout2 -> identity (inference); residual + LayerNorm2
        x = _layernorm(z + ff, ln2g_ref[l], ln2b_ref[l], eps)

    o_ref[...] = x.astype(o_ref.dtype)


def encoder_stack(params, x2, pe_slice, *, batch, seq_len, nhead, eps=1e-5):
    """x2: (B*S, input_dim) -> (B*S, D). One pallas_call for fc1+PE+all layers."""
    M, Kin = x2.shape
    enc = params["enc"]
    L, D, threeD = enc["wqkv"].shape
    F = enc["w1"].shape[2]
    const = lambda bb: (0, 0)
    const3 = lambda bb: (0, 0, 0)      # stacked weights: resident across grid steps
    return pl.pallas_call(
        functools.partial(_encoder_stack_kernel, nhead=nhead, eps=eps),
        out_shape=jax.ShapeDtypeStruct((M, D), x2.dtype),
        grid=(batch,),
        in_specs=[
            pl.BlockSpec((seq_len, Kin), lambda bb: (bb, 0)),   # x (per-batch rows)
            pl.BlockSpec((Kin, D), const),                      # fc1_w
            pl.BlockSpec((1, D), const),                        # fc1_b
            pl.BlockSpec((seq_len, D), const),                  # pe slice
            pl.BlockSpec((L, D, threeD), const3),               # wqkv (stacked)
            pl.BlockSpec((L, 1, threeD), const3),               # bqkv
            pl.BlockSpec((L, D, D), const3),                    # wo
            pl.BlockSpec((L, 1, D), const3),                    # bo
            pl.BlockSpec((L, 1, D), const3),                    # ln1_g
            pl.BlockSpec((L, 1, D), const3),                    # ln1_b
            pl.BlockSpec((L, D, F), const3),                    # w1
            pl.BlockSpec((L, 1, F), const3),                    # b1
            pl.BlockSpec((L, F, D), const3),                    # w2
            pl.BlockSpec((L, 1, D), const3),                    # b2
            pl.BlockSpec((L, 1, D), const3),                    # ln2_g
            pl.BlockSpec((L, 1, D), const3),                    # ln2_b
        ],
        out_specs=pl.BlockSpec((seq_len, D), lambda bb: (bb, 0)),
        compiler_params=pltpu.CompilerParams(
            dimension_semantics=("parallel",),
            vmem_limit_bytes=32 * 1024 * 1024,   # explicit budget, safe on v5e/v6e/v7x
        ),
    )(x2, params["fc1_w"], params["fc1_b"], pe_slice,
      enc["wqkv"], enc["bqkv"], enc["wo"], enc["bo"],
      enc["ln1_g"], enc["ln1_b"], enc["w1"], enc["b1"], enc["w2"], enc["b2"],
      enc["ln2_g"], enc["ln2_b"])


# ----------------------------------------------------------------------------
# Kernel 2: output head (fc_out1 + fc2 fused)
# ----------------------------------------------------------------------------
def _head_kernel(x_ref, w1_ref, b1_ref, w2_ref, b2_ref, o_ref):
    h = jnp.dot(x_ref[...].astype(jnp.float32), w1_ref[...],
                preferred_element_type=jnp.float32) + b1_ref[...]
    out = jnp.dot(h, w2_ref[...], preferred_element_type=jnp.float32) + b2_ref[...]
    o_ref[...] = out.astype(o_ref.dtype)


def output_head(x, w1, b1, w2, b2):
    """x: (B, S*D) -> (B, output_dim*fore_len). Single invocation, all in VMEM."""
    B = x.shape[0]
    N = w2.shape[1]
    return pl.pallas_call(
        _head_kernel,
        out_shape=jax.ShapeDtypeStruct((B, N), x.dtype),
    )(x, w1, b1, w2, b2)


# ----------------------------------------------------------------------------
# Model: parameter construction + forward pass
# ----------------------------------------------------------------------------
def make_positional_encoding(d_model, max_len):
    position = jnp.arange(max_len, dtype=jnp.float32)[:, None]
    div_term = jnp.exp(
        jnp.arange(0, d_model, 2, dtype=jnp.float32) * (-math.log(10000.0) / d_model))
    pe = jnp.zeros((max_len, d_model), jnp.float32)
    pe = pe.at[:, 0::2].set(jnp.sin(position * div_term))
    # guard odd d_model: cos columns = d_model // 2
    pe = pe.at[:, 1::2].set(jnp.cos(position * div_term)[:, : d_model // 2])
    return pe  # (max_len, d_model)


def init_params(key, *, input_dim, seq_len, fore_len, output_dim,
                d_model, nhead, num_layers, d_ff, max_len):
    """All linear weights stored pre-transposed (in_features, out_features);
    per-layer encoder weights stacked along a leading num_layers axis."""
    def dense(k, shape, scale=0.05):
        return scale * jax.random.normal(k, shape, jnp.float32)

    k_fc1, k_out1, k_fc2, k_layers = jax.random.split(key, 4)
    layer_keys = [jax.random.split(jax.random.fold_in(k_layers, l), 4)
                  for l in range(num_layers)]
    L = num_layers
    enc = {
        "wqkv": jnp.stack([dense(lk[0], (d_model, 3 * d_model)) for lk in layer_keys]),
        "bqkv": jnp.zeros((L, 1, 3 * d_model), jnp.float32),
        "wo": jnp.stack([dense(lk[1], (d_model, d_model)) for lk in layer_keys]),
        "bo": jnp.zeros((L, 1, d_model), jnp.float32),
        "w1": jnp.stack([dense(lk[2], (d_model, d_ff)) for lk in layer_keys]),
        "b1": jnp.zeros((L, 1, d_ff), jnp.float32),
        "w2": jnp.stack([dense(lk[3], (d_ff, d_model)) for lk in layer_keys]),
        "b2": jnp.zeros((L, 1, d_model), jnp.float32),
        "ln1_g": jnp.ones((L, 1, d_model), jnp.float32),
        "ln1_b": jnp.zeros((L, 1, d_model), jnp.float32),
        "ln2_g": jnp.ones((L, 1, d_model), jnp.float32),
        "ln2_b": jnp.zeros((L, 1, d_model), jnp.float32),
    }
    params = {
        "fc1_w": dense(k_fc1, (input_dim, d_model)),
        "fc1_b": jnp.zeros((1, d_model), jnp.float32),
        "pe": make_positional_encoding(d_model, max_len),
        "enc": enc,
        "fc_out1_w": dense(k_out1, (seq_len * d_model, d_model)),
        "fc_out1_b": jnp.zeros((1, d_model), jnp.float32),
        "fc2_w": dense(k_fc2, (d_model, output_dim * fore_len)),
        "fc2_b": jnp.zeros((1, output_dim * fore_len), jnp.float32),
    }
    return params


def transformer_forward(params, src, *, nhead):
    B, S, input_dim = src.shape
    D = params["fc1_w"].shape[1]

    # fc1 + positional encoding + full encoder stack, fused in one pallas_call.
    # TODO(synk): training-mode dropout (p=0.1) not implemented; inference identity.
    x2 = src.reshape(B * S, input_dim)
    pe_slice = params["pe"][:S, :]                          # (S, D)
    x2 = encoder_stack(params, x2, pe_slice, batch=B, seq_len=S, nhead=nhead)

    # flatten -> fc_out1 -> fc2 (fused head)
    xf = x2.reshape(B, S * D)
    return output_head(xf, params["fc_out1_w"], params["fc_out1_b"],
                       params["fc2_w"], params["fc2_b"])


# ----------------------------------------------------------------------------
if __name__ == "__main__":
    # Small shapes consistent with the module's forward.
    input_dim = 4
    seq_len = 8
    fore_len = 2
    output_dim = 3
    d_model = 32
    nhead = 4
    num_layers = 2
    d_ff = 2048       # nn.TransformerEncoderLayer default dim_feedforward
    max_len = 20
    batch = 2

    key = jax.random.PRNGKey(0)
    k_param, k_input = jax.random.split(key)

    params = init_params(
        k_param,
        input_dim=input_dim, seq_len=seq_len, fore_len=fore_len,
        output_dim=output_dim, d_model=d_model, nhead=nhead,
        num_layers=num_layers, d_ff=d_ff, max_len=max_len,
    )

    src = jax.random.normal(k_input, (batch, seq_len, input_dim), jnp.float32)

    fwd = jax.jit(functools.partial(transformer_forward, nhead=nhead))
    out = jax.block_until_ready(fwd(params, src))

    assert out.shape == (batch, output_dim * fore_len), out.shape
    assert bool(jnp.all(jnp.isfinite(out)))
    print("KERNEL_OK")
</pallas_src>

<mosaic_0001>
module attributes {stable_mosaic.version = 11 : i64} {
  func.func @_encoder_stack_kernel(%arg0: i32, %arg1: memref<8x4xf32, #tpu.memory_space<vmem>>, %arg2: memref<4x32xf32, #tpu.memory_space<vmem>>, %arg3: memref<1x32xf32, #tpu.memory_space<vmem>>, %arg4: memref<8x32xf32, #tpu.memory_space<vmem>>, %arg5: memref<2x32x96xf32, #tpu.memory_space<vmem>>, %arg6: memref<2x1x96xf32, #tpu.memory_space<vmem>>, %arg7: memref<2x32x32xf32, #tpu.memory_space<vmem>>, %arg8: memref<2x1x32xf32, #tpu.memory_space<vmem>>, %arg9: memref<2x1x32xf32, #tpu.memory_space<vmem>>, %arg10: memref<2x1x32xf32, #tpu.memory_space<vmem>>, %arg11: memref<2x32x2048xf32, #tpu.memory_space<vmem>>, %arg12: memref<2x1x2048xf32, #tpu.memory_space<vmem>>, %arg13: memref<2x2048x32xf32, #tpu.memory_space<vmem>>, %arg14: memref<2x1x32xf32, #tpu.memory_space<vmem>>, %arg15: memref<2x1x32xf32, #tpu.memory_space<vmem>>, %arg16: memref<2x1x32xf32, #tpu.memory_space<vmem>>, %arg17: memref<8x32xf32, #tpu.memory_space<vmem>>) attributes {dimension_semantics = [#tpu.dimension_semantics<parallel>], iteration_bounds = array<i64: 2>, scalar_prefetch = 0 : i64, scratch_operands = 0 : i64, tpu.core_type = #tpu.core_type<tc>, window_params = [{transform_indices = @transform_0, window_bounds = array<i64: 8, 4>}, {pipeline_mode = #tpu.pipeline_mode<synchronous>, transform_indices = @transform_1, window_bounds = array<i64: 4, 32>}, {pipeline_mode = #tpu.pipeline_mode<synchronous>, transform_indices = @transform_2, window_bounds = array<i64: 1, 32>}, {pipeline_mode = #tpu.pipeline_mode<synchronous>, transform_indices = @transform_3, window_bounds = array<i64: 8, 32>}, {pipeline_mode = #tpu.pipeline_mode<synchronous>, transform_indices = @transform_4, window_bounds = array<i64: 2, 32, 96>}, {pipeline_mode = #tpu.pipeline_mode<synchronous>, transform_indices = @transform_5, window_bounds = array<i64: 2, 1, 96>}, {pipeline_mode = #tpu.pipeline_mode<synchronous>, transform_indices = @transform_6, window_bounds = array<i64: 2, 32, 32>}, {pipeline_mode = #tpu.pipeline_mode<synchronous>, transform_indices = @transform_7, window_bounds = array<i64: 2, 1, 32>}, {pipeline_mode = #tpu.pipeline_mode<synchronous>, transform_indices = @transform_8, window_bounds = array<i64: 2, 1, 32>}, {pipeline_mode = #tpu.pipeline_mode<synchronous>, transform_indices = @transform_9, window_bounds = array<i64: 2, 1, 32>}, {pipeline_mode = #tpu.pipeline_mode<synchronous>, transform_indices = @transform_10, window_bounds = array<i64: 2, 32, 2048>}, {pipeline_mode = #tpu.pipeline_mode<synchronous>, transform_indices = @transform_11, window_bounds = array<i64: 2, 1, 2048>}, {pipeline_mode = #tpu.pipeline_mode<synchronous>, transform_indices = @transform_12, window_bounds = array<i64: 2, 2048, 32>}, {pipeline_mode = #tpu.pipeline_mode<synchronous>, transform_indices = @transform_13, window_bounds = array<i64: 2, 1, 32>}, {pipeline_mode = #tpu.pipeline_mode<synchronous>, transform_indices = @transform_14, window_bounds = array<i64: 2, 1, 32>}, {pipeline_mode = #tpu.pipeline_mode<synchronous>, transform_indices = @transform_15, window_bounds = array<i64: 2, 1, 32>}, {transform_indices = @transform_16, window_bounds = array<i64: 8, 32>}]} {
    %c0 = arith.constant 0 : index
    %c0_0 = arith.constant 0 : index
    %0 = vector.load %arg1[%c0, %c0_0] : memref<8x4xf32, #tpu.memory_space<vmem>>, vector<8x4xf32>
    %c0_1 = arith.constant 0 : index
    %c0_2 = arith.constant 0 : index
    %1 = vector.load %arg2[%c0_1, %c0_2] : memref<4x32xf32, #tpu.memory_space<vmem>>, vector<4x32xf32>
    %cst = arith.constant dense<0.000000e+00> : vector<8x32xf32>
    %2 = tpu.matmul %0, %1, %cst {dimension_numbers = #tpu.dot_dimension_numbers<[1], [0], [0], [1], [0, 0, 1, 1], [], []>} : vector<8x4xf32>, vector<4x32xf32>, vector<8x32xf32> -> vector<8x32xf32>
    %c0_3 = arith.constant 0 : index
    %c0_4 = arith.constant 0 : index
    %3 = vector.load %arg3[%c0_3, %c0_4] : memref<1x32xf32, #tpu.memory_space<vmem>>, vector<1x32xf32>
    %4 = vector.broadcast %3 : vector<1x32xf32> to vector<8x32xf32>
    %5 = arith.addf %2, %4 : vector<8x32xf32>
    %c0_5 = arith.constant 0 : index
    %c0_6 = arith.constant 0 : index
    %6 = vector.load %arg4[%c0_5, %c0_6] : memref<8x32xf32, #tpu.memory_space<vmem>>, vector<8x32xf32>
    %7 = arith.addf %5, %6 : vector<8x32xf32>
    %c0_7 = arith.constant 0 : index
    %c0_8 = arith.constant 0 : index
    %c0_9 = arith.constant 0 : index
    %8 = vector.load %arg5[%c0_7, %c0_8, %c0_9] : memref<2x32x96xf32, #tpu.memory_space<vmem>>, vector<1x32x96xf32>
    %9 = vector.shape_cast %8 : vector<1x32x96xf32> to vector<32x96xf32>
    %cst_10 = arith.constant dense<0.000000e+00> : vector<8x96xf32>
    %10 = tpu.matmul %7, %9, %cst_10 {dimension_numbers = #tpu.dot_dimension_numbers<[1], [0], [0], [1], [0, 0, 1, 1], [], []>} : vector<8x32xf32>, vector<32x96xf32>, vector<8x96xf32> -> vector<8x96xf32>
    %c0_11 = arith.constant 0 : index
    %c0_12 = arith.constant 0 : index
    %c0_13 = arith.constant 0 : index
    %11 = vector.load %arg6[%c0_11, %c0_12, %c0_13] : memref<2x1x96xf32, #tpu.memory_space<vmem>>, vector<1x1x96xf32>
    %12 = vector.shape_cast %11 : vector<1x1x96xf32> to vector<1x96xf32>
    %13 = vector.broadcast %12 : vector<1x96xf32> to vector<8x96xf32>
    %14 = arith.addf %10, %13 : vector<8x96xf32>
    %15 = vector.extract_strided_slice %14 {offsets = [0, 0], sizes = [8, 32], strides = [1, 1]} : vector<8x96xf32> to vector<8x32xf32>
    %cst_14 = arith.constant 0.353553385 : f32
    %16 = vector.broadcast %cst_14 : f32 to vector<8x32xf32>
    %17 = arith.mulf %15, %16 : vector<8x32xf32>
    %18 = vector.extract_strided_slice %14 {offsets = [0, 32], sizes = [8, 32], strides = [1, 1]} : vector<8x96xf32> to vector<8x32xf32>
    %19 = vector.extract_strided_slice %14 {offsets = [0, 64], sizes = [8, 32], strides = [1, 1]} : vector<8x96xf32> to vector<8x32xf32>
    %20 = vector.extract_strided_slice %17 {offsets = [0, 0], sizes = [8, 8], strides = [1, 1]} : vector<8x32xf32> to vector<8x8xf32>
    %21 = vector.extract_strided_slice %18 {offsets = [0, 0], sizes = [8, 8], strides = [1, 1]} : vector<8x32xf32> to vector<8x8xf32>
    %cst_15 = arith.constant dense<0.000000e+00> : vector<8x8xf32>
    %22 = tpu.matmul %20, %21, %cst_15 {dimension_numbers = #tpu.dot_dimension_numbers<[1], [1], [0], [0], [0, 0, 1, 0], [], []>} : vector<8x8xf32>, vector<8x8xf32>, vector<8x8xf32> -> vector<8x8xf32>
    %cst_16 = arith.constant dense<0xFF800000> : vector<8xf32>
    %23 = vector.multi_reduction <maximumf>, %22, %cst_16 [1] : vector<8x8xf32> to vector<8xf32>
    %24 = vector.shape_cast %23 : vector<8xf32> to vector<8x1xf32>
    %25 = vector.broadcast %24 : vector<8x1xf32> to vector<8x8xf32>
    %26 = arith.subf %22, %25 : vector<8x8xf32>
    %27 = math.exp %26 : vector<8x8xf32>
    %cst_17 = arith.constant dense<0.000000e+00> : vector<8xf32>
    %28 = vector.multi_reduction <add>, %27, %cst_17 [1] : vector<8x8xf32> to vector<8xf32>
    %29 = vector.shape_cast %28 : vector<8xf32> to vector<8x1xf32>
    %30 = tpu.reciprocal %29 {approx = true} : vector<8x1xf32> -> vector<8x1xf32>
    %31 = vector.broadcast %30 : vector<8x1xf32> to vector<8x8xf32>
    %32 = arith.mulf %27, %31 : vector<8x8xf32>
    %33 = vector.extract_strided_slice %19 {offsets = [0, 0], sizes = [8, 8], strides = [1, 1]} : vector<8x32xf32> to vector<8x8xf32>
    %cst_18 = arith.constant dense<0.000000e+00> : vector<8x8xf32>
    %34 = tpu.matmul %32, %33, %cst_18 {dimension_numbers = #tpu.dot_dimension_numbers<[1], [0], [0], [1], [0, 0, 1, 1], [], []>} : vector<8x8xf32>, vector<8x8xf32>, vector<8x8xf32> -> vector<8x8xf32>
    %35 = vector.extract_strided_slice %17 {offsets = [0, 8], sizes = [8, 8], strides = [1, 1]} : vector<8x32xf32> to vector<8x8xf32>
    %36 = vector.extract_strided_slice %18 {offsets = [0, 8], sizes = [8, 8], strides = [1, 1]} : vector<8x32xf32> to vector<8x8xf32>
    %cst_19 = arith.constant dense<0.000000e+00> : vector<8x8xf32>
    %37 = tpu.matmul %35, %36, %cst_19 {dimension_numbers = #tpu.dot_dimension_numbers<[1], [1], [0], [0], [0, 0, 1, 0], [], []>} : vector<8x8xf32>, vector<8x8xf32>, vector<8x8xf32> -> vector<8x8xf32>
    %cst_20 = arith.constant dense<0xFF800000> : vector<8xf32>
    %38 = vector.multi_reduction <maximumf>, %37, %cst_20 [1] : vector<8x8xf32> to vector<8xf32>
    %39 = vector.shape_cast %38 : vector<8xf32> to vector<8x1xf32>
    %40 = vector.broadcast %39 : vector<8x1xf32> to vector<8x8xf32>
    %41 = arith.subf %37, %40 : vector<8x8xf32>
    %42 = math.exp %41 : vector<8x8xf32>
    %cst_21 = arith.constant dense<0.000000e+00> : vector<8xf32>
    %43 = vector.multi_reduction <add>, %42, %cst_21 [1] : vector<8x8xf32> to vector<8xf32>
    %44 = vector.shape_cast %43 : vector<8xf32> to vector<8x1xf32>
    %45 = tpu.reciprocal %44 {approx = true} : vector<8x1xf32> -> vector<8x1xf32>
    %46 = vector.broadcast %45 : vector<8x1xf32> to vector<8x8xf32>
    %47 = arith.mulf %42, %46 : vector<8x8xf32>
    %48 = vector.extract_strided_slice %19 {offsets = [0, 8], sizes = [8, 8], strides = [1, 1]} : vector<8x32xf32> to vector<8x8xf32>
    %cst_22 = arith.constant dense<0.000000e+00> : vector<8x8xf32>
    %49 = tpu.matmul %47, %48, %cst_22 {dimension_numbers = #tpu.dot_dimension_numbers<[1], [0], [0], [1], [0, 0, 1, 1], [], []>} : vector<8x8xf32>, vector<8x8xf32>, vector<8x8xf32> -> vector<8x8xf32>
    %50 = vector.extract_strided_slice %17 {offsets = [0, 16], sizes = [8, 8], strides = [1, 1]} : vector<8x32xf32> to vector<8x8xf32>
    %51 = vector.extract_strided_slice %18 {offsets = [0, 16], sizes = [8, 8], strides = [1, 1]} : vector<8x32xf32> to vector<8x8xf32>
    %cst_23 = arith.constant dense<0.000000e+00> : vector<8x8xf32>
    %52 = tpu.matmul %50, %51, %cst_23 {dimension_numbers = #tpu.dot_dimension_numbers<[1], [1], [0], [0], [0, 0, 1, 0], [], []>} : vector<8x8xf32>, vector<8x8xf32>, vector<8x8xf32> -> vector<8x8xf32>
    %cst_24 = arith.constant dense<0xFF800000> : vector<8xf32>
    %53 = vector.multi_reduction <maximumf>, %52, %cst_24 [1] : vector<8x8xf32> to vector<8xf32>
    %54 = vector.shape_cast %53 : vector<8xf32> to vector<8x1xf32>
    %55 = vector.broadcast %54 : vector<8x1xf32> to vector<8x8xf32>
    %56 = arith.subf %52, %55 : vector<8x8xf32>
    %57 = math.exp %56 : vector<8x8xf32>
    %cst_25 = arith.constant dense<0.000000e+00> : vector<8xf32>
    %58 = vector.multi_reduction <add>, %57, %cst_25 [1] : vector<8x8xf32> to vector<8xf32>
    %59 = vector.shape_cast %58 : vector<8xf32> to vector<8x1xf32>
    %60 = tpu.reciprocal %59 {approx = true} : vector<8x1xf32> -> vector<8x1xf32>
    %61 = vector.broadcast %60 : vector<8x1xf32> to vector<8x8xf32>
    %62 = arith.mulf %57, %61 : vector<8x8xf32>
    %63 = vector.extract_strided_slice %19 {offsets = [0, 16], sizes = [8, 8], strides = [1, 1]} : vector<8x32xf32> to vector<8x8xf32>
    %cst_26 = arith.constant dense<0.000000e+00> : vector<8x8xf32>
    %64 = tpu.matmul %62, %63, %cst_26 {dimension_numbers = #tpu.dot_dimension_numbers<[1], [0], [0], [1], [0, 0, 1, 1], [], []>} : vector<8x8xf32>, vector<8x8xf32>, vector<8x8xf32> -> vector<8x8xf32>
    %65 = vector.extract_strided_slice %17 {offsets = [0, 24], sizes = [8, 8], strides = [1, 1]} : vector<8x32xf32> to vector<8x8xf32>
    %66 = vector.extract_strided_slice %18 {offsets = [0, 24], sizes = [8, 8], strides = [1, 1]} : vector<8x32xf32> to vector<8x8xf32>
    %cst_27 = arith.constant dense<0.000000e+00> : vector<8x8xf32>
    %67 = tpu.matmul %65, %66, %cst_27 {dimension_numbers = #tpu.dot_dimension_numbers<[1], [1], [0], [0], [0, 0, 1, 0], [], []>} : vector<8x8xf32>, vector<8x8xf32>, vector<8x8xf32> -> vector<8x8xf32>
    %cst_28 = arith.constant dense<0xFF800000> : vector<8xf32>
    %68 = vector.multi_reduction <maximumf>, %67, %cst_28 [1] : vector<8x8xf32> to vector<8xf32>
    %69 = vector.shape_cast %68 : vector<8xf32> to vector<8x1xf32>
    %70 = vector.broadcast %69 : vector<8x1xf32> to vector<8x8xf32>
    %71 = arith.subf %67, %70 : vector<8x8xf32>
    %72 = math.exp %71 : vector<8x8xf32>
    %cst_29 = arith.constant dense<0.000000e+00> : vector<8xf32>
    %73 = vector.multi_reduction <add>, %72, %cst_29 [1] : vector<8x8xf32> to vector<8xf32>
    %74 = vector.shape_cast %73 : vector<8xf32> to vector<8x1xf32>
    %75 = tpu.reciprocal %74 {approx = true} : vector<8x1xf32> -> vector<8x1xf32>
    %76 = vector.broadcast %75 : vector<8x1xf32> to vector<8x8xf32>
    %77 = arith.mulf %72, %76 : vector<8x8xf32>
    %78 = vector.extract_strided_slice %19 {offsets = [0, 24], sizes = [8, 8], strides = [1, 1]} : vector<8x32xf32> to vector<8x8xf32>
    %cst_30 = arith.constant dense<0.000000e+00> : vector<8x8xf32>
    %79 = tpu.matmul %77, %78, %cst_30 {dimension_numbers = #tpu.dot_dimension_numbers<[1], [0], [0], [1], [0, 0, 1, 1], [], []>} : vector<8x8xf32>, vector<8x8xf32>, vector<8x8xf32> -> vector<8x8xf32>
    %80 = tpu.concatenate %34, %49, %64, %79 in 1 : vector<8x8xf32>, vector<8x8xf32>, vector<8x8xf32>, vector<8x8xf32> -> vector<8x32xf32>
    %c0_31 = arith.constant 0 : index
    %c0_32 = arith.constant 0 : index
    %c0_33 = arith.constant 0 : index
    %81 = vector.load %arg7[%c0_31, %c0_32, %c0_33] : memref<2x32x32xf32, #tpu.memory_space<vmem>>, vector<1x32x32xf32>
    %82 = vector.shape_cast %81 : vector<1x32x32xf32> to vector<32x32xf32>
    %cst_34 = arith.constant dense<0.000000e+00> : vector<8x32xf32>
    %83 = tpu.matmul %80, %82, %cst_34 {dimension_numbers = #tpu.dot_dimension_numbers<[1], [0], [0], [1], [0, 0, 1, 1], [], []>} : vector<8x32xf32>, vector<32x32xf32>, vector<8x32xf32> -> vector<8x32xf32>
    %c0_35 = arith.constant 0 : index
    %c0_36 = arith.constant 0 : index
    %c0_37 = arith.constant 0 : index
    %84 = vector.load %arg8[%c0_35, %c0_36, %c0_37] : memref<2x1x32xf32, #tpu.memory_space<vmem>>, vector<1x1x32xf32>
    %85 = vector.shape_cast %84 : vector<1x1x32xf32> to vector<1x32xf32>
    %86 = vector.broadcast %85 : vector<1x32xf32> to vector<8x32xf32>
    %87 = arith.addf %83, %86 : vector<8x32xf32>
    %88 = arith.addf %7, %87 : vector<8x32xf32>
    %c0_38 = arith.constant 0 : index
    %c0_39 = arith.constant 0 : index
    %c0_40 = arith.constant 0 : index
    %89 = vector.load %arg9[%c0_38, %c0_39, %c0_40] : memref<2x1x32xf32, #tpu.memory_space<vmem>>, vector<1x1x32xf32>
    %90 = vector.shape_cast %89 : vector<1x1x32xf32> to vector<1x32xf32>
    %c0_41 = arith.constant 0 : index
    %c0_42 = arith.constant 0 : index
    %c0_43 = arith.constant 0 : index
    %91 = vector.load %arg10[%c0_41, %c0_42, %c0_43] : memref<2x1x32xf32, #tpu.memory_space<vmem>>, vector<1x1x32xf32>
    %92 = vector.shape_cast %91 : vector<1x1x32xf32> to vector<1x32xf32>
    %cst_44 = arith.constant dense<0.000000e+00> : vector<8xf32>
    %93 = vector.multi_reduction <add>, %88, %cst_44 [1] : vector<8x32xf32> to vector<8xf32>
    %94 = vector.shape_cast %93 : vector<8xf32> to vector<8x1xf32>
    %cst_45 = arith.constant 3.200000e+01 : f32
    %95 = vector.broadcast %cst_45 : f32 to vector<8x1xf32>
    %96 = arith.divf %94, %95 : vector<8x1xf32>
    %97 = vector.broadcast %96 : vector<8x1xf32> to vector<8x32xf32>
    %98 = arith.subf %88, %97 : vector<8x32xf32>
    %99 = arith.mulf %98, %98 : vector<8x32xf32>
    %cst_46 = arith.constant dense<0.000000e+00> : vector<8xf32>
    %100 = vector.multi_reduction <add>, %99, %cst_46 [1] : vector<8x32xf32> to vector<8xf32>
    %101 = vector.shape_cast %100 : vector<8xf32> to vector<8x1xf32>
    %cst_47 = arith.constant 3.200000e+01 : f32
    %102 = vector.broadcast %cst_47 : f32 to vector<8x1xf32>
    %103 = arith.divf %101, %102 : vector<8x1xf32>
    %104 = vector.broadcast %96 : vector<8x1xf32> to vector<8x32xf32>
    %105 = arith.subf %88, %104 : vector<8x32xf32>
    %cst_48 = arith.constant 9.99999974E-6 : f32
    %106 = vector.broadcast %cst_48 : f32 to vector<8x1xf32>
    %107 = arith.addf %103, %106 : vector<8x1xf32>
    %108 = math.rsqrt %107 : vector<8x1xf32>
    %109 = vector.broadcast %108 : vector<8x1xf32> to vector<8x32xf32>
    %110 = arith.mulf %105, %109 : vector<8x32xf32>
    %111 = vector.broadcast %90 : vector<1x32xf32> to vector<8x32xf32>
    %112 = arith.mulf %110, %111 : vector<8x32xf32>
    %113 = vector.broadcast %92 : vector<1x32xf32> to vector<8x32xf32>
    %114 = arith.addf %112, %113 : vector<8x32xf32>
    %c0_49 = arith.constant 0 : index
    %c0_50 = arith.constant 0 : index
    %c0_51 = arith.constant 0 : index
    %115 = vector.load %arg11[%c0_49, %c0_50, %c0_51] : memref<2x32x2048xf32, #tpu.memory_space<vmem>>, vector<1x32x2048xf32>
    %116 = vector.shape_cast %115 : vector<1x32x2048xf32> to vector<32x2048xf32>
    %cst_52 = arith.constant dense<0.000000e+00> : vector<8x2048xf32>
    %117 = tpu.matmul %114, %116, %cst_52 {dimension_numbers = #tpu.dot_dimension_numbers<[1], [0], [0], [1], [0, 0, 1, 1], [], []>} : vector<8x32xf32>, vector<32x2048xf32>, vector<8x2048xf32> -> vector<8x2048xf32>
    %c0_53 = arith.constant 0 : index
    %c0_54 = arith.constant 0 : index
    %c0_55 = arith.constant 0 : index
    %118 = vector.load %arg12[%c0_53, %c0_54, %c0_55] : memref<2x1x2048xf32, #tpu.memory_space<vmem>>, vector<1x1x2048xf32>
    %119 = vector.shape_cast %118 : vector<1x1x2048xf32> to vector<1x2048xf32>
    %120 = vector.broadcast %119 : vector<1x2048xf32> to vector<8x2048xf32>
    %121 = arith.addf %117, %120 : vector<8x2048xf32>
    %cst_56 = arith.constant 0.000000e+00 : f32
    %122 = vector.broadcast %cst_56 : f32 to vector<8x2048xf32>
    %123 = arith.maximumf %121, %122 : vector<8x2048xf32>
    %c0_57 = arith.constant 0 : index
    %c0_58 = arith.constant 0 : index
    %c0_59 = arith.constant 0 : index
    %124 = vector.load %arg13[%c0_57, %c0_58, %c0_59] : memref<2x2048x32xf32, #tpu.memory_space<vmem>>, vector<1x2048x32xf32>
    %125 = vector.shape_cast %124 : vector<1x2048x32xf32> to vector<2048x32xf32>
    %cst_60 = arith.constant dense<0.000000e+00> : vector<8x32xf32>
    %126 = tpu.matmul %123, %125, %cst_60 {dimension_numbers = #tpu.dot_dimension_numbers<[1], [0], [0], [1], [0, 0, 1, 1], [], []>} : vector<8x2048xf32>, vector<2048x32xf32>, vector<8x32xf32> -> vector<8x32xf32>
    %c0_61 = arith.constant 0 : index
    %c0_62 = arith.constant 0 : index
    %c0_63 = arith.constant 0 : index
    %127 = vector.load %arg14[%c0_61, %c0_62, %c0_63] : memref<2x1x32xf32, #tpu.memory_space<vmem>>, vector<1x1x32xf32>
    %128 = vector.shape_cast %127 : vector<1x1x32xf32> to vector<1x32xf32>
    %129 = vector.broadcast %128 : vector<1x32xf32> to vector<8x32xf32>
    %130 = arith.addf %126, %129 : vector<8x32xf32>
    %131 = arith.addf %114, %130 : vector<8x32xf32>
    %c0_64 = arith.constant 0 : index
    %c0_65 = arith.constant 0 : index
    %c0_66 = arith.constant 0 : index
    %132 = vector.load %arg15[%c0_64, %c0_65, %c0_66] : memref<2x1x32xf32, #tpu.memory_space<vmem>>, vector<1x1x32xf32>
    %133 = vector.shape_cast %132 : vector<1x1x32xf32> to vector<1x32xf32>
    %c0_67 = arith.constant 0 : index
    %c0_68 = arith.constant 0 : index
    %c0_69 = arith.constant 0 : index
    %134 = vector.load %arg16[%c0_67, %c0_68, %c0_69] : memref<2x1x32xf32, #tpu.memory_space<vmem>>, vector<1x1x32xf32>
    %135 = vector.shape_cast %134 : vector<1x1x32xf32> to vector<1x32xf32>
    %cst_70 = arith.constant dense<0.000000e+00> : vector<8xf32>
    %136 = vector.multi_reduction <add>, %131, %cst_70 [1] : vector<8x32xf32> to vector<8xf32>
    %137 = vector.shape_cast %136 : vector<8xf32> to vector<8x1xf32>
    %cst_71 = arith.constant 3.200000e+01 : f32
    %138 = vector.broadcast %cst_71 : f32 to vector<8x1xf32>
    %139 = arith.divf %137, %138 : vector<8x1xf32>
    %140 = vector.broadcast %139 : vector<8x1xf32> to vector<8x32xf32>
    %141 = arith.subf %131, %140 : vector<8x32xf32>
    %142 = arith.mulf %141, %141 : vector<8x32xf32>
    %cst_72 = arith.constant dense<0.000000e+00> : vector<8xf32>
    %143 = vector.multi_reduction <add>, %142, %cst_72 [1] : vector<8x32xf32> to vector<8xf32>
    %144 = vector.shape_cast %143 : vector<8xf32> to vector<8x1xf32>
    %cst_73 = arith.constant 3.200000e+01 : f32
    %145 = vector.broadcast %cst_73 : f32 to vector<8x1xf32>
    %146 = arith.divf %144, %145 : vector<8x1xf32>
    %147 = vector.broadcast %139 : vector<8x1xf32> to vector<8x32xf32>
    %148 = arith.subf %131, %147 : vector<8x32xf32>
    %cst_74 = arith.constant 9.99999974E-6 : f32
    %149 = vector.broadcast %cst_74 : f32 to vector<8x1xf32>
    %150 = arith.addf %146, %149 : vector<8x1xf32>
    %151 = math.rsqrt %150 : vector<8x1xf32>
    %152 = vector.broadcast %151 : vector<8x1xf32> to vector<8x32xf32>
    %153 = arith.mulf %148, %152 : vector<8x32xf32>
    %154 = vector.broadcast %133 : vector<1x32xf32> to vector<8x32xf32>
    %155 = arith.mulf %153, %154 : vector<8x32xf32>
    %156 = vector.broadcast %135 : vector<1x32xf32> to vector<8x32xf32>
    %157 = arith.addf %155, %156 : vector<8x32xf32>
    %c1 = arith.constant 1 : index
    %c0_75 = arith.constant 0 : index
    %c0_76 = arith.constant 0 : index
    %158 = vector.load %arg5[%c1, %c0_75, %c0_76] : memref<2x32x96xf32, #tpu.memory_space<vmem>>, vector<1x32x96xf32>
    %159 = vector.shape_cast %158 : vector<1x32x96xf32> to vector<32x96xf32>
    %cst_77 = arith.constant dense<0.000000e+00> : vector<8x96xf32>
    %160 = tpu.matmul %157, %159, %cst_77 {dimension_numbers = #tpu.dot_dimension_numbers<[1], [0], [0], [1], [0, 0, 1, 1], [], []>} : vector<8x32xf32>, vector<32x96xf32>, vector<8x96xf32> -> vector<8x96xf32>
    %c1_78 = arith.constant 1 : index
    %c0_79 = arith.constant 0 : index
    %c0_80 = arith.constant 0 : index
    %161 = vector.load %arg6[%c1_78, %c0_79, %c0_80] : memref<2x1x96xf32, #tpu.memory_space<vmem>>, vector<1x1x96xf32>
    %162 = vector.shape_cast %161 : vector<1x1x96xf32> to vector<1x96xf32>
    %163 = vector.broadcast %162 : vector<1x96xf32> to vector<8x96xf32>
    %164 = arith.addf %160, %163 : vector<8x96xf32>
    %165 = vector.extract_strided_slice %164 {offsets = [0, 0], sizes = [8, 32], strides = [1, 1]} : vector<8x96xf32> to vector<8x32xf32>
    %cst_81 = arith.constant 0.353553385 : f32
    %166 = vector.broadcast %cst_81 : f32 to vector<8x32xf32>
    %167 = arith.mulf %165, %166 : vector<8x32xf32>
    %168 = vector.extract_strided_slice %164 {offsets = [0, 32], sizes = [8, 32], strides = [1, 1]} : vector<8x96xf32> to vector<8x32xf32>
    %169 = vector.extract_strided_slice %164 {offsets = [0, 64], sizes = [8, 32], strides = [1, 1]} : vector<8x96xf32> to vector<8x32xf32>
    %170 = vector.extract_strided_slice %167 {offsets = [0, 0], sizes = [8, 8], strides = [1, 1]} : vector<8x32xf32> to vector<8x8xf32>
    %171 = vector.extract_strided_slice %168 {offsets = [0, 0], sizes = [8, 8], strides = [1, 1]} : vector<8x32xf32> to vector<8x8xf32>
    %cst_82 = arith.constant dense<0.000000e+00> : vector<8x8xf32>
    %172 = tpu.matmul %170, %171, %cst_82 {dimension_numbers = #tpu.dot_dimension_numbers<[1], [1], [0], [0], [0, 0, 1, 0], [], []>} : vector<8x8xf32>, vector<8x8xf32>, vector<8x8xf32> -> vector<8x8xf32>
    %cst_83 = arith.constant dense<0xFF800000> : vector<8xf32>
    %173 = vector.multi_reduction <maximumf>, %172, %cst_83 [1] : vector<8x8xf32> to vector<8xf32>
    %174 = vector.shape_cast %173 : vector<8xf32> to vector<8x1xf32>
    %175 = vector.broadcast %174 : vector<8x1xf32> to vector<8x8xf32>
    %176 = arith.subf %172, %175 : vector<8x8xf32>
    %177 = math.exp %176 : vector<8x8xf32>
    %cst_84 = arith.constant dense<0.000000e+00> : vector<8xf32>
    %178 = vector.multi_reduction <add>, %177, %cst_84 [1] : vector<8x8xf32> to vector<8xf32>
    %179 = vector.shape_cast %178 : vector<8xf32> to vector<8x1xf32>
    %180 = tpu.reciprocal %179 {approx = true} : vector<8x1xf32> -> vector<8x1xf32>
    %181 = vector.broadcast %180 : vector<8x1xf32> to vector<8x8xf32>
    %182 = arith.mulf %177, %181 : vector<8x8xf32>
    %183 = vector.extract_strided_slice %169 {offsets = [0, 0], sizes = [8, 8], strides = [1, 1]} : vector<8x32xf32> to vector<8x8xf32>
    %cst_85 = arith.constant dense<0.000000e+00> : vector<8x8xf32>
    %184 = tpu.matmul %182, %183, %cst_85 {dimension_numbers = #tpu.dot_dimension_numbers<[1], [0], [0], [1], [0, 0, 1, 1], [], []>} : vector<8x8xf32>, vector<8x8xf32>, vector<8x8xf32> -> vector<8x8xf32>
    %185 = vector.extract_strided_slice %167 {offsets = [0, 8], sizes = [8, 8], strides = [1, 1]} : vector<8x32xf32> to vector<8x8xf32>
    %186 = vector.extract_strided_slice %168 {offsets = [0, 8], sizes = [8, 8], strides = [1, 1]} : vector<8x32xf32> to vector<8x8xf32>
    %cst_86 = arith.constant dense<0.000000e+00> : vector<8x8xf32>
    %187 = tpu.matmul %185, %186, %cst_86 {dimension_numbers = #tpu.dot_dimension_numbers<[1], [1], [0], [0], [0, 0, 1, 0], [], []>} : vector<8x8xf32>, vector<8x8xf32>, vector<8x8xf32> -> vector<8x8xf32>
    %cst_87 = arith.constant dense<0xFF800000> : vector<8xf32>
    %188 = vector.multi_reduction <maximumf>, %187, %cst_87 [1] : vector<8x8xf32> to vector<8xf32>
    %189 = vector.shape_cast %188 : vector<8xf32> to vector<8x1xf32>
    %190 = vector.broadcast %189 : vector<8x1xf32> to vector<8x8xf32>
    %191 = arith.subf %187, %190 : vector<8x8xf32>
    %192 = math.exp %191 : vector<8x8xf32>
    %cst_88 = arith.constant dense<0.000000e+00> : vector<8xf32>
    %193 = vector.multi_reduction <add>, %192, %cst_88 [1] : vector<8x8xf32> to vector<8xf32>
    %194 = vector.shape_cast %193 : vector<8xf32> to vector<8x1xf32>
    %195 = tpu.reciprocal %194 {approx = true} : vector<8x1xf32> -> vector<8x1xf32>
    %196 = vector.broadcast %195 : vector<8x1xf32> to vector<8x8xf32>
    %197 = arith.mulf %192, %196 : vector<8x8xf32>
    %198 = vector.extract_strided_slice %169 {offsets = [0, 8], sizes = [8, 8], strides = [1, 1]} : vector<8x32xf32> to vector<8x8xf32>
    %cst_89 = arith.constant dense<0.000000e+00> : vector<8x8xf32>
    %199 = tpu.matmul %197, %198, %cst_89 {dimension_numbers = #tpu.dot_dimension_numbers<[1], [0], [0], [1], [0, 0, 1, 1], [], []>} : vector<8x8xf32>, vector<8x8xf32>, vector<8x8xf32> -> vector<8x8xf32>
    %200 = vector.extract_strided_slice %167 {offsets = [0, 16], sizes = [8, 8], strides = [1, 1]} : vector<8x32xf32> to vector<8x8xf32>
    %201 = vector.extract_strided_slice %168 {offsets = [0, 16], sizes = [8, 8], strides = [1, 1]} : vector<8x32xf32> to vector<8x8xf32>
    %cst_90 = arith.constant dense<0.000000e+00> : vector<8x8xf32>
    %202 = tpu.matmul %200, %201, %cst_90 {dimension_numbers = #tpu.dot_dimension_numbers<[1], [1], [0], [0], [0, 0, 1, 0], [], []>} : vector<8x8xf32>, vector<8x8xf32>, vector<8x8xf32> -> vector<8x8xf32>
    %cst_91 = arith.constant dense<0xFF800000> : vector<8xf32>
    %203 = vector.multi_reduction <maximumf>, %202, %cst_91 [1] : vector<8x8xf32> to vector<8xf32>
    %204 = vector.shape_cast %203 : vector<8xf32> to vector<8x1xf32>
    %205 = vector.broadcast %204 : vector<8x1xf32> to vector<8x8xf32>
    %206 = arith.subf %202, %205 : vector<8x8xf32>
    %207 = math.exp %206 : vector<8x8xf32>
    %cst_92 = arith.constant dense<0.000000e+00> : vector<8xf32>
    %208 = vector.multi_reduction <add>, %207, %cst_92 [1] : vector<8x8xf32> to vector<8xf32>
    %209 = vector.shape_cast %208 : vector<8xf32> to vector<8x1xf32>
    %210 = tpu.reciprocal %209 {approx = true} : vector<8x1xf32> -> vector<8x1xf32>
    %211 = vector.broadcast %210 : vector<8x1xf32> to vector<8x8xf32>
    %212 = arith.mulf %207, %211 : vector<8x8xf32>
    %213 = vector.extract_strided_slice %169 {offsets = [0, 16], sizes = [8, 8], strides = [1, 1]} : vector<8x32xf32> to vector<8x8xf32>
    %cst_93 = arith.constant dense<0.000000e+00> : vector<8x8xf32>
    %214 = tpu.matmul %212, %213, %cst_93 {dimension_numbers = #tpu.dot_dimension_numbers<[1], [0], [0], [1], [0, 0, 1, 1], [], []>} : vector<8x8xf32>, vector<8x8xf32>, vector<8x8xf32> -> vector<8x8xf32>
    %215 = vector.extract_strided_slice %167 {offsets = [0, 24], sizes = [8, 8], strides = [1, 1]} : vector<8x32xf32> to vector<8x8xf32>
    %216 = vector.extract_strided_slice %168 {offsets = [0, 24], sizes = [8, 8], strides = [1, 1]} : vector<8x32xf32> to vector<8x8xf32>
    %cst_94 = arith.constant dense<0.000000e+00> : vector<8x8xf32>
    %217 = tpu.matmul %215, %216, %cst_94 {dimension_numbers = #tpu.dot_dimension_numbers<[1], [1], [0], [0], [0, 0, 1, 0], [], []>} : vector<8x8xf32>, vector<8x8xf32>, vector<8x8xf32> -> vector<8x8xf32>
    %cst_95 = arith.constant dense<0xFF800000> : vector<8xf32>
    %218 = vector.multi_reduction <maximumf>, %217, %cst_95 [1] : vector<8x8xf32> to vector<8xf32>
    %219 = vector.shape_cast %218 : vector<8xf32> to vector<8x1xf32>
    %220 = vector.broadcast %219 : vector<8x1xf32> to vector<8x8xf32>
    %221 = arith.subf %217, %220 : vector<8x8xf32>
    %222 = math.exp %221 : vector<8x8xf32>
    %cst_96 = arith.constant dense<0.000000e+00> : vector<8xf32>
    %223 = vector.multi_reduction <add>, %222, %cst_96 [1] : vector<8x8xf32> to vector<8xf32>
    %224 = vector.shape_cast %223 : vector<8xf32> to vector<8x1xf32>
    %225 = tpu.reciprocal %224 {approx = true} : vector<8x1xf32> -> vector<8x1xf32>
    %226 = vector.broadcast %225 : vector<8x1xf32> to vector<8x8xf32>
    %227 = arith.mulf %222, %226 : vector<8x8xf32>
    %228 = vector.extract_strided_slice %169 {offsets = [0, 24], sizes = [8, 8], strides = [1, 1]} : vector<8x32xf32> to vector<8x8xf32>
    %cst_97 = arith.constant dense<0.000000e+00> : vector<8x8xf32>
    %229 = tpu.matmul %227, %228, %cst_97 {dimension_numbers = #tpu.dot_dimension_numbers<[1], [0], [0], [1], [0, 0, 1, 1], [], []>} : vector<8x8xf32>, vector<8x8xf32>, vector<8x8xf32> -> vector<8x8xf32>
    %230 = tpu.concatenate %184, %199, %214, %229 in 1 : vector<8x8xf32>, vector<8x8xf32>, vector<8x8xf32>, vector<8x8xf32> -> vector<8x32xf32>
    %c1_98 = arith.constant 1 : index
    %c0_99 = arith.constant 0 : index
    %c0_100 = arith.constant 0 : index
    %231 = vector.load %arg7[%c1_98, %c0_99, %c0_100] : memref<2x32x32xf32, #tpu.memory_space<vmem>>, vector<1x32x32xf32>
    %232 = vector.shape_cast %231 : vector<1x32x32xf32> to vector<32x32xf32>
    %cst_101 = arith.constant dense<0.000000e+00> : vector<8x32xf32>
    %233 = tpu.matmul %230, %232, %cst_101 {dimension_numbers = #tpu.dot_dimension_numbers<[1], [0], [0], [1], [0, 0, 1, 1], [], []>} : vector<8x32xf32>, vector<32x32xf32>, vector<8x32xf32> -> vector<8x32xf32>
    %c1_102 = arith.constant 1 : index
    %c0_103 = arith.constant 0 : index
    %c0_104 = arith.constant 0 : index
    %234 = vector.load %arg8[%c1_102, %c0_103, %c0_104] : memref<2x1x32xf32, #tpu.memory_space<vmem>>, vector<1x1x32xf32>
    %235 = vector.shape_cast %234 : vector<1x1x32xf32> to vector<1x32xf32>
    %236 = vector.broadcast %235 : vector<1x32xf32> to vector<8x32xf32>
    %237 = arith.addf %233, %236 : vector<8x32xf32>
    %238 = arith.addf %157, %237 : vector<8x32xf32>
    %c1_105 = arith.constant 1 : index
    %c0_106 = arith.constant 0 : index
    %c0_107 = arith.constant 0 : index
    %239 = vector.load %arg9[%c1_105, %c0_106, %c0_107] : memref<2x1x32xf32, #tpu.memory_space<vmem>>, vector<1x1x32xf32>
    %240 = vector.shape_cast %239 : vector<1x1x32xf32> to vector<1x32xf32>
    %c1_108 = arith.constant 1 : index
    %c0_109 = arith.constant 0 : index
    %c0_110 = arith.constant 0 : index
    %241 = vector.load %arg10[%c1_108, %c0_109, %c0_110] : memref<2x1x32xf32, #tpu.memory_space<vmem>>, vector<1x1x32xf32>
    %242 = vector.shape_cast %241 : vector<1x1x32xf32> to vector<1x32xf32>
    %cst_111 = arith.constant dense<0.000000e+00> : vector<8xf32>
    %243 = vector.multi_reduction <add>, %238, %cst_111 [1] : vector<8x32xf32> to vector<8xf32>
    %244 = vector.shape_cast %243 : vector<8xf32> to vector<8x1xf32>
    %cst_112 = arith.constant 3.200000e+01 : f32
    %245 = vector.broadcast %cst_112 : f32 to vector<8x1xf32>
    %246 = arith.divf %244, %245 : vector<8x1xf32>
    %247 = vector.broadcast %246 : vector<8x1xf32> to vector<8x32xf32>
    %248 = arith.subf %238, %247 : vector<8x32xf32>
    %249 = arith.mulf %248, %248 : vector<8x32xf32>
    %cst_113 = arith.constant dense<0.000000e+00> : vector<8xf32>
    %250 = vector.multi_reduction <add>, %249, %cst_113 [1] : vector<8x32xf32> to vector<8xf32>
    %251 = vector.shape_cast %250 : vector<8xf32> to vector<8x1xf32>
    %cst_114 = arith.constant 3.200000e+01 : f32
    %252 = vector.broadcast %cst_114 : f32 to vector<8x1xf32>
    %253 = arith.divf %251, %252 : vector<8x1xf32>
    %254 = vector.broadcast %246 : vector<8x1xf32> to vector<8x32xf32>
    %255 = arith.subf %238, %254 : vector<8x32xf32>
    %cst_115 = arith.constant 9.99999974E-6 : f32
    %256 = vector.broadcast %cst_115 : f32 to vector<8x1xf32>
    %257 = arith.addf %253, %256 : vector<8x1xf32>
    %258 = math.rsqrt %257 : vector<8x1xf32>
    %259 = vector.broadcast %258 : vector<8x1xf32> to vector<8x32xf32>
    %260 = arith.mulf %255, %259 : vector<8x32xf32>
    %261 = vector.broadcast %240 : vector<1x32xf32> to vector<8x32xf32>
    %262 = arith.mulf %260, %261 : vector<8x32xf32>
    %263 = vector.broadcast %242 : vector<1x32xf32> to vector<8x32xf32>
    %264 = arith.addf %262, %263 : vector<8x32xf32>
    %c1_116 = arith.constant 1 : index
    %c0_117 = arith.constant 0 : index
    %c0_118 = arith.constant 0 : index
    %265 = vector.load %arg11[%c1_116, %c0_117, %c0_118] : memref<2x32x2048xf32, #tpu.memory_space<vmem>>, vector<1x32x2048xf32>
    %266 = vector.shape_cast %265 : vector<1x32x2048xf32> to vector<32x2048xf32>
    %cst_119 = arith.constant dense<0.000000e+00> : vector<8x2048xf32>
    %267 = tpu.matmul %264, %266, %cst_119 {dimension_numbers = #tpu.dot_dimension_numbers<[1], [0], [0], [1], [0, 0, 1, 1], [], []>} : vector<8x32xf32>, vector<32x2048xf32>, vector<8x2048xf32> -> vector<8x2048xf32>
    %c1_120 = arith.constant 1 : index
    %c0_121 = arith.constant 0 : index
    %c0_122 = arith.constant 0 : index
    %268 = vector.load %arg12[%c1_120, %c0_121, %c0_122] : memref<2x1x2048xf32, #tpu.memory_space<vmem>>, vector<1x1x2048xf32>
    %269 = vector.shape_cast %268 : vector<1x1x2048xf32> to vector<1x2048xf32>
    %270 = vector.broadcast %269 : vector<1x2048xf32> to vector<8x2048xf32>
    %271 = arith.addf %267, %270 : vector<8x2048xf32>
    %cst_123 = arith.constant 0.000000e+00 : f32
    %272 = vector.broadcast %cst_123 : f32 to vector<8x2048xf32>
    %273 = arith.maximumf %271, %272 : vector<8x2048xf32>
    %c1_124 = arith.constant 1 : index
    %c0_125 = arith.constant 0 : index
    %c0_126 = arith.constant 0 : index
    %274 = vector.load %arg13[%c1_124, %c0_125, %c0_126] : memref<2x2048x32xf32, #tpu.memory_space<vmem>>, vector<1x2048x32xf32>
    %275 = vector.shape_cast %274 : vector<1x2048x32xf32> to vector<2048x32xf32>
    %cst_127 = arith.constant dense<0.000000e+00> : vector<8x32xf32>
    %276 = tpu.matmul %273, %275, %cst_127 {dimension_numbers = #tpu.dot_dimension_numbers<[1], [0], [0], [1], [0, 0, 1, 1], [], []>} : vector<8x2048xf32>, vector<2048x32xf32>, vector<8x32xf32> -> vector<8x32xf32>
    %c1_128 = arith.constant 1 : index
    %c0_129 = arith.constant 0 : index
    %c0_130 = arith.constant 0 : index
    %277 = vector.load %arg14[%c1_128, %c0_129, %c0_130] : memref<2x1x32xf32, #tpu.memory_space<vmem>>, vector<1x1x32xf32>
    %278 = vector.shape_cast %277 : vector<1x1x32xf32> to vector<1x32xf32>
    %279 = vector.broadcast %278 : vector<1x32xf32> to vector<8x32xf32>
    %280 = arith.addf %276, %279 : vector<8x32xf32>
    %281 = arith.addf %264, %280 : vector<8x32xf32>
    %c1_131 = arith.constant 1 : index
    %c0_132 = arith.constant 0 : index
    %c0_133 = arith.constant 0 : index
    %282 = vector.load %arg15[%c1_131, %c0_132, %c0_133] : memref<2x1x32xf32, #tpu.memory_space<vmem>>, vector<1x1x32xf32>
    %283 = vector.shape_cast %282 : vector<1x1x32xf32> to vector<1x32xf32>
    %c1_134 = arith.constant 1 : index
    %c0_135 = arith.constant 0 : index
    %c0_136 = arith.constant 0 : index
    %284 = vector.load %arg16[%c1_134, %c0_135, %c0_136] : memref<2x1x32xf32, #tpu.memory_space<vmem>>, vector<1x1x32xf32>
    %285 = vector.shape_cast %284 : vector<1x1x32xf32> to vector<1x32xf32>
    %cst_137 = arith.constant dense<0.000000e+00> : vector<8xf32>
    %286 = vector.multi_reduction <add>, %281, %cst_137 [1] : vector<8x32xf32> to vector<8xf32>
    %287 = vector.shape_cast %286 : vector<8xf32> to vector<8x1xf32>
    %cst_138 = arith.constant 3.200000e+01 : f32
    %288 = vector.broadcast %cst_138 : f32 to vector<8x1xf32>
    %289 = arith.divf %287, %288 : vector<8x1xf32>
    %290 = vector.broadcast %289 : vector<8x1xf32> to vector<8x32xf32>
    %291 = arith.subf %281, %290 : vector<8x32xf32>
    %292 = arith.mulf %291, %291 : vector<8x32xf32>
    %cst_139 = arith.constant dense<0.000000e+00> : vector<8xf32>
    %293 = vector.multi_reduction <add>, %292, %cst_139 [1] : vector<8x32xf32> to vector<8xf32>
    %294 = vector.shape_cast %293 : vector<8xf32> to vector<8x1xf32>
    %cst_140 = arith.constant 3.200000e+01 : f32
    %295 = vector.broadcast %cst_140 : f32 to vector<8x1xf32>
    %296 = arith.divf %294, %295 : vector<8x1xf32>
    %297 = vector.broadcast %289 : vector<8x1xf32> to vector<8x32xf32>
    %298 = arith.subf %281, %297 : vector<8x32xf32>
    %cst_141 = arith.constant 9.99999974E-6 : f32
    %299 = vector.broadcast %cst_141 : f32 to vector<8x1xf32>
    %300 = arith.addf %296, %299 : vector<8x1xf32>
    %301 = math.rsqrt %300 : vector<8x1xf32>
    %302 = vector.broadcast %301 : vector<8x1xf32> to vector<8x32xf32>
    %303 = arith.mulf %298, %302 : vector<8x32xf32>
    %304 = vector.broadcast %283 : vector<1x32xf32> to vector<8x32xf32>
    %305 = arith.mulf %303, %304 : vector<8x32xf32>
    %306 = vector.broadcast %285 : vector<1x32xf32> to vector<8x32xf32>
    %307 = arith.addf %305, %306 : vector<8x32xf32>
    %c0_142 = arith.constant 0 : index
    %c0_143 = arith.constant 0 : index
    %308 = vector.load %arg17[%c0_142, %c0_143] : memref<8x32xf32, #tpu.memory_space<vmem>>, vector<8x32xf32>
    tpu.vector_store %arg17[%c0_142, %c0_143], %307 {strides = array<i32>} : memref<8x32xf32, #tpu.memory_space<vmem>>, vector<8x32xf32>,
    return
  }
  func.func @transform_0(%arg0: i32) -> (i32, i32) {
    %c0_i32 = arith.constant 0 : i32
    %c0_i32_0 = arith.constant 0 : i32
    return %arg0, %c0_i32 : i32, i32
  }
  func.func @transform_1(%arg0: i32) -> (i32, i32) {
    %c0_i32 = arith.constant 0 : i32
    %c0_i32_0 = arith.constant 0 : i32
    %c0_i32_1 = arith.constant 0 : i32
    return %c0_i32, %c0_i32_0 : i32, i32
  }
  func.func @transform_2(%arg0: i32) -> (i32, i32) {
    %c0_i32 = arith.constant 0 : i32
    %c0_i32_0 = arith.constant 0 : i32
    %c0_i32_1 = arith.constant 0 : i32
    return %c0_i32, %c0_i32_0 : i32, i32
  }
  func.func @transform_3(%arg0: i32) -> (i32, i32) {
    %c0_i32 = arith.constant 0 : i32
    %c0_i32_0 = arith.constant 0 : i32
    %c0_i32_1 = arith.constant 0 : i32
    return %c0_i32, %c0_i32_0 : i32, i32
  }
  func.func @transform_4(%arg0: i32) -> (i32, i32, i32) {
    %c0_i32 = arith.constant 0 : i32
    %c0_i32_0 = arith.constant 0 : i32
    %c0_i32_1 = arith.constant 0 : i32
    %c0_i32_2 = arith.constant 0 : i32
    return %c0_i32, %c0_i32_0, %c0_i32_1 : i32, i32, i32
  }
  func.func @transform_5(%arg0: i32) -> (i32, i32, i32) {
    %c0_i32 = arith.constant 0 : i32
    %c0_i32_0 = arith.constant 0 : i32
    %c0_i32_1 = arith.constant 0 : i32
    %c0_i32_2 = arith.constant 0 : i32
    return %c0_i32, %c0_i32_0, %c0_i32_1 : i32, i32, i32
  }
  func.func @transform_6(%arg0: i32) -> (i32, i32, i32) {
    %c0_i32 = arith.constant 0 : i32
    %c0_i32_0 = arith.constant 0 : i32
    %c0_i32_1 = arith.constant 0 : i32
    %c0_i32_2 = arith.constant 0 : i32
    return %c0_i32, %c0_i32_0, %c0_i32_1 : i32, i32, i32
  }
  func.func @transform_7(%arg0: i32) -> (i32, i32, i32) {
    %c0_i32 = arith.constant 0 : i32
    %c0_i32_0 = arith.constant 0 : i32
    %c0_i32_1 = arith.constant 0 : i32
    %c0_i32_2 = arith.constant 0 : i32
    return %c0_i32, %c0_i32_0, %c0_i32_1 : i32, i32, i32
  }
  func.func @transform_8(%arg0: i32) -> (i32, i32, i32) {
    %c0_i32 = arith.constant 0 : i32
    %c0_i32_0 = arith.constant 0 : i32
    %c0_i32_1 = arith.constant 0 : i32
    %c0_i32_2 = arith.constant 0 : i32
    return %c0_i32, %c0_i32_0, %c0_i32_1 : i32, i32, i32
  }
  func.func @transform_9(%arg0: i32) -> (i32, i32, i32) {
    %c0_i32 = arith.constant 0 : i32
    %c0_i32_0 = arith.constant 0 : i32
    %c0_i32_1 = arith.constant 0 : i32
    %c0_i32_2 = arith.constant 0 : i32
    return %c0_i32, %c0_i32_0, %c0_i32_1 : i32, i32, i32
  }
  func.func @transform_10(%arg0: i32) -> (i32, i32, i32) {
    %c0_i32 = arith.constant 0 : i32
    %c0_i32_0 = arith.constant 0 : i32
    %c0_i32_1 = arith.constant 0 : i32
    %c0_i32_2 = arith.constant 0 : i32
    return %c0_i32, %c0_i32_0, %c0_i32_1 : i32, i32, i32
  }
  func.func @transform_11(%arg0: i32) -> (i32, i32, i32) {
    %c0_i32 = arith.constant 0 : i32
    %c0_i32_0 = arith.constant 0 : i32
    %c0_i32_1 = arith.constant 0 : i32
    %c0_i32_2 = arith.constant 0 : i32
    return %c0_i32, %c0_i32_0, %c0_i32_1 : i32, i32, i32
  }
  func.func @transform_12(%arg0: i32) -> (i32, i32, i32) {
    %c0_i32 = arith.constant 0 : i32
    %c0_i32_0 = arith.constant 0 : i32
    %c0_i32_1 = arith.constant 0 : i32
    %c0_i32_2 = arith.constant 0 : i32
    return %c0_i32, %c0_i32_0, %c0_i32_1 : i32, i32, i32
  }
  func.func @transform_13(%arg0: i32) -> (i32, i32, i32) {
    %c0_i32 = arith.constant 0 : i32
    %c0_i32_0 = arith.constant 0 : i32
    %c0_i32_1 = arith.constant 0 : i32
    %c0_i32_2 = arith.constant 0 : i32
    return %c0_i32, %c0_i32_0, %c0_i32_1 : i32, i32, i32
  }
  func.func @transform_14(%arg0: i32) -> (i32, i32, i32) {
    %c0_i32 = arith.constant 0 : i32
    %c0_i32_0 = arith.constant 0 : i32
    %c0_i32_1 = arith.constant 0 : i32
    %c0_i32_2 = arith.constant 0 : i32
    return %c0_i32, %c0_i32_0, %c0_i32_1 : i32, i32, i32
  }
  func.func @transform_15(%arg0: i32) -> (i32, i32, i32) {
    %c0_i32 = arith.constant 0 : i32
    %c0_i32_0 = arith.constant 0 : i32
    %c0_i32_1 = arith.constant 0 : i32
    %c0_i32_2 = arith.constant 0 : i32
    return %c0_i32, %c0_i32_0, %c0_i32_1 : i32, i32, i32
  }
  func.func @transform_16(%arg0: i32) -> (i32, i32) {
    %c0_i32 = arith.constant 0 : i32
    %c0_i32_0 = arith.constant 0 : i32
    return %arg0, %c0_i32 : i32, i32
  }
}

module attributes {stable_mosaic.version = 11 : i64} {
  func.func @_head_kernel(%arg0: memref<2x256xf32, #tpu.memory_space<vmem>>, %arg1: memref<256x32xf32, #tpu.memory_space<vmem>>, %arg2: memref<1x32xf32, #tpu.memory_space<vmem>>, %arg3: memref<32x6xf32, #tpu.memory_space<vmem>>, %arg4: memref<1x6xf32, #tpu.memory_space<vmem>>, %arg5: memref<2x6xf32, #tpu.memory_space<vmem>>) attributes {dimension_semantics = [], scalar_prefetch = 0 : i64, scratch_operands = 0 : i64, tpu.core_type = #tpu.core_type<tc>} {
    %c0 = arith.constant 0 : index
    %c0_0 = arith.constant 0 : index
    %0 = vector.load %arg0[%c0, %c0_0] : memref<2x256xf32, #tpu.memory_space<vmem>>, vector<2x256xf32>
    %c0_1 = arith.constant 0 : index
    %c0_2 = arith.constant 0 : index
    %1 = vector.load %arg1[%c0_1, %c0_2] : memref<256x32xf32, #tpu.memory_space<vmem>>, vector<256x32xf32>
    %cst = arith.constant dense<0.000000e+00> : vector<2x32xf32>
    %2 = tpu.matmul %0, %1, %cst {dimension_numbers = #tpu.dot_dimension_numbers<[1], [0], [0], [1], [0, 0, 1, 1], [], []>} : vector<2x256xf32>, vector<256x32xf32>, vector<2x32xf32> -> vector<2x32xf32>
    %c0_3 = arith.constant 0 : index
    %c0_4 = arith.constant 0 : index
    %3 = vector.load %arg2[%c0_3, %c0_4] : memref<1x32xf32, #tpu.memory_space<vmem>>, vector<1x32xf32>
    %4 = vector.broadcast %3 : vector<1x32xf32> to vector<2x32xf32>
    %5 = arith.addf %2, %4 : vector<2x32xf32>
    %c0_5 = arith.constant 0 : index
    %c0_6 = arith.constant 0 : index
    %6 = vector.load %arg3[%c0_5, %c0_6] : memref<32x6xf32, #tpu.memory_space<vmem>>, vector<32x6xf32>
    %cst_7 = arith.constant dense<0.000000e+00> : vector<2x6xf32>
    %7 = tpu.matmul %5, %6, %cst_7 {dimension_numbers = #tpu.dot_dimension_numbers<[1], [0], [0], [1], [0, 0, 1, 1], [], []>} : vector<2x32xf32>, vector<32x6xf32>, vector<2x6xf32> -> vector<2x6xf32>
    %c0_8 = arith.constant 0 : index
    %c0_9 = arith.constant 0 : index
    %8 = vector.load %arg4[%c0_8, %c0_9] : memref<1x6xf32, #tpu.memory_space<vmem>>, vector<1x6xf32>
    %9 = vector.broadcast %8 : vector<1x6xf32> to vector<2x6xf32>
    %10 = arith.addf %7, %9 : vector<2x6xf32>
    %c0_10 = arith.constant 0 : index
    %c0_11 = arith.constant 0 : index
    %11 = vector.load %arg5[%c0_10, %c0_11] : memref<2x6xf32, #tpu.memory_space<vmem>>, vector<2x6xf32>
    tpu.vector_store %arg5[%c0_10, %c0_11], %10 {strides = array<i32>} : memref<2x6xf32, #tpu.memory_space<vmem>>, vector<2x6xf32>,
    return
  }
}

</mosaic_0001>

<llo_original>
// kernel: transformer_forward.3
$region0: #{transformer_forward.3}
  #allocation0 [shape = 'u32[]', space=smem, size = 0x4, offset = 0x4, fixed_abs, tag = 'smem constant byte address 0x4 - core index']
  #allocation1 [shape = 'u32[72,128]{1,0:T(1,128)}', space=vmem, size = 0x9000, scoped, tag = 'internal scratch']
  %s0 = inlined_call_operand.vmem [shape: f32[2,256], index: 0, kind: input, shape index: {}]
  %s1 = inlined_call_operand.vmem [shape: f32[256,32], index: 1, kind: input, shape index: {}]
  %s2 = inlined_call_operand.vmem [shape: f32[1,32], index: 2, kind: input, shape index: {}]
  %s3 = inlined_call_operand.vmem [shape: f32[32,6], index: 3, kind: input, shape index: {}]
  %s4 = inlined_call_operand.vmem [shape: f32[1,6], index: 4, kind: input, shape index: {}]
  %s5 = inlined_call_operand.hbm [shape: f32[2,6], index: 5, kind: output, shape index: {}]
  %s6 = sld [smem:[#allocation0]]
  $region30: #{transformer_forward.3} parent=0
    _
  %s8 = ssub.s32 1, %s6
  %s9 = scalar_select 0, %s8, %s6
  $region1: #{transformer_forward.3} parent=0
    #allocation2 [shape = 'u8[1024]{0}', space=vmem, size = 0x400, scoped, tag = 'output window, operand 0, single buffered']
    #allocation3 [shape = 's32[1]{0}', space=sflag, size = 0x4, scoped, tag = 'scoped memory for transformer_forward.3']
    %10 = vsyncpa [#allocation3], 0
    // Predicated region
    $region2: #{transformer_forward.3} parent=1 // pred_check
      _
    $region3: #{transformer_forward.3} parent=1 // pred_check_branch
      %12 = sbr.rel (0) target = $region5
    $region4: #{transformer_forward.3} parent=1 // pred_region
      _
    $region5: #{transformer_forward.3} parent=1 // pred_fallthru
      _
    // Predicated region
    $region6: #{transformer_forward.3} parent=1 // pred_check
      _
    $region7: #{transformer_forward.3} parent=1 // pred_check_branch
      %14 = sbr.rel (0) target = $region9
    $region8: #{transformer_forward.3} parent=1 // pred_region
      _
    $region9: #{transformer_forward.3} parent=1 // pred_fallthru
      _
    // Predicated region
    $region10: #{transformer_forward.3} parent=1 // pred_check
      _
    $region11: #{transformer_forward.3} parent=1 // pred_check_branch
      %16 = sbr.rel (0) target = $region13
    $region12: #{transformer_forward.3} parent=1 // pred_region
      _
    $region13: #{transformer_forward.3} parent=1 // pred_fallthru
      _
    // Predicated region
    $region14: #{transformer_forward.3} parent=1 // pred_check
      _
    $region15: #{transformer_forward.3} parent=1 // pred_check_branch
      %18 = sbr.rel (0) target = $region17
    $region16: #{transformer_forward.3} parent=1 // pred_region
      _
    $region17: #{transformer_forward.3} parent=1 // pred_fallthru
      _
    // Predicated region
    $region18: #{transformer_forward.3} parent=1 // pred_check
      _
    $region19: #{transformer_forward.3} parent=1 // pred_check_branch
      %20 = sbr.rel (0) target = $region21
    $region20: #{transformer_forward.3} parent=1 // pred_region
      _
    $region21: #{transformer_forward.3} parent=1 // pred_fallthru
      _
    %v21 = vld [vmem:[%s0] sm:$0xf]
    %v22 = vld [vmem:[%s1] sm:$0xff]
    %v23 = vld [vmem:[%s1 + $0x8] sm:$0xff]
    %v24 = vld [vmem:[%s1 + $0x10] sm:$0xff]
    %v25 = vld [vmem:[%s1 + $0x18] sm:$0xff]
    %v26 = vld [vmem:[%s1 + $0x20] sm:$0xff]
    %v27 = vld [vmem:[%s1 + $0x28] sm:$0xff]
    %v28 = vld [vmem:[%s1 + $0x30] sm:$0xff]
    %v29 = vld [vmem:[%s1 + $0x38] sm:$0xff]
    %v30 = vld [vmem:[%s1 + $0x40] sm:$0xff]
    %v31 = vld [vmem:[%s1 + $0x48] sm:$0xff]
    %v32 = vld [vmem:[%s1 + $0x50] sm:$0xff]
    %v33 = vld [vmem:[%s1 + $0x58] sm:$0xff]
    %v34 = vld [vmem:[%s1 + $0x60] sm:$0xff]
    %v35 = vld [vmem:[%s1 + $0x68] sm:$0xff]
    %v36 = vld [vmem:[%s1 + $0x70] sm:$0xff]
    %v37 = vld [vmem:[%s1 + $0x78] sm:$0xff]
    %v38 = vld [vmem:[%s1 + $0x80] sm:$0xff]
    %v39 = vld [vmem:[%s1 + $0x88] sm:$0xff]
    %v40 = vld [vmem:[%s1 + $0x90] sm:$0xff]
    %v41 = vld [vmem:[%s1 + $0x98] sm:$0xff]
    %v42 = vld [vmem:[%s1 + $0xa0] sm:$0xff]
    %v43 = vld [vmem:[%s1 + $0xa8] sm:$0xff]
    %v44 = vld [vmem:[%s1 + $0xb0] sm:$0xff]
    %v45 = vld [vmem:[%s1 + $0xb8] sm:$0xff]
    %v46 = vld [vmem:[%s1 + $0xc0] sm:$0xff]
    %v47 = vld [vmem:[%s1 + $0xc8] sm:$0xff]
    %v48 = vld [vmem:[%s1 + $0xd0] sm:$0xff]
    %v49 = vld [vmem:[%s1 + $0xd8] sm:$0xff]
    %v50 = vld [vmem:[%s1 + $0xe0] sm:$0xff]
    %v51 = vld [vmem:[%s1 + $0xe8] sm:$0xff]
    %v52 = vld [vmem:[%s1 + $0xf0] sm:$0xff]
    %v53 = vld [vmem:[%s1 + $0xf8] sm:$0xff]
    %v54 = vld [vmem:[%s2] sm:$0x1]
    %v56 = vperm.slane %v54, 0
    %59 = vst [vmem:[#allocation1] ss:$4 sm:$0xff] %v21
    %v60 = vld.sshfl [vmem:[#allocation1] sm:$0xff pattern:$0x73625140]
    %v61 = vld.sshfl [vmem:[#allocation1 + $0x8] sm:$0xff pattern:$0x73625140]
    %64 = vmatpush.msra.mxu0 %v37
    %65 = vmatpush.msra.mxu0 %v36
    %66 = vmatpush.msra.mxu0 %v35
    %67 = vmatpush.msra.mxu0 %v34
    %68 = vmatpush.msra.mxu0 %v33
    %69 = vmatpush.msra.mxu0 %v32
    %70 = vmatpush.msra.mxu0 %v31
    %71 = vmatpush.msra.mxu0 %v30
    %72 = vmatpush.msra.mxu0 %v29
    %73 = vmatpush.msra.mxu0 %v28
    %74 = vmatpush.msra.mxu0 %v27
    %75 = vmatpush.msra.mxu0 %v26
    %76 = vmatpush.msra.mxu0 %v25
    %77 = vmatpush.msra.mxu0 %v24
    %78 = vmatpush.msra.mxu0 %v23
    %79 = vmatpush.msra.mxu0 %v22
    %80 = vmatmul.f32.gmra.mxu0 %v60
    %v81 = vpop.f32.mrf.mxu0
    %v82 = vadd.f32 %v56, %v81
    %83 = vdwg.mxu0
    %84 = vmatpush.msra.mxu0 %v53
    %85 = vmatpush.msra.mxu0 %v52
    %86 = vmatpush.msra.mxu0 %v51
    %87 = vmatpush.msra.mxu0 %v50
    %88 = vmatpush.msra.mxu0 %v49
    %89 = vmatpush.msra.mxu0 %v48
    %90 = vmatpush.msra.mxu0 %v47
    %91 = vmatpush.msra.mxu0 %v46
    %92 = vmatpush.msra.mxu0 %v45
    %93 = vmatpush.msra.mxu0 %v44
    %94 = vmatpush.msra.mxu0 %v43
    %95 = vmatpush.msra.mxu0 %v42
    %96 = vmatpush.msra.mxu0 %v41
    %97 = vmatpush.msra.mxu0 %v40
    %98 = vmatpush.msra.mxu0 %v39
    %99 = vmatpush.msra.mxu0 %v38
    %100 = vmatmul.f32.gmra.mxu0 %v61
    %v101 = vpop.f32.mrf.mxu0
    %v102 = vadd.f32 %v82, %v101
    %103 = vdwg.mxu0
    %v104 = vld [vmem:[%s3] sm:$0xff]
    %v105 = vld [vmem:[%s3 + $0x8] sm:$0xff]
    %v106 = vld [vmem:[%s3 + $0x10] sm:$0xff]
    %v107 = vld [vmem:[%s3 + $0x18] sm:$0xff]
    %v108 = vld [vmem:[%s4] sm:$0x1]
    %v110 = vperm.slane %v108, 0
    %vm112 = vcmask 261120
    %v114 = vsel %vm112, %v102, 0
    %116 = vmatpush.msra.mxu0 0.0
    %117 = vmatpush.msra.mxu0 0.0
    %118 = vmatpush.msra.mxu0 0.0
    %119 = vmatpush.msra.mxu0 0.0
    %120 = vmatpush.msra.mxu0 0.0
    %121 = vmatpush.msra.mxu0 0.0
    %122 = vmatpush.msra.mxu0 0.0
    %123 = vmatpush.msra.mxu0 0.0
    %124 = vmatpush.msra.mxu0 0.0
    %125 = vmatpush.msra.mxu0 0.0
    %126 = vmatpush.msra.mxu0 0.0
    %127 = vmatpush.msra.mxu0 0.0
    %128 = vmatpush.msra.mxu0 %v107
    %129 = vmatpush.msra.mxu0 %v106
    %130 = vmatpush.msra.mxu0 %v105
    %131 = vmatpush.msra.mxu0 %v104
    %132 = vmatmul.f32.gmra.mxu0 %v114
    %v133 = vpop.f32.mrf.mxu0
    %v134 = vadd.f32 %v110, %v133
    %135 = vdwg.mxu0
    %vm136 = vcmask 41984
    %137 = vst.msk [vmem:[#allocation2] sm:$0x3] %vm136, %v134
    // Predicated region
    $region22: #{transformer_forward.3} parent=1 // pred_check
      _
    $region23: #{transformer_forward.3} parent=1 // pred_check_branch
      %139 = sbr.rel (0) target = $region25
    $region24: #{transformer_forward.3} parent=1 // pred_region
      %141 = vsyncadd [#allocation3], 0
      %s143 = sshll.u32 [#allocation2], 4
      %s144 = int_to_ptr.vmem [resolvable:$true] %s143
      %s145 = sshll.u32 %s5, 4
      %s146 = int_to_ptr.hbm [resolvable:$true] %s145
      %148 = dma.vmem_to_hbm [thread:$0]  %s144, 32, %s146, [#allocation3]
    $region25: #{transformer_forward.3} parent=1 // pred_fallthru
      _
    // Predicated region
    $region26: #{transformer_forward.3} parent=1 // pred_check
      _
    $region27: #{transformer_forward.3} parent=1 // pred_check_branch
      %150 = sbr.rel (0) target = $region29
    $region28: #{transformer_forward.3} parent=1 // pred_region
      %152 = dma.done [#allocation3], 32
    $region29: #{transformer_forward.3} parent=1 // pred_fallthru
      _
    %153 = vsyncpa [#allocation3], 1

// kernel: transformer_forward.2
$region0: #{transformer_forward.2}
  #allocation0 [shape = 'u32[]', space=smem, size = 0x4, offset = 0x4, fixed_abs, tag = 'smem constant byte address 0x4 - core index']
  #allocation1 [shape = 'u32[72,128]{1,0:T(1,128)}', space=vmem, size = 0x9000, scoped, tag = 'internal scratch']
  %s0 = inlined_call_operand.vmem [shape: f32[16,4], index: 0, kind: input, shape index: {}]
  %s1 = inlined_call_operand.vmem [shape: f32[4,32], index: 1, kind: input, shape index: {}]
  %s2 = inlined_call_operand.vmem [shape: f32[1,32], index: 2, kind: input, shape index: {}]
  %s3 = inlined_call_operand.vmem [shape: f32[8,32], index: 3, kind: input, shape index: {}]
  %s4 = inlined_call_operand.vmem [shape: f32[2,32,96], index: 4, kind: input, shape index: {}]
  %s5 = inlined_call_operand.vmem [shape: f32[2,1,96], index: 5, kind: input, shape index: {}]
  %s6 = inlined_call_operand.vmem [shape: f32[2,32,32], index: 6, kind: input, shape index: {}]
  %s7 = inlined_call_operand.vmem [shape: f32[2,1,32], index: 7, kind: input, shape index: {}]
  %s8 = inlined_call_operand.vmem [shape: f32[2,1,32], index: 8, kind: input, shape index: {}]
  %s9 = inlined_call_operand.vmem [shape: f32[2,1,32], index: 9, kind: input, shape index: {}]
  %s10 = inlined_call_operand.vmem [shape: f32[2,32,2048], index: 10, kind: input, shape index: {}]
  %s11 = inlined_call_operand.vmem [shape: f32[2,1,2048], index: 11, kind: input, shape index: {}]
  %s12 = inlined_call_operand.vmem [shape: f32[2,2048,32], index: 12, kind: input, shape index: {}]
  %s13 = inlined_call_operand.vmem [shape: f32[2,1,32], index: 13, kind: input, shape index: {}]
  %s14 = inlined_call_operand.vmem [shape: f32[2,1,32], index: 14, kind: input, shape index: {}]
  %s15 = inlined_call_operand.vmem [shape: f32[2,1,32], index: 15, kind: input, shape index: {}]
  %s16 = inlined_call_operand.vmem [shape: f32[16,32], index: 16, kind: output, shape index: {}]
  %s17 = sld [smem:[#allocation0]]
  $region97: #{transformer_forward.2} parent=0
    _
  %s19 = ssub.s32 1, %s17
  %s20 = scalar_select 0, %s19, %s17
  loop: start=0, step=1, limit=4
  $region2: #{transformer_forward.2} parent=0 // loop_pre_header
    _
  $region3: #{transformer_forward.2} parent=0 // loop_header
    %s22 = sphi 0, %s26
    %p23 = scmp.ge.s32.totalorder %s22, 4
    %s32 = sphi 0, %s34
    %s35 = sphi 0, %s32
    %s36 = sphi 0, %s35
    %s52 = sphi 0, %s36
    %s56 = sphi 0, %s56
    %s58 = sphi 0, %s56
    %s59 = sphi 0, %s58
    %s73 = sphi 0, %s59
    %s77 = sphi 0, %s77
    %s79 = sphi 0, %s77
    %s80 = sphi 0, %s79
    %s94 = sphi 0, %s80
    %s98 = sphi 0, %s98
    %s100 = sphi 0, %s98
    %s101 = sphi 0, %s100
    %s115 = sphi 0, %s101
    %s119 = sphi 0, %s119
    %s121 = sphi 0, %s119
    %s122 = sphi 0, %s121
    %s136 = sphi 0, %s122
    %s140 = sphi 0, %s140
    %s142 = sphi 0, %s140
    %s143 = sphi 0, %s142
    %s157 = sphi 0, %s143
    %s161 = sphi 0, %s161
    %s163 = sphi 0, %s161
    %s164 = sphi 0, %s163
    %s178 = sphi 0, %s164
    %s182 = sphi 0, %s182
    %s184 = sphi 0, %s182
    %s185 = sphi 0, %s184
    %s199 = sphi 0, %s185
    %s203 = sphi 0, %s203
    %s205 = sphi 0, %s203
    %s206 = sphi 0, %s205
    %s220 = sphi 0, %s206
    %s224 = sphi 0, %s224
    %s226 = sphi 0, %s224
    %s227 = sphi 0, %s226
    %s241 = sphi 0, %s227
    %s245 = sphi 0, %s245
    %s247 = sphi 0, %s245
    %s248 = sphi 0, %s247
    %s262 = sphi 0, %s248
    %s266 = sphi 0, %s266
    %s268 = sphi 0, %s266
    %s269 = sphi 0, %s268
    %s283 = sphi 0, %s269
    %s287 = sphi 0, %s287
    %s289 = sphi 0, %s287
    %s290 = sphi 0, %s289
    %s304 = sphi 0, %s290
    %s308 = sphi 0, %s308
    %s310 = sphi 0, %s308
    %s311 = sphi 0, %s310
    %s325 = sphi 0, %s311
    %s329 = sphi 0, %s329
    %s331 = sphi 0, %s329
    %s332 = sphi 0, %s331
    %s346 = sphi 0, %s332
    %s350 = sphi 0, %s350
    %s352 = sphi 0, %s350
    %s353 = sphi 0, %s352
    %s367 = sphi 0, %s353
    %s373 = sphi 0, %s375
    %s376 = sphi 0, %s373
    %s377 = sphi 0, %s376
    %s393 = sphi 0, %s377
  $region4: #{transformer_forward.2} parent=0 // loop_header_branch
    %25 = sbr.rel (%p23) target = $region8
  $region5: #{transformer_forward.2} parent=0 // loop_body
    %s27 = ssub.s32 %s22, 1
    %s28 = ssub.s32 %s22, 2
    %s29 = sadd.s32 %s22, 1
    %s30 = ssub.s32 %s22, %s29
    %p31 = scmp.eq.s32.totalorder %s30, 0
    %s33 = sadd.s32 %s32, 1
    %s34 = scalar_select %p31, %s32, %s33
    %p37 = pneg %p31
    %p38 = scmp.eq.s32.totalorder %s22, 1
    %p39 = por %p37, %p38
    %p40 = scmp.ne.s32.totalorder %s32, %s35
    %p41 = scmp.eq.s32.totalorder %s22, 0
    %p42 = por %p40, %p41
    %p43 = scmp.ne.s32.totalorder %s32, %s35
    %p44 = scmp.eq.s32.totalorder %s27, 1
    %p45 = por %p43, %p44
    %p46 = scmp.ne.s32.totalorder %s35, %s36
    %p47 = scmp.eq.s32.totalorder %s27, 0
    %p48 = por %p46, %p47
    %p49 = scmp.ne.s32.totalorder %s35, %s36
    %p50 = scmp.eq.s32.totalorder %s28, 1
    %p51 = por %p49, %p50
    %p53 = scmp.ne.s32.totalorder %s36, %s52
    %p54 = scmp.eq.s32.totalorder %s28, 0
    %p55 = por %p53, %p54
    %s57 = sadd.s32 %s56, 1
    %p60 = scmp.eq.s32.totalorder %s22, 1
    %p61 = scmp.ne.s32.totalorder %s56, %s58
    %p62 = scmp.eq.s32.totalorder %s22, 0
    %p63 = por %p61, %p62
    %p64 = scmp.ne.s32.totalorder %s56, %s58
    %p65 = scmp.eq.s32.totalorder %s27, 1
    %p66 = por %p64, %p65
    %p67 = scmp.ne.s32.totalorder %s58, %s59
    %p68 = scmp.eq.s32.totalorder %s27, 0
    %p69 = por %p67, %p68
    %p70 = scmp.ne.s32.totalorder %s58, %s59
    %p71 = scmp.eq.s32.totalorder %s28, 1
    %p72 = por %p70, %p71
    %p74 = scmp.ne.s32.totalorder %s59, %s73
    %p75 = scmp.eq.s32.totalorder %s28, 0
    %p76 = por %p74, %p75
    %s78 = sadd.s32 %s77, 1
    %p81 = scmp.eq.s32.totalorder %s22, 1
    %p82 = scmp.ne.s32.totalorder %s77, %s79
    %p83 = scmp.eq.s32.totalorder %s22, 0
    %p84 = por %p82, %p83
    %p85 = scmp.ne.s32.totalorder %s77, %s79
    %p86 = scmp.eq.s32.totalorder %s27, 1
    %p87 = por %p85, %p86
    %p88 = scmp.ne.s32.totalorder %s79, %s80
    %p89 = scmp.eq.s32.totalorder %s27, 0
    %p90 = por %p88, %p89
    %p91 = scmp.ne.s32.totalorder %s79, %s80
    %p92 = scmp.eq.s32.totalorder %s28, 1
    %p93 = por %p91, %p92
    %p95 = scmp.ne.s32.totalorder %s80, %s94
    %p96 = scmp.eq.s32.totalorder %s28, 0
    %p97 = por %p95, %p96
    %s99 = sadd.s32 %s98, 1
    %p102 = scmp.eq.s32.totalorder %s22, 1
    %p103 = scmp.ne.s32.totalorder %s98, %s100
    %p104 = scmp.eq.s32.totalorder %s22, 0
    %p105 = por %p103, %p104
    %p106 = scmp.ne.s32.totalorder %s98, %s100
    %p107 = scmp.eq.s32.totalorder %s27, 1
    %p108 = por %p106, %p107
    %p109 = scmp.ne.s32.totalorder %s100, %s101
    %p110 = scmp.eq.s32.totalorder %s27, 0
    %p111 = por %p109, %p110
    %p112 = scmp.ne.s32.totalorder %s100, %s101
    %p113 = scmp.eq.s32.totalorder %s28, 1
    %p114 = por %p112, %p113
    %p116 = scmp.ne.s32.totalorder %s101, %s115
    %p117 = scmp.eq.s32.totalorder %s28, 0
    %p118 = por %p116, %p117
    %s120 = sadd.s32 %s119, 1
    %p123 = scmp.eq.s32.totalorder %s22, 1
    %p124 = scmp.ne.s32.totalorder %s119, %s121
    %p125 = scmp.eq.s32.totalorder %s22, 0
    %p126 = por %p124, %p125
    %p127 = scmp.ne.s32.totalorder %s119, %s121
    %p128 = scmp.eq.s32.totalorder %s27, 1
    %p129 = por %p127, %p128
    %p130 = scmp.ne.s32.totalorder %s121, %s122
    %p131 = scmp.eq.s32.totalorder %s27, 0
    %p132 = por %p130, %p131
    %p133 = scmp.ne.s32.totalorder %s121, %s122
    %p134 = scmp.eq.s32.totalorder %s28, 1
    %p135 = por %p133, %p134
    %p137 = scmp.ne.s32.totalorder %s122, %s136
    %p138 = scmp.eq.s32.totalorder %s28, 0
    %p139 = por %p137, %p138
    %s141 = sadd.s32 %s140, 1
    %p144 = scmp.eq.s32.totalorder %s22, 1
    %p145 = scmp.ne.s32.totalorder %s140, %s142
    %p146 = scmp.eq.s32.totalorder %s22, 0
    %p147 = por %p145, %p146
    %p148 = scmp.ne.s32.totalorder %s140, %s142
    %p149 = scmp.eq.s32.totalorder %s27, 1
    %p150 = por %p148, %p149
    %p151 = scmp.ne.s32.totalorder %s142, %s143
    %p152 = scmp.eq.s32.totalorder %s27, 0
    %p153 = por %p151, %p152
    %p154 = scmp.ne.s32.totalorder %s142, %s143
    %p155 = scmp.eq.s32.totalorder %s28, 1
    %p156 = por %p154, %p155
    %p158 = scmp.ne.s32.totalorder %s143, %s157
    %p159 = scmp.eq.s32.totalorder %s28, 0
    %p160 = por %p158, %p159
    %s162 = sadd.s32 %s161, 1
    %p165 = scmp.eq.s32.totalorder %s22, 1
    %p166 = scmp.ne.s32.totalorder %s161, %s163
    %p167 = scmp.eq.s32.totalorder %s22, 0
    %p168 = por %p166, %p167
    %p169 = scmp.ne.s32.totalorder %s161, %s163
    %p170 = scmp.eq.s32.totalorder %s27, 1
    %p171 = por %p169, %p170
    %p172 = scmp.ne.s32.totalorder %s163, %s164
    %p173 = scmp.eq.s32.totalorder %s27, 0
    %p174 = por %p172, %p173
    %p175 = scmp.ne.s32.totalorder %s163, %s164
    %p176 = scmp.eq.s32.totalorder %s28, 1
    %p177 = por %p175, %p176
    %p179 = scmp.ne.s32.totalorder %s164, %s178
    %p180 = scmp.eq.s32.totalorder %s28, 0
    %p181 = por %p179, %p180
    %s183 = sadd.s32 %s182, 1
    %p186 = scmp.eq.s32.totalorder %s22, 1
    %p187 = scmp.ne.s32.totalorder %s182, %s184
    %p188 = scmp.eq.s32.totalorder %s22, 0
    %p189 = por %p187, %p188
    %p190 = scmp.ne.s32.totalorder %s182, %s184
    %p191 = scmp.eq.s32.totalorder %s27, 1
    %p192 = por %p190, %p191
    %p193 = scmp.ne.s32.totalorder %s184, %s185
    %p194 = scmp.eq.s32.totalorder %s27, 0
    %p195 = por %p193, %p194
    %p196 = scmp.ne.s32.totalorder %s184, %s185
    %p197 = scmp.eq.s32.totalorder %s28, 1
    %p198 = por %p196, %p197
    %p200 = scmp.ne.s32.totalorder %s185, %s199
    %p201 = scmp.eq.s32.totalorder %s28, 0
    %p202 = por %p200, %p201
    %s204 = sadd.s32 %s203, 1
    %p207 = scmp.eq.s32.totalorder %s22, 1
    %p208 = scmp.ne.s32.totalorder %s203, %s205
    %p209 = scmp.eq.s32.totalorder %s22, 0
    %p210 = por %p208, %p209
    %p211 = scmp.ne.s32.totalorder %s203, %s205
    %p212 = scmp.eq.s32.totalorder %s27, 1
    %p213 = por %p211, %p212
    %p214 = scmp.ne.s32.totalorder %s205, %s206
    %p215 = scmp.eq.s32.totalorder %s27, 0
    %p216 = por %p214, %p215
    %p217 = scmp.ne.s32.totalorder %s205, %s206
    %p218 = scmp.eq.s32.totalorder %s28, 1
    %p219 = por %p217, %p218
    %p221 = scmp.ne.s32.totalorder %s206, %s220
    %p222 = scmp.eq.s32.totalorder %s28, 0
    %p223 = por %p221, %p222
    %s225 = sadd.s32 %s224, 1
    %p228 = scmp.eq.s32.totalorder %s22, 1
    %p229 = scmp.ne.s32.totalorder %s224, %s226
    %p230 = scmp.eq.s32.totalorder %s22, 0
    %p231 = por %p229, %p230
    %p232 = scmp.ne.s32.totalorder %s224, %s226
    %p233 = scmp.eq.s32.totalorder %s27, 1
    %p234 = por %p232, %p233
    %p235 = scmp.ne.s32.totalorder %s226, %s227
    %p236 = scmp.eq.s32.totalorder %s27, 0
    %p237 = por %p235, %p236
    %p238 = scmp.ne.s32.totalorder %s226, %s227
    %p239 = scmp.eq.s32.totalorder %s28, 1
    %p240 = por %p238, %p239
    %p242 = scmp.ne.s32.totalorder %s227, %s241
    %p243 = scmp.eq.s32.totalorder %s28, 0
    %p244 = por %p242, %p243
    %s246 = sadd.s32 %s245, 1
    %p249 = scmp.eq.s32.totalorder %s22, 1
    %p250 = scmp.ne.s32.totalorder %s245, %s247
    %p251 = scmp.eq.s32.totalorder %s22, 0
    %p252 = por %p250, %p251
    %p253 = scmp.ne.s32.totalorder %s245, %s247
    %p254 = scmp.eq.s32.totalorder %s27, 1
    %p255 = por %p253, %p254
    %p256 = scmp.ne.s32.totalorder %s247, %s248
    %p257 = scmp.eq.s32.totalorder %s27, 0
    %p258 = por %p256, %p257
    %p259 = scmp.ne.s32.totalorder %s247, %s248
    %p260 = scmp.eq.s32.totalorder %s28, 1
    %p261 = por %p259, %p260
    %p263 = scmp.ne.s32.totalorder %s248, %s262
    %p264 = scmp.eq.s32.totalorder %s28, 0
    %p265 = por %p263, %p264
    %s267 = sadd.s32 %s266, 1
    %p270 = scmp.eq.s32.totalorder %s22, 1
    %p271 = scmp.ne.s32.totalorder %s266, %s268
    %p272 = scmp.eq.s32.totalorder %s22, 0
    %p273 = por %p271, %p272
    %p274 = scmp.ne.s32.totalorder %s266, %s268
    %p275 = scmp.eq.s32.totalorder %s27, 1
    %p276 = por %p274, %p275
    %p277 = scmp.ne.s32.totalorder %s268, %s269
    %p278 = scmp.eq.s32.totalorder %s27, 0
    %p279 = por %p277, %p278
    %p280 = scmp.ne.s32.totalorder %s268, %s269
    %p281 = scmp.eq.s32.totalorder %s28, 1
    %p282 = por %p280, %p281
    %p284 = scmp.ne.s32.totalorder %s269, %s283
    %p285 = scmp.eq.s32.totalorder %s28, 0
    %p286 = por %p284, %p285
    %s288 = sadd.s32 %s287, 1
    %p291 = scmp.eq.s32.totalorder %s22, 1
    %p292 = scmp.ne.s32.totalorder %s287, %s289
    %p293 = scmp.eq.s32.totalorder %s22, 0
    %p294 = por %p292, %p293
    %p295 = scmp.ne.s32.totalorder %s287, %s289
    %p296 = scmp.eq.s32.totalorder %s27, 1
    %p297 = por %p295, %p296
    %p298 = scmp.ne.s32.totalorder %s289, %s290
    %p299 = scmp.eq.s32.totalorder %s27, 0
    %p300 = por %p298, %p299
    %p301 = scmp.ne.s32.totalorder %s289, %s290
    %p302 = scmp.eq.s32.totalorder %s28, 1
    %p303 = por %p301, %p302
    %p305 = scmp.ne.s32.totalorder %s290, %s304
    %p306 = scmp.eq.s32.totalorder %s28, 0
    %p307 = por %p305, %p306
    %s309 = sadd.s32 %s308, 1
    %p312 = scmp.eq.s32.totalorder %s22, 1
    %p313 = scmp.ne.s32.totalorder %s308, %s310
    %p314 = scmp.eq.s32.totalorder %s22, 0
    %p315 = por %p313, %p314
    %p316 = scmp.ne.s32.totalorder %s308, %s310
    %p317 = scmp.eq.s32.totalorder %s27, 1
    %p318 = por %p316, %p317
    %p319 = scmp.ne.s32.totalorder %s310, %s311
    %p320 = scmp.eq.s32.totalorder %s27, 0
    %p321 = por %p319, %p320
    %p322 = scmp.ne.s32.totalorder %s310, %s311
    %p323 = scmp.eq.s32.totalorder %s28, 1
    %p324 = por %p322, %p323
    %p326 = scmp.ne.s32.totalorder %s311, %s325
    %p327 = scmp.eq.s32.totalorder %s28, 0
    %p328 = por %p326, %p327
    %s330 = sadd.s32 %s329, 1
    %p333 = scmp.eq.s32.totalorder %s22, 1
    %p334 = scmp.ne.s32.totalorder %s329, %s331
    %p335 = scmp.eq.s32.totalorder %s22, 0
    %p336 = por %p334, %p335
    %p337 = scmp.ne.s32.totalorder %s329, %s331
    %p338 = scmp.eq.s32.totalorder %s27, 1
    %p339 = por %p337, %p338
    %p340 = scmp.ne.s32.totalorder %s331, %s332
    %p341 = scmp.eq.s32.totalorder %s27, 0
    %p342 = por %p340, %p341
    %p343 = scmp.ne.s32.totalorder %s331, %s332
    %p344 = scmp.eq.s32.totalorder %s28, 1
    %p345 = por %p343, %p344
    %p347 = scmp.ne.s32.totalorder %s332, %s346
    %p348 = scmp.eq.s32.totalorder %s28, 0
    %p349 = por %p347, %p348
    %s351 = sadd.s32 %s350, 1
    %p354 = scmp.eq.s32.totalorder %s22, 1
    %p355 = scmp.ne.s32.totalorder %s350, %s352
    %p356 = scmp.eq.s32.totalorder %s22, 0
    %p357 = por %p355, %p356
    %p358 = scmp.ne.s32.totalorder %s350, %s352
    %p359 = scmp.eq.s32.totalorder %s27, 1
    %p360 = por %p358, %p359
    %p361 = scmp.ne.s32.totalorder %s352, %s353
    %p362 = scmp.eq.s32.totalorder %s27, 0
    %p363 = por %p361, %p362
    %p364 = scmp.ne.s32.totalorder %s352, %s353
    %p365 = scmp.eq.s32.totalorder %s28, 1
    %p366 = por %p364, %p365
    %p368 = scmp.ne.s32.totalorder %s353, %s367
    %p369 = scmp.eq.s32.totalorder %s28, 0
    %p370 = por %p368, %p369
    %s371 = ssub.s32 %s22, %s29
    %p372 = scmp.eq.s32.totalorder %s371, 0
    %s374 = sadd.s32 %s373, 1
    %s375 = scalar_select %p372, %s373, %s374
    %p378 = pneg %p372
    %p379 = scmp.eq.s32.totalorder %s22, 1
    %p380 = por %p378, %p379
    %p381 = scmp.ne.s32.totalorder %s373, %s376
    %p382 = scmp.eq.s32.totalorder %s22, 0
    %p383 = por %p381, %p382
    %p384 = scmp.ne.s32.totalorder %s373, %s376
    %p385 = scmp.eq.s32.totalorder %s27, 1
    %p386 = por %p384, %p385
    %p387 = scmp.ne.s32.totalorder %s376, %s377
    %p388 = scmp.eq.s32.totalorder %s27, 0
    %p389 = por %p387, %p388
    %p390 = scmp.ne.s32.totalorder %s376, %s377
    %p391 = scmp.eq.s32.totalorder %s28, 1
    %p392 = por %p390, %p391
    %p394 = scmp.ne.s32.totalorder %s377, %s393
    %p395 = scmp.eq.s32.totalorder %s28, 0
    %p396 = por %p394, %p395
    %p397 = scmp.le.s32.totalorder 1, %s22
    %p398 = scmp.lt.s32.totalorder %s22, 3
    %p399 = pnand %p397, %p398
    %p400 = pneg %p399
    // Predicated region
    $region9: #{transformer_forward.2} parent=5 // pred_check
      _
    $region10: #{transformer_forward.2} parent=5 // pred_check_branch
      %402 = sbr.rel (%p399) target = $region12
    $region11: #{transformer_forward.2} parent=5 // pred_region
      %s403 = ssub.s32 %s22, 1
      // Predicated region
      $region13: #{transformer_forward.2} parent=11 // pred_check
        %p404 = pneg %p69
      $region14: #{transformer_forward.2} parent=11 // pred_check_branch
        %406 = sbr.rel (%p404) target = $region16
      $region15: #{transformer_forward.2} parent=11 // pred_region
        _
      $region16: #{transformer_forward.2} parent=11 // pred_fallthru
        _
      // Predicated region
      $region17: #{transformer_forward.2} parent=11 // pred_check
        %p407 = pneg %p90
      $region18: #{transformer_forward.2} parent=11 // pred_check_branch
        %409 = sbr.rel (%p407) target = $region20
      $region19: #{transformer_forward.2} parent=11 // pred_region
        _
      $region20: #{transformer_forward.2} parent=11 // pred_fallthru
        _
      // Predicated region
      $region21: #{transformer_forward.2} parent=11 // pred_check
        %p410 = pneg %p111
      $region22: #{transformer_forward.2} parent=11 // pred_check_branch
        %412 = sbr.rel (%p410) target = $region24
      $region23: #{transformer_forward.2} parent=11 // pred_region
        _
      $region24: #{transformer_forward.2} parent=11 // pred_fallthru
        _
      // Predicated region
      $region25: #{transformer_forward.2} parent=11 // pred_check
        %p413 = pneg %p132
      $region26: #{transformer_forward.2} parent=11 // pred_check_branch
        %415 = sbr.rel (%p413) target = $region28
      $region27: #{transformer_forward.2} parent=11 // pred_region
        _
      $region28: #{transformer_forward.2} parent=11 // pred_fallthru
        _
      // Predicated region
      $region29: #{transformer_forward.2} parent=11 // pred_check
        %p416 = pneg %p153
      $region30: #{transformer_forward.2} parent=11 // pred_check_branch
        %418 = sbr.rel (%p416) target = $region32
      $region31: #{transformer_forward.2} parent=11 // pred_region
        _
      $region32: #{transformer_forward.2} parent=11 // pred_fallthru
        _
      // Predicated region
      $region33: #{transformer_forward.2} parent=11 // pred_check
        %p419 = pneg %p174
      $region34: #{transformer_forward.2} parent=11 // pred_check_branch
        %421 = sbr.rel (%p419) target = $region36
      $region35: #{transformer_forward.2} parent=11 // pred_region
        _
      $region36: #{transformer_forward.2} parent=11 // pred_fallthru
        _
      // Predicated region
      $region37: #{transformer_forward.2} parent=11 // pred_check
        %p422 = pneg %p195
      $region38: #{transformer_forward.2} parent=11 // pred_check_branch
        %424 = sbr.rel (%p422) target = $region40
      $region39: #{transformer_forward.2} parent=11 // pred_region
        _
      $region40: #{transformer_forward.2} parent=11 // pred_fallthru
        _
      // Predicated region
      $region41: #{transformer_forward.2} parent=11 // pred_check
        %p425 = pneg %p216
      $region42: #{transformer_forward.2} parent=11 // pred_check_branch
        %427 = sbr.rel (%p425) target = $region44
      $region43: #{transformer_forward.2} parent=11 // pred_region
        _
      $region44: #{transformer_forward.2} parent=11 // pred_fallthru
        _
      // Predicated region
      $region45: #{transformer_forward.2} parent=11 // pred_check
        %p428 = pneg %p237
      $region46: #{transformer_forward.2} parent=11 // pred_check_branch
        %430 = sbr.rel (%p428) target = $region48
      $region47: #{transformer_forward.2} parent=11 // pred_region
        _
      $region48: #{transformer_forward.2} parent=11 // pred_fallthru
        _
      // Predicated region
      $region49: #{transformer_forward.2} parent=11 // pred_check
        %p431 = pneg %p258
      $region50: #{transformer_forward.2} parent=11 // pred_check_branch
        %433 = sbr.rel (%p431) target = $region52
      $region51: #{transformer_forward.2} parent=11 // pred_region
        _
      $region52: #{transformer_forward.2} parent=11 // pred_fallthru
        _
      // Predicated region
      $region53: #{transformer_forward.2} parent=11 // pred_check
        %p434 = pneg %p279
      $region54: #{transformer_forward.2} parent=11 // pred_check_branch
        %436 = sbr.rel (%p434) target = $region56
      $region55: #{transformer_forward.2} parent=11 // pred_region
        _
      $region56: #{transformer_forward.2} parent=11 // pred_fallthru
        _
      // Predicated region
      $region57: #{transformer_forward.2} parent=11 // pred_check
        %p437 = pneg %p300
      $region58: #{transformer_forward.2} parent=11 // pred_check_branch
        %439 = sbr.rel (%p437) target = $region60
      $region59: #{transformer_forward.2} parent=11 // pred_region
        _
      $region60: #{transformer_forward.2} parent=11 // pred_fallthru
        _
      // Predicated region
      $region61: #{transformer_forward.2} parent=11 // pred_check
        %p440 = pneg %p321
      $region62: #{transformer_forward.2} parent=11 // pred_check_branch
        %442 = sbr.rel (%p440) target = $region64
      $region63: #{transformer_forward.2} parent=11 // pred_region
        _
      $region64: #{transformer_forward.2} parent=11 // pred_fallthru
        _
      // Predicated region
      $region65: #{transformer_forward.2} parent=11 // pred_check
        %p443 = pneg %p342
      $region66: #{transformer_forward.2} parent=11 // pred_check_branch
        %445 = sbr.rel (%p443) target = $region68
      $region67: #{transformer_forward.2} parent=11 // pred_region
        _
      $region68: #{transformer_forward.2} parent=11 // pred_fallthru
        _
      // Predicated region
      $region69: #{transformer_forward.2} parent=11 // pred_check
        %p446 = pneg %p363
      $region70: #{transformer_forward.2} parent=11 // pred_check_branch
        %448 = sbr.rel (%p446) target = $region72
      $region71: #{transformer_forward.2} parent=11 // pred_region
        _
      $region72: #{transformer_forward.2} parent=11 // pred_fallthru
        _
    $region12: #{transformer_forward.2} parent=5 // pred_fallthru
      _
    %p449 = scmp.lt.s32.totalorder %s22, 2
    // Predicated region
    $region73: #{transformer_forward.2} parent=5 // pred_check
      %p450 = pneg %p449
    $region74: #{transformer_forward.2} parent=5 // pred_check_branch
      %452 = sbr.rel (%p450) target = $region76
    $region75: #{transformer_forward.2} parent=5 // pred_region
      // Predicated region
      $region77: #{transformer_forward.2} parent=75 // pred_check
        %p453 = pneg %p42
      $region78: #{transformer_forward.2} parent=75 // pred_check_branch
        %455 = sbr.rel (%p453) target = $region80
      $region79: #{transformer_forward.2} parent=75 // pred_region
        %p456 = scmp.lt.s32.totalorder %s22, 1
        %s457 = scalar_select %p456, %s22, 1
        %s458 = smul.addr %s457, 8
        %s459 = scalar_lea.vmem %s0, %s458
      $region80: #{transformer_forward.2} parent=75 // pred_fallthru
        _
    $region76: #{transformer_forward.2} parent=5 // pred_fallthru
      _
    %p460 = scmp.le.s32.totalorder 1, %s22
    %p461 = scmp.lt.s32.totalorder %s22, 3
    %p462 = pnand %p460, %p461
    %p463 = pneg %p462
    // Predicated region
    $region81: #{transformer_forward.2} parent=5 // pred_check
      _
    $region82: #{transformer_forward.2} parent=5 // pred_check_branch
      %465 = sbr.rel (%p462) target = $region84
    $region83: #{transformer_forward.2} parent=5 // pred_region
      %s466 = ssub.s32 %s22, 1
      %p467 = scmp.lt.s32.totalorder %s27, 1
      %s468 = scalar_select %p467, %s27, 1
      %s469 = smul.addr %s468, 8
      %s470 = scalar_lea.vmem %s0, %s469
      %p471 = pneg %p48
      %p472 = pneg %p45
      %p473 = pneg %p69
      %p474 = pneg %p66
      %p475 = pneg %p90
      %p476 = pneg %p87
      %p477 = pneg %p111
      %p478 = pneg %p108
      %p479 = pneg %p132
      %p480 = pneg %p129
      %p481 = pneg %p153
      %p482 = pneg %p150
      %p483 = pneg %p174
      %p484 = pneg %p171
      %p485 = pneg %p195
      %p486 = pneg %p192
      %p487 = pneg %p216
      %p488 = pneg %p213
      %p489 = pneg %p237
      %p490 = pneg %p234
      %p491 = pneg %p258
      %p492 = pneg %p255
      %p493 = pneg %p279
      %p494 = pneg %p276
      %p495 = pneg %p300
      %p496 = pneg %p297
      %p497 = pneg %p321
      %p498 = pneg %p318
      %p499 = pneg %p342
      %p500 = pneg %p339
      %p501 = pneg %p363
      %p502 = pneg %p360
      %p503 = pneg %p389
      %p504 = pneg %p386
      %p505 = scmp.lt.s32.totalorder %s27, 1
      %s506 = scalar_select %p505, %s27, 1
      %s507 = smul.addr %s506, 8
      %s508 = scalar_lea.vmem %s16, %s507
      %p509 = scmp.lt.s32.totalorder %s27, 1
      %s510 = scalar_select %p509, %s27, 1
      %s511 = smul.addr %s510, 8
      %s512 = scalar_lea.vmem %s0, %s511
      %p513 = scmp.lt.s32.totalorder %s27, 1
      %s514 = scalar_select %p513, %s27, 1
      %s515 = smul.addr %s514, 8
      %s516 = scalar_lea.vmem %s16, %s515
      %v517 = vld [vmem:[%s512] sm:$0xff]
      %v518 = vld [vmem:[%s1] sm:$0xf]
      %v519 = vld [vmem:[%s2] sm:$0x1]
      %v521 = vperm.slane %v519, 0
      %vm523 = vcmask 31744
      %v525 = vsel %vm523, %v517, 0
      %vm527 = vcmask 1043456
      %v529 = vsel %vm527, %v518, 0
      %531 = vmatpush.msra.mxu0 0.0
      %532 = vmatpush.msra.mxu0 0.0
      %533 = vmatpush.msra.mxu0 0.0
      %534 = vmatpush.msra.mxu0 0.0
      %535 = vmatpush.msra.mxu0 0.0
      %536 = vmatpush.msra.mxu0 0.0
      %537 = vmatpush.msra.mxu0 0.0
      %538 = vmatpush.msra.mxu0 0.0
      %539 = vmatpush.msra.mxu0 0.0
      %540 = vmatpush.msra.mxu0 0.0
      %541 = vmatpush.msra.mxu0 0.0
      %542 = vmatpush.msra.mxu0 0.0
      %543 = vmatpush.msra.mxu0 0.0
      %544 = vmatpush.msra.mxu0 0.0
      %545 = vmatpush.msra.mxu0 0.0
      %546 = vmatpush.msra.mxu0 %v529
      %547 = vmatmul.f32.gmra.mxu0 %v525
      %v548 = vpop.f32.mrf.mxu0
      %v549 = vadd.f32 %v521, %v548
      %550 = vdwg.mxu0
      %v551 = vld [vmem:[%s3] sm:$0xff]
      %v552 = vadd.f32 %v549, %v551
      %v553 = vld [vmem:[%s4] sm:$0xff]
      %v554 = vld [vmem:[%s4 + $0x8] sm:$0xff]
      %v555 = vld [vmem:[%s4 + $0x10] sm:$0xff]
      %v556 = vld [vmem:[%s4 + $0x18] sm:$0xff]
      %v557 = vld [vmem:[%s5] sm:$0x1]
      %v559 = vperm.slane %v557, 0
      %vm561 = vcmask 261120
      %v563 = vsel %vm561, %v552, 0
      %565 = vmatpush.msra.mxu0 0.0
      %566 = vmatpush.msra.mxu0 0.0
      %567 = vmatpush.msra.mxu0 0.0
      %568 = vmatpush.msra.mxu0 0.0
      %569 = vmatpush.msra.mxu0 0.0
      %570 = vmatpush.msra.mxu0 0.0
      %571 = vmatpush.msra.mxu0 0.0
      %572 = vmatpush.msra.mxu0 0.0
      %573 = vmatpush.msra.mxu0 0.0
      %574 = vmatpush.msra.mxu0 0.0
      %575 = vmatpush.msra.mxu0 0.0
      %576 = vmatpush.msra.mxu0 0.0
      %577 = vmatpush.msra.mxu0 %v556
      %578 = vmatpush.msra.mxu0 %v555
      %579 = vmatpush.msra.mxu0 %v554
      %580 = vmatpush.msra.mxu0 %v553
      %581 = vmatmul.f32.gmra.mxu0 %v563
      %v582 = vpop.f32.mrf.mxu0
      %v583 = vadd.f32 %v559, %v582
      %584 = vdwg.mxu0
      %v585 = vmul.f32 %v583, 0.35355338
      %587 = vrot.lane.b32.xlu0 %v583, 96
      %v588 = vpop.permute.xlu0 %587
      %vm589 = vcmask 64512
      %v591 = vsel %vm589, %v585, 0
      %v593 = vsel %vm589, %v588, 0
      %595 = vmatpush.xpose.msra.mxu0 0.0
      %596 = vmatpush.xpose.msra.mxu0 0.0
      %597 = vmatpush.xpose.msra.mxu0 0.0
      %598 = vmatpush.xpose.msra.mxu0 0.0
      %599 = vmatpush.xpose.msra.mxu0 0.0
      %600 = vmatpush.xpose.msra.mxu0 0.0
      %601 = vmatpush.xpose.msra.mxu0 0.0
      %602 = vmatpush.xpose.msra.mxu0 0.0
      %603 = vmatpush.xpose.msra.mxu0 0.0
      %604 = vmatpush.xpose.msra.mxu0 0.0
      %605 = vmatpush.xpose.msra.mxu0 0.0
      %606 = vmatpush.xpose.msra.mxu0 0.0
      %607 = vmatpush.xpose.msra.mxu0 0.0
      %608 = vmatpush.xpose.msra.mxu0 0.0
      %609 = vmatpush.xpose.msra.mxu0 0.0
      %610 = vmatpush.xpose.msra.mxu0 %v593
      %611 = vmatmul.f32.gmra.mxu0 %v591
      %v612 = vpop.f32.mrf.mxu0
      %v613 = vadd.f32 0.0, %v612
      %614 = vdwg.mxu0
      %v615 = vsel %vm589, %v613, -inf
      %616 = vmax.xlane.f32.xlu0 %v615
      %v617 = vpop.xlane.xlu0 %616
      %v618 = vsub.f32 %v613, %v617
      %v619 = vmul.f32 %v618, 1.442695
      %v620 = vpow.pop %v619
      %v621 = vsel %vm589, %v620, 0.0
      %622 = vadd.xlane.f32.xlu0 %v621
      %v623 = vpop.xlane.xlu0 %622
      %v624 = vrcp.pop %v623
      %v625 = vmul.f32 %v620, %v624
      %626 = vrot.lane.b32.xlu0 %v583, 64
      %v627 = vpop.permute.xlu0 %626
      %v630 = vsel %vm589, %v625, 0
      %632 = vmatpush.msra.mxu0 0.0
      %633 = vmatpush.msra.mxu0 0.0
      %634 = vmatpush.msra.mxu0 0.0
      %635 = vmatpush.msra.mxu0 0.0
      %636 = vmatpush.msra.mxu0 0.0
      %637 = vmatpush.msra.mxu0 0.0
      %638 = vmatpush.msra.mxu0 0.0
      %639 = vmatpush.msra.mxu0 0.0
      %640 = vmatpush.msra.mxu0 0.0
      %641 = vmatpush.msra.mxu0 0.0
      %642 = vmatpush.msra.mxu0 0.0
      %643 = vmatpush.msra.mxu0 0.0
      %644 = vmatpush.msra.mxu0 0.0
      %645 = vmatpush.msra.mxu0 0.0
      %646 = vmatpush.msra.mxu0 0.0
      %647 = vmatpush.msra.mxu0 %v627
      %648 = vmatmul.f32.gmra.mxu0 %v630
      %v649 = vpop.f32.mrf.mxu0
      %v650 = vadd.f32 0.0, %v649
      %651 = vdwg.mxu0
      %652 = vrot.lane.b32.xlu0 %v585, 120
      %v653 = vpop.permute.xlu0 %652
      %654 = vrot.lane.b32.xlu0 %v583, 88
      %v655 = vpop.permute.xlu0 %654
      %v656 = vsel %vm589, %v653, 0
      %v658 = vsel %vm589, %v655, 0
      %660 = vmatpush.xpose.msra.mxu0 0.0
      %661 = vmatpush.xpose.msra.mxu0 0.0
      %662 = vmatpush.xpose.msra.mxu0 0.0
      %663 = vmatpush.xpose.msra.mxu0 0.0
      %664 = vmatpush.xpose.msra.mxu0 0.0
      %665 = vmatpush.xpose.msra.mxu0 0.0
      %666 = vmatpush.xpose.msra.mxu0 0.0
      %667 = vmatpush.xpose.msra.mxu0 0.0
      %668 = vmatpush.xpose.msra.mxu0 0.0
      %669 = vmatpush.xpose.msra.mxu0 0.0
      %670 = vmatpush.xpose.msra.mxu0 0.0
      %671 = vmatpush.xpose.msra.mxu0 0.0
      %672 = vmatpush.xpose.msra.mxu0 0.0
      %673 = vmatpush.xpose.msra.mxu0 0.0
      %674 = vmatpush.xpose.msra.mxu0 0.0
      %675 = vmatpush.xpose.msra.mxu0 %v658
      %676 = vmatmul.f32.gmra.mxu0 %v656
      %v677 = vpop.f32.mrf.mxu0
      %v678 = vadd.f32 0.0, %v677
      %679 = vdwg.mxu0
      %v680 = vsel %vm589, %v678, -inf
      %681 = vmax.xlane.f32.xlu0 %v680
      %v682 = vpop.xlane.xlu0 %681
      %v683 = vsub.f32 %v678, %v682
      %v684 = vmul.f32 %v683, 1.442695
      %v685 = vpow.pop %v684
      %v686 = vsel %vm589, %v685, 0.0
      %687 = vadd.xlane.f32.xlu0 %v686
      %v688 = vpop.xlane.xlu0 %687
      %v689 = vrcp.pop %v688
      %v690 = vmul.f32 %v685, %v689
      %691 = vrot.lane.b32.xlu0 %v583, 56
      %v692 = vpop.permute.xlu0 %691
      %v695 = vsel %vm589, %v690, 0
      %697 = vmatpush.msra.mxu0 0.0
      %698 = vmatpush.msra.mxu0 0.0
      %699 = vmatpush.msra.mxu0 0.0
      %700 = vmatpush.msra.mxu0 0.0
      %701 = vmatpush.msra.mxu0 0.0
      %702 = vmatpush.msra.mxu0 0.0
      %703 = vmatpush.msra.mxu0 0.0
      %704 = vmatpush.msra.mxu0 0.0
      %705 = vmatpush.msra.mxu0 0.0
      %706 = vmatpush.msra.mxu0 0.0
      %707 = vmatpush.msra.mxu0 0.0
      %708 = vmatpush.msra.mxu0 0.0
      %709 = vmatpush.msra.mxu0 0.0
      %710 = vmatpush.msra.mxu0 0.0
      %711 = vmatpush.msra.mxu0 0.0
      %712 = vmatpush.msra.mxu0 %v692
      %713 = vmatmul.f32.gmra.mxu0 %v695
      %v714 = vpop.f32.mrf.mxu0
      %v715 = vadd.f32 0.0, %v714
      %716 = vdwg.mxu0
      %717 = vrot.lane.b32.xlu0 %v585, 112
      %v718 = vpop.permute.xlu0 %717
      %719 = vrot.lane.b32.xlu0 %v583, 80
      %v720 = vpop.permute.xlu0 %719
      %v721 = vsel %vm589, %v718, 0
      %v723 = vsel %vm589, %v720, 0
      %725 = vmatpush.xpose.msra.mxu0 0.0
      %726 = vmatpush.xpose.msra.mxu0 0.0
      %727 = vmatpush.xpose.msra.mxu0 0.0
      %728 = vmatpush.xpose.msra.mxu0 0.0
      %729 = vmatpush.xpose.msra.mxu0 0.0
      %730 = vmatpush.xpose.msra.mxu0 0.0
      %731 = vmatpush.xpose.msra.mxu0 0.0
      %732 = vmatpush.xpose.msra.mxu0 0.0
      %733 = vmatpush.xpose.msra.mxu0 0.0
      %734 = vmatpush.xpose.msra.mxu0 0.0
      %735 = vmatpush.xpose.msra.mxu0 0.0
      %736 = vmatpush.xpose.msra.mxu0 0.0
      %737 = vmatpush.xpose.msra.mxu0 0.0
      %738 = vmatpush.xpose.msra.mxu0 0.0
      %739 = vmatpush.xpose.msra.mxu0 0.0
      %740 = vmatpush.xpose.msra.mxu0 %v723
      %741 = vmatmul.f32.gmra.mxu0 %v721
      %v742 = vpop.f32.mrf.mxu0
      %v743 = vadd.f32 0.0, %v742
      %744 = vdwg.mxu0
      %v745 = vsel %vm589, %v743, -inf
      %746 = vmax.xlane.f32.xlu0 %v745
      %v747 = vpop.xlane.xlu0 %746
      %v748 = vsub.f32 %v743, %v747
      %v749 = vmul.f32 %v748, 1.442695
      %v750 = vpow.pop %v749
      %v751 = vsel %vm589, %v750, 0.0
      %752 = vadd.xlane.f32.xlu0 %v751
      %v753 = vpop.xlane.xlu0 %752
      %v754 = vrcp.pop %v753
      %v755 = vmul.f32 %v750, %v754
      %756 = vrot.lane.b32.xlu0 %v583, 48
      %v757 = vpop.permute.xlu0 %756
      %v760 = vsel %vm589, %v755, 0
      %762 = vmatpush.msra.mxu0 0.0
      %763 = vmatpush.msra.mxu0 0.0
      %764 = vmatpush.msra.mxu0 0.0
      %765 = vmatpush.msra.mxu0 0.0
      %766 = vmatpush.msra.mxu0 0.0
      %767 = vmatpush.msra.mxu0 0.0
      %768 = vmatpush.msra.mxu0 0.0
      %769 = vmatpush.msra.mxu0 0.0
      %770 = vmatpush.msra.mxu0 0.0
      %771 = vmatpush.msra.mxu0 0.0
      %772 = vmatpush.msra.mxu0 0.0
      %773 = vmatpush.msra.mxu0 0.0
      %774 = vmatpush.msra.mxu0 0.0
      %775 = vmatpush.msra.mxu0 0.0
      %776 = vmatpush.msra.mxu0 0.0
      %777 = vmatpush.msra.mxu0 %v757
      %778 = vmatmul.f32.gmra.mxu0 %v760
      %v779 = vpop.f32.mrf.mxu0
      %v780 = vadd.f32 0.0, %v779
      %781 = vdwg.mxu0
      %782 = vrot.lane.b32.xlu0 %v585, 104
      %v783 = vpop.permute.xlu0 %782
      %784 = vrot.lane.b32.xlu0 %v583, 72
      %v785 = vpop.permute.xlu0 %784
      %v786 = vsel %vm589, %v783, 0
      %v788 = vsel %vm589, %v785, 0
      %790 = vmatpush.xpose.msra.mxu0 0.0
      %791 = vmatpush.xpose.msra.mxu0 0.0
      %792 = vmatpush.xpose.msra.mxu0 0.0
      %793 = vmatpush.xpose.msra.mxu0 0.0
      %794 = vmatpush.xpose.msra.mxu0 0.0
      %795 = vmatpush.xpose.msra.mxu0 0.0
      %796 = vmatpush.xpose.msra.mxu0 0.0
      %797 = vmatpush.xpose.msra.mxu0 0.0
      %798 = vmatpush.xpose.msra.mxu0 0.0
      %799 = vmatpush.xpose.msra.mxu0 0.0
      %800 = vmatpush.xpose.msra.mxu0 0.0
      %801 = vmatpush.xpose.msra.mxu0 0.0
      %802 = vmatpush.xpose.msra.mxu0 0.0
      %803 = vmatpush.xpose.msra.mxu0 0.0
      %804 = vmatpush.xpose.msra.mxu0 0.0
      %805 = vmatpush.xpose.msra.mxu0 %v788
      %806 = vmatmul.f32.gmra.mxu0 %v786
      %v807 = vpop.f32.mrf.mxu0
      %v808 = vadd.f32 0.0, %v807
      %809 = vdwg.mxu0
      %v810 = vsel %vm589, %v808, -inf
      %811 = vmax.xlane.f32.xlu0 %v810
      %v812 = vpop.xlane.xlu0 %811
      %v813 = vsub.f32 %v808, %v812
      %v814 = vmul.f32 %v813, 1.442695
      %v815 = vpow.pop %v814
      %v816 = vsel %vm589, %v815, 0.0
      %817 = vadd.xlane.f32.xlu0 %v816
      %v818 = vpop.xlane.xlu0 %817
      %v819 = vrcp.pop %v818
      %v820 = vmul.f32 %v815, %v819
      %821 = vrot.lane.b32.xlu0 %v583, 40
      %v822 = vpop.permute.xlu0 %821
      %v825 = vsel %vm589, %v820, 0
      %827 = vmatpush.msra.mxu0 0.0
      %828 = vmatpush.msra.mxu0 0.0
      %829 = vmatpush.msra.mxu0 0.0
      %830 = vmatpush.msra.mxu0 0.0
      %831 = vmatpush.msra.mxu0 0.0
      %832 = vmatpush.msra.mxu0 0.0
      %833 = vmatpush.msra.mxu0 0.0
      %834 = vmatpush.msra.mxu0 0.0
      %835 = vmatpush.msra.mxu0 0.0
      %836 = vmatpush.msra.mxu0 0.0
      %837 = vmatpush.msra.mxu0 0.0
      %838 = vmatpush.msra.mxu0 0.0
      %839 = vmatpush.msra.mxu0 0.0
      %840 = vmatpush.msra.mxu0 0.0
      %841 = vmatpush.msra.mxu0 0.0
      %842 = vmatpush.msra.mxu0 %v822
      %843 = vmatmul.f32.gmra.mxu0 %v825
      %v844 = vpop.f32.mrf.mxu0
      %v845 = vadd.f32 0.0, %v844
      %846 = vdwg.mxu0
      %848 = vrot.lane.b32.xlu0 %v715, 8
      %v849 = vpop.permute.xlu0 %848
      %852 = vrot.lane.b32.xlu0 %v780, 16
      %v853 = vpop.permute.xlu0 %852
      %856 = vrot.lane.b32.xlu0 %v845, 24
      %v857 = vpop.permute.xlu0 %856
      %v859 = vsel %vm589, %v650, %v849
      %vm860 = vcmask 130048
      %v861 = vsel %vm860, %v859, %v853
      %vm862 = vcmask 195584
      %v863 = vsel %vm862, %v861, %v857
      %v864 = vld [vmem:[%s6] sm:$0xff]
      %v865 = vld [vmem:[%s6 + $0x8] sm:$0xff]
      %v866 = vld [vmem:[%s6 + $0x10] sm:$0xff]
      %v867 = vld [vmem:[%s6 + $0x18] sm:$0xff]
      %v868 = vld [vmem:[%s7] sm:$0x1]
      %v870 = vperm.slane %v868, 0
      %v873 = vsel %vm561, %v863, 0
      %875 = vmatpush.msra.mxu0 0.0
      %876 = vmatpush.msra.mxu0 0.0
      %877 = vmatpush.msra.mxu0 0.0
      %878 = vmatpush.msra.mxu0 0.0
      %879 = vmatpush.msra.mxu0 0.0
      %880 = vmatpush.msra.mxu0 0.0
      %881 = vmatpush.msra.mxu0 0.0
      %882 = vmatpush.msra.mxu0 0.0
      %883 = vmatpush.msra.mxu0 0.0
      %884 = vmatpush.msra.mxu0 0.0
      %885 = vmatpush.msra.mxu0 0.0
      %886 = vmatpush.msra.mxu0 0.0
      %887 = vmatpush.msra.mxu0 %v867
      %888 = vmatpush.msra.mxu0 %v866
      %889 = vmatpush.msra.mxu0 %v865
      %890 = vmatpush.msra.mxu0 %v864
      %891 = vmatmul.f32.gmra.mxu0 %v873
      %v892 = vpop.f32.mrf.mxu0
      %v893 = vadd.f32 %v870, %v892
      %894 = vdwg.mxu0
      %v895 = vadd.f32 %v552, %v893
      %v896 = vld [vmem:[%s8] sm:$0x1]
      %v897 = vld [vmem:[%s9] sm:$0x1]
      %v898 = vsel %vm561, %v895, 0.0
      %899 = vadd.xlane.f32.xlu0 %v898
      %v900 = vpop.xlane.xlu0 %899
      %v901 = vrcp.pop 32.0
      %v902 = vmul.f32 32.0, %v901
      %v903 = vsub.f32 1.0, %v902
      %v904 = vmul.f32 %v901, %v903
      %v905 = vadd.f32 %v901, %v904
      %vm906 = vweird.f32 %v901
      %v907 = vsel %vm906, %v901, %v905
      %v908 = vmul.f32 %v900, %v907
      %v909 = vsub.f32 %v895, %v908
      %v910 = vmul.f32 %v909, %v909
      %v911 = vsel %vm561, %v910, 0.0
      %912 = vadd.xlane.f32.xlu0 %v911
      %v913 = vpop.xlane.xlu0 %912
      %v914 = vmul.f32 %v913, %v907
      %v915 = vadd.f32 %v914, 1e-05
      %v916 = vrsqrt.pop %v915
      %v917 = vmul.f32 %v916, %v915
      %v918 = vmul.f32 %v917, %v916
      %v919 = vmul.f32 0.5, %v918
      %v920 = vsub.f32 1.5, %v919
      %v921 = vmul.f32 %v916, %v920
      %vm922 = vweird.f32 %v915
      %vm923 = vweird.f32 %v916
      %vm924 = vmor %vm922, %vm923
      %v925 = vsel %vm924, %v916, %v921
      %v926 = vmul.f32 %v909, %v925
      %v928 = vperm.slane %v896, 0
      %v930 = vmul.f32 %v926, %v928
      %v932 = vperm.slane %v897, 0
      %v934 = vadd.f32 %v930, %v932
      %v935 = vld [vmem:[%s10] sm:$0xff]
      %v936 = vld [vmem:[%s10 + $0x8] sm:$0xff]
      %v937 = vld [vmem:[%s10 + $0x10] sm:$0xff]
      %v938 = vld [vmem:[%s10 + $0x18] sm:$0xff]
      %v939 = vld [vmem:[%s10 + $0x20] sm:$0xff]
      %v940 = vld [vmem:[%s10 + $0x28] sm:$0xff]
      %v941 = vld [vmem:[%s10 + $0x30] sm:$0xff]
      %v942 = vld [vmem:[%s10 + $0x38] sm:$0xff]
      %v943 = vld [vmem:[%s10 + $0x40] sm:$0xff]
      %v944 = vld [vmem:[%s10 + $0x48] sm:$0xff]
      %v945 = vld [vmem:[%s10 + $0x50] sm:$0xff]
      %v946 = vld [vmem:[%s10 + $0x58] sm:$0xff]
      %v947 = vld [vmem:[%s10 + $0x60] sm:$0xff]
      %v948 = vld [vmem:[%s10 + $0x68] sm:$0xff]
      %v949 = vld [vmem:[%s10 + $0x70] sm:$0xff]
      %v950 = vld [vmem:[%s10 + $0x78] sm:$0xff]
      %v951 = vld [vmem:[%s10 + $0x80] sm:$0xff]
      %v952 = vld [vmem:[%s10 + $0x88] sm:$0xff]
      %v953 = vld [vmem:[%s10 + $0x90] sm:$0xff]
      %v954 = vld [vmem:[%s10 + $0x98] sm:$0xff]
      %v955 = vld [vmem:[%s10 + $0xa0] sm:$0xff]
      %v956 = vld [vmem:[%s10 + $0xa8] sm:$0xff]
      %v957 = vld [vmem:[%s10 + $0xb0] sm:$0xff]
      %v958 = vld [vmem:[%s10 + $0xb8] sm:$0xff]
      %v959 = vld [vmem:[%s10 + $0xc0] sm:$0xff]
      %v960 = vld [vmem:[%s10 + $0xc8] sm:$0xff]
      %v961 = vld [vmem:[%s10 + $0xd0] sm:$0xff]
      %v962 = vld [vmem:[%s10 + $0xd8] sm:$0xff]
      %v963 = vld [vmem:[%s10 + $0xe0] sm:$0xff]
      %v964 = vld [vmem:[%s10 + $0xe8] sm:$0xff]
      %v965 = vld [vmem:[%s10 + $0xf0] sm:$0xff]
      %v966 = vld [vmem:[%s10 + $0xf8] sm:$0xff]
      %v967 = vld [vmem:[%s10 + $0x100] sm:$0xff]
      %v968 = vld [vmem:[%s10 + $0x108] sm:$0xff]
      %v969 = vld [vmem:[%s10 + $0x110] sm:$0xff]
      %v970 = vld [vmem:[%s10 + $0x118] sm:$0xff]
      %v971 = vld [vmem:[%s10 + $0x120] sm:$0xff]
      %v972 = vld [vmem:[%s10 + $0x128] sm:$0xff]
      %v973 = vld [vmem:[%s10 + $0x130] sm:$0xff]
      %v974 = vld [vmem:[%s10 + $0x138] sm:$0xff]
      %v975 = vld [vmem:[%s10 + $0x140] sm:$0xff]
      %v976 = vld [vmem:[%s10 + $0x148] sm:$0xff]
      %v977 = vld [vmem:[%s10 + $0x150] sm:$0xff]
      %v978 = vld [vmem:[%s10 + $0x158] sm:$0xff]
      %v979 = vld [vmem:[%s10 + $0x160] sm:$0xff]
      %v980 = vld [vmem:[%s10 + $0x168] sm:$0xff]
      %v981 = vld [vmem:[%s10 + $0x170] sm:$0xff]
      %v982 = vld [vmem:[%s10 + $0x178] sm:$0xff]
      %v983 = vld [vmem:[%s10 + $0x180] sm:$0xff]
      %v984 = vld [vmem:[%s10 + $0x188] sm:$0xff]
      %v985 = vld [vmem:[%s10 + $0x190] sm:$0xff]
      %v986 = vld [vmem:[%s10 + $0x198] sm:$0xff]
      %v987 = vld [vmem:[%s10 + $0x1a0] sm:$0xff]
      %v988 = vld [vmem:[%s10 + $0x1a8] sm:$0xff]
      %v989 = vld [vmem:[%s10 + $0x1b0] sm:$0xff]
      %v990 = vld [vmem:[%s10 + $0x1b8] sm:$0xff]
      %v991 = vld [vmem:[%s10 + $0x1c0] sm:$0xff]
      %v992 = vld [vmem:[%s10 + $0x1c8] sm:$0xff]
      %v993 = vld [vmem:[%s10 + $0x1d0] sm:$0xff]
      %v994 = vld [vmem:[%s10 + $0x1d8] sm:$0xff]
      %v995 = vld [vmem:[%s10 + $0x1e0] sm:$0xff]
      %v996 = vld [vmem:[%s10 + $0x1e8] sm:$0xff]
      %v997 = vld [vmem:[%s10 + $0x1f0] sm:$0xff]
      %v998 = vld [vmem:[%s10 + $0x1f8] sm:$0xff]
      %v999 = vld [vmem:[%s11] sm:$0xff]
      %v1000 = vld [vmem:[%s11 + $0x8] sm:$0xff]
      %v1003 = vperm.slane %v999, 0
      %v1004 = vperm.slane %v999, 1
      %v1005 = vperm.slane %v999, 2
      %v1006 = vperm.slane %v999, 3
      %v1007 = vperm.slane %v999, 4
      %v1008 = vperm.slane %v999, 5
      %v1009 = vperm.slane %v999, 6
      %v1010 = vperm.slane %v999, 7
      %v1011 = vperm.slane %v1000, 0
      %v1012 = vperm.slane %v1000, 1
      %v1013 = vperm.slane %v1000, 2
      %v1014 = vperm.slane %v1000, 3
      %v1015 = vperm.slane %v1000, 4
      %v1016 = vperm.slane %v1000, 5
      %v1017 = vperm.slane %v1000, 6
      %v1018 = vperm.slane %v1000, 7
      %v1036 = vsel %vm561, %v934, 0
      %1038 = vmatpush.msra.mxu0 0.0
      %1039 = vmatpush.msra.mxu0 0.0
      %1040 = vmatpush.msra.mxu0 0.0
      %1041 = vmatpush.msra.mxu0 0.0
      %1042 = vmatpush.msra.mxu0 0.0
      %1043 = vmatpush.msra.mxu0 0.0
      %1044 = vmatpush.msra.mxu0 0.0
      %1045 = vmatpush.msra.mxu0 0.0
      %1046 = vmatpush.msra.mxu0 0.0
      %1047 = vmatpush.msra.mxu0 0.0
      %1048 = vmatpush.msra.mxu0 0.0
      %1049 = vmatpush.msra.mxu0 0.0
      %1050 = vmatpush.msra.mxu0 %v983
      %1051 = vmatpush.msra.mxu0 %v967
      %1052 = vmatpush.msra.mxu0 %v951
      %1053 = vmatpush.msra.mxu0 %v935
      %1054 = vmatmul.f32.gmra.mxu0 %v1036
      %v1055 = vpop.f32.mrf.mxu0
      %v1056 = vadd.f32 %v1003, %v1055
      %1057 = vdwg.mxu0
      %1058 = vmatpush.msra.mxu0 0.0
      %1059 = vmatpush.msra.mxu0 0.0
      %1060 = vmatpush.msra.mxu0 0.0
      %1061 = vmatpush.msra.mxu0 0.0
      %1062 = vmatpush.msra.mxu0 0.0
      %1063 = vmatpush.msra.mxu0 0.0
      %1064 = vmatpush.msra.mxu0 0.0
      %1065 = vmatpush.msra.mxu0 0.0
      %1066 = vmatpush.msra.mxu0 0.0
      %1067 = vmatpush.msra.mxu0 0.0
      %1068 = vmatpush.msra.mxu0 0.0
      %1069 = vmatpush.msra.mxu0 0.0
      %1070 = vmatpush.msra.mxu0 %v984
      %1071 = vmatpush.msra.mxu0 %v968
      %1072 = vmatpush.msra.mxu0 %v952
      %1073 = vmatpush.msra.mxu0 %v936
      %1074 = vmatmul.f32.gmra.mxu0 %v1036
      %v1075 = vpop.f32.mrf.mxu0
      %v1076 = vadd.f32 %v1004, %v1075
      %1077 = vdwg.mxu0
      %1078 = vmatpush.msra.mxu0 0.0
      %1079 = vmatpush.msra.mxu0 0.0
      %1080 = vmatpush.msra.mxu0 0.0
      %1081 = vmatpush.msra.mxu0 0.0
      %1082 = vmatpush.msra.mxu0 0.0
      %1083 = vmatpush.msra.mxu0 0.0
      %1084 = vmatpush.msra.mxu0 0.0
      %1085 = vmatpush.msra.mxu0 0.0
      %1086 = vmatpush.msra.mxu0 0.0
      %1087 = vmatpush.msra.mxu0 0.0
      %1088 = vmatpush.msra.mxu0 0.0
      %1089 = vmatpush.msra.mxu0 0.0
      %1090 = vmatpush.msra.mxu0 %v985
      %1091 = vmatpush.msra.mxu0 %v969
      %1092 = vmatpush.msra.mxu0 %v953
      %1093 = vmatpush.msra.mxu0 %v937
      %1094 = vmatmul.f32.gmra.mxu0 %v1036
      %v1095 = vpop.f32.mrf.mxu0
      %v1096 = vadd.f32 %v1005, %v1095
      %1097 = vdwg.mxu0
      %1098 = vmatpush.msra.mxu0 0.0
      %1099 = vmatpush.msra.mxu0 0.0
      %1100 = vmatpush.msra.mxu0 0.0
      %1101 = vmatpush.msra.mxu0 0.0
      %1102 = vmatpush.msra.mxu0 0.0
      %1103 = vmatpush.msra.mxu0 0.0
      %1104 = vmatpush.msra.mxu0 0.0
      %1105 = vmatpush.msra.mxu0 0.0
      %1106 = vmatpush.msra.mxu0 0.0
      %1107 = vmatpush.msra.mxu0 0.0
      %1108 = vmatpush.msra.mxu0 0.0
      %1109 = vmatpush.msra.mxu0 0.0
      %1110 = vmatpush.msra.mxu0 %v986
      %1111 = vmatpush.msra.mxu0 %v970
      %1112 = vmatpush.msra.mxu0 %v954
      %1113 = vmatpush.msra.mxu0 %v938
      %1114 = vmatmul.f32.gmra.mxu0 %v1036
      %v1115 = vpop.f32.mrf.mxu0
      %v1116 = vadd.f32 %v1006, %v1115
      %1117 = vdwg.mxu0
      %1118 = vmatpush.msra.mxu0 0.0
      %1119 = vmatpush.msra.mxu0 0.0
      %1120 = vmatpush.msra.mxu0 0.0
      %1121 = vmatpush.msra.mxu0 0.0
      %1122 = vmatpush.msra.mxu0 0.0
      %1123 = vmatpush.msra.mxu0 0.0
      %1124 = vmatpush.msra.mxu0 0.0
      %1125 = vmatpush.msra.mxu0 0.0
      %1126 = vmatpush.msra.mxu0 0.0
      %1127 = vmatpush.msra.mxu0 0.0
      %1128 = vmatpush.msra.mxu0 0.0
      %1129 = vmatpush.msra.mxu0 0.0
      %1130 = vmatpush.msra.mxu0 %v987
      %1131 = vmatpush.msra.mxu0 %v971
      %1132 = vmatpush.msra.mxu0 %v955
      %1133 = vmatpush.msra.mxu0 %v939
      %1134 = vmatmul.f32.gmra.mxu0 %v1036
      %v1135 = vpop.f32.mrf.mxu0
      %v1136 = vadd.f32 %v1007, %v1135
      %1137 = vdwg.mxu0
      %1138 = vmatpush.msra.mxu0 0.0
      %1139 = vmatpush.msra.mxu0 0.0
      %1140 = vmatpush.msra.mxu0 0.0
      %1141 = vmatpush.msra.mxu0 0.0
      %1142 = vmatpush.msra.mxu0 0.0
      %1143 = vmatpush.msra.mxu0 0.0
      %1144 = vmatpush.msra.mxu0 0.0
      %1145 = vmatpush.msra.mxu0 0.0
      %1146 = vmatpush.msra.mxu0 0.0
      %1147 = vmatpush.msra.mxu0 0.0
      %1148 = vmatpush.msra.mxu0 0.0
      %1149 = vmatpush.msra.mxu0 0.0
      %1150 = vmatpush.msra.mxu0 %v988
      %1151 = vmatpush.msra.mxu0 %v972
      %1152 = vmatpush.msra.mxu0 %v956
      %1153 = vmatpush.msra.mxu0 %v940
      %1154 = vmatmul.f32.gmra.mxu0 %v1036
      %v1155 = vpop.f32.mrf.mxu0
      %v1156 = vadd.f32 %v1008, %v1155
      %1157 = vdwg.mxu0
      %1158 = vmatpush.msra.mxu0 0.0
      %1159 = vmatpush.msra.mxu0 0.0
      %1160 = vmatpush.msra.mxu0 0.0
      %1161 = vmatpush.msra.mxu0 0.0
      %1162 = vmatpush.msra.mxu0 0.0
      %1163 = vmatpush.msra.mxu0 0.0
      %1164 = vmatpush.msra.mxu0 0.0
      %1165 = vmatpush.msra.mxu0 0.0
      %1166 = vmatpush.msra.mxu0 0.0
      %1167 = vmatpush.msra.mxu0 0.0
      %1168 = vmatpush.msra.mxu0 0.0
      %1169 = vmatpush.msra.mxu0 0.0
      %1170 = vmatpush.msra.mxu0 %v989
      %1171 = vmatpush.msra.mxu0 %v973
      %1172 = vmatpush.msra.mxu0 %v957
      %1173 = vmatpush.msra.mxu0 %v941
      %1174 = vmatmul.f32.gmra.mxu0 %v1036
      %v1175 = vpop.f32.mrf.mxu0
      %v1176 = vadd.f32 %v1009, %v1175
      %1177 = vdwg.mxu0
      %1178 = vmatpush.msra.mxu0 0.0
      %1179 = vmatpush.msra.mxu0 0.0
      %1180 = vmatpush.msra.mxu0 0.0
      %1181 = vmatpush.msra.mxu0 0.0
      %1182 = vmatpush.msra.mxu0 0.0
      %1183 = vmatpush.msra.mxu0 0.0
      %1184 = vmatpush.msra.mxu0 0.0
      %1185 = vmatpush.msra.mxu0 0.0
      %1186 = vmatpush.msra.mxu0 0.0
      %1187 = vmatpush.msra.mxu0 0.0
      %1188 = vmatpush.msra.mxu0 0.0
      %1189 = vmatpush.msra.mxu0 0.0
      %1190 = vmatpush.msra.mxu0 %v990
      %1191 = vmatpush.msra.mxu0 %v974
      %1192 = vmatpush.msra.mxu0 %v958
      %1193 = vmatpush.msra.mxu0 %v942
      %1194 = vmatmul.f32.gmra.mxu0 %v1036
      %v1195 = vpop.f32.mrf.mxu0
      %v1196 = vadd.f32 %v1010, %v1195
      %1197 = vdwg.mxu0
      %1198 = vmatpush.msra.mxu0 0.0
      %1199 = vmatpush.msra.mxu0 0.0
      %1200 = vmatpush.msra.mxu0 0.0
      %1201 = vmatpush.msra.mxu0 0.0
      %1202 = vmatpush.msra.mxu0 0.0
      %1203 = vmatpush.msra.mxu0 0.0
      %1204 = vmatpush.msra.mxu0 0.0
      %1205 = vmatpush.msra.mxu0 0.0
      %1206 = vmatpush.msra.mxu0 0.0
      %1207 = vmatpush.msra.mxu0 0.0
      %1208 = vmatpush.msra.mxu0 0.0
      %1209 = vmatpush.msra.mxu0 0.0
      %1210 = vmatpush.msra.mxu0 %v991
      %1211 = vmatpush.msra.mxu0 %v975
      %1212 = vmatpush.msra.mxu0 %v959
      %1213 = vmatpush.msra.mxu0 %v943
      %1214 = vmatmul.f32.gmra.mxu0 %v1036
      %v1215 = vpop.f32.mrf.mxu0
      %v1216 = vadd.f32 %v1011, %v1215
      %1217 = vdwg.mxu0
      %1218 = vmatpush.msra.mxu0 0.0
      %1219 = vmatpush.msra.mxu0 0.0
      %1220 = vmatpush.msra.mxu0 0.0
      %1221 = vmatpush.msra.mxu0 0.0
      %1222 = vmatpush.msra.mxu0 0.0
      %1223 = vmatpush.msra.mxu0 0.0
      %1224 = vmatpush.msra.mxu0 0.0
      %1225 = vmatpush.msra.mxu0 0.0
      %1226 = vmatpush.msra.mxu0 0.0
      %1227 = vmatpush.msra.mxu0 0.0
      %1228 = vmatpush.msra.mxu0 0.0
      %1229 = vmatpush.msra.mxu0 0.0
      %1230 = vmatpush.msra.mxu0 %v992
      %1231 = vmatpush.msra.mxu0 %v976
      %1232 = vmatpush.msra.mxu0 %v960
      %1233 = vmatpush.msra.mxu0 %v944
      %1234 = vmatmul.f32.gmra.mxu0 %v1036
      %v1235 = vpop.f32.mrf.mxu0
      %v1236 = vadd.f32 %v1012, %v1235
      %1237 = vdwg.mxu0
      %1238 = vmatpush.msra.mxu0 0.0
      %1239 = vmatpush.msra.mxu0 0.0
      %1240 = vmatpush.msra.mxu0 0.0
      %1241 = vmatpush.msra.mxu0 0.0
      %1242 = vmatpush.msra.mxu0 0.0
      %1243 = vmatpush.msra.mxu0 0.0
      %1244 = vmatpush.msra.mxu0 0.0
      %1245 = vmatpush.msra.mxu0 0.0
      %1246 = vmatpush.msra.mxu0 0.0
      %1247 = vmatpush.msra.mxu0 0.0
      %1248 = vmatpush.msra.mxu0 0.0
      %1249 = vmatpush.msra.mxu0 0.0
      %1250 = vmatpush.msra.mxu0 %v993
      %1251 = vmatpush.msra.mxu0 %v977
      %1252 = vmatpush.msra.mxu0 %v961
      %1253 = vmatpush.msra.mxu0 %v945
      %1254 = vmatmul.f32.gmra.mxu0 %v1036
      %v1255 = vpop.f32.mrf.mxu0
      %v1256 = vadd.f32 %v1013, %v1255
      %1257 = vdwg.mxu0
      %1258 = vmatpush.msra.mxu0 0.0
      %1259 = vmatpush.msra.mxu0 0.0
      %1260 = vmatpush.msra.mxu0 0.0
      %1261 = vmatpush.msra.mxu0 0.0
      %1262 = vmatpush.msra.mxu0 0.0
      %1263 = vmatpush.msra.mxu0 0.0
      %1264 = vmatpush.msra.mxu0 0.0
      %1265 = vmatpush.msra.mxu0 0.0
      %1266 = vmatpush.msra.mxu0 0.0
      %1267 = vmatpush.msra.mxu0 0.0
      %1268 = vmatpush.msra.mxu0 0.0
      %1269 = vmatpush.msra.mxu0 0.0
      %1270 = vmatpush.msra.mxu0 %v994
      %1271 = vmatpush.msra.mxu0 %v978
      %1272 = vmatpush.msra.mxu0 %v962
      %1273 = vmatpush.msra.mxu0 %v946
      %1274 = vmatmul.f32.gmra.mxu0 %v1036
      %v1275 = vpop.f32.mrf.mxu0
      %v1276 = vadd.f32 %v1014, %v1275
      %1277 = vdwg.mxu0
      %1278 = vmatpush.msra.mxu0 0.0
      %1279 = vmatpush.msra.mxu0 0.0
      %1280 = vmatpush.msra.mxu0 0.0
      %1281 = vmatpush.msra.mxu0 0.0
      %1282 = vmatpush.msra.mxu0 0.0
      %1283 = vmatpush.msra.mxu0 0.0
      %1284 = vmatpush.msra.mxu0 0.0
      %1285 = vmatpush.msra.mxu0 0.0
      %1286 = vmatpush.msra.mxu0 0.0
      %1287 = vmatpush.msra.mxu0 0.0
      %1288 = vmatpush.msra.mxu0 0.0
      %1289 = vmatpush.msra.mxu0 0.0
      %1290 = vmatpush.msra.mxu0 %v995
      %1291 = vmatpush.msra.mxu0 %v979
      %1292 = vmatpush.msra.mxu0 %v963
      %1293 = vmatpush.msra.mxu0 %v947
      %1294 = vmatmul.f32.gmra.mxu0 %v1036
      %v1295 = vpop.f32.mrf.mxu0
      %v1296 = vadd.f32 %v1015, %v1295
      %1297 = vdwg.mxu0
      %1298 = vmatpush.msra.mxu0 0.0
      %1299 = vmatpush.msra.mxu0 0.0
      %1300 = vmatpush.msra.mxu0 0.0
      %1301 = vmatpush.msra.mxu0 0.0
      %1302 = vmatpush.msra.mxu0 0.0
      %1303 = vmatpush.msra.mxu0 0.0
      %1304 = vmatpush.msra.mxu0 0.0
      %1305 = vmatpush.msra.mxu0 0.0
      %1306 = vmatpush.msra.mxu0 0.0
      %1307 = vmatpush.msra.mxu0 0.0
      %1308 = vmatpush.msra.mxu0 0.0
      %1309 = vmatpush.msra.mxu0 0.0
      %1310 = vmatpush.msra.mxu0 %v996
      %1311 = vmatpush.msra.mxu0 %v980
      %1312 = vmatpush.msra.mxu0 %v964
      %1313 = vmatpush.msra.mxu0 %v948
      %1314 = vmatmul.f32.gmra.mxu0 %v1036
      %v1315 = vpop.f32.mrf.mxu0
      %v1316 = vadd.f32 %v1016, %v1315
      %1317 = vdwg.mxu0
      %1318 = vmatpush.msra.mxu0 0.0
      %1319 = vmatpush.msra.mxu0 0.0
      %1320 = vmatpush.msra.mxu0 0.0
      %1321 = vmatpush.msra.mxu0 0.0
      %1322 = vmatpush.msra.mxu0 0.0
      %1323 = vmatpush.msra.mxu0 0.0
      %1324 = vmatpush.msra.mxu0 0.0
      %1325 = vmatpush.msra.mxu0 0.0
      %1326 = vmatpush.msra.mxu0 0.0
      %1327 = vmatpush.msra.mxu0 0.0
      %1328 = vmatpush.msra.mxu0 0.0
      %1329 = vmatpush.msra.mxu0 0.0
      %1330 = vmatpush.msra.mxu0 %v997
      %1331 = vmatpush.msra.mxu0 %v981
      %1332 = vmatpush.msra.mxu0 %v965
      %1333 = vmatpush.msra.mxu0 %v949
      %1334 = vmatmul.f32.gmra.mxu0 %v1036
      %v1335 = vpop.f32.mrf.mxu0
      %v1336 = vadd.f32 %v1017, %v1335
      %1337 = vdwg.mxu0
      %1338 = vmatpush.msra.mxu0 0.0
      %1339 = vmatpush.msra.mxu0 0.0
      %1340 = vmatpush.msra.mxu0 0.0
      %1341 = vmatpush.msra.mxu0 0.0
      %1342 = vmatpush.msra.mxu0 0.0
      %1343 = vmatpush.msra.mxu0 0.0
      %1344 = vmatpush.msra.mxu0 0.0
      %1345 = vmatpush.msra.mxu0 0.0
      %1346 = vmatpush.msra.mxu0 0.0
      %1347 = vmatpush.msra.mxu0 0.0
      %1348 = vmatpush.msra.mxu0 0.0
      %1349 = vmatpush.msra.mxu0 0.0
      %1350 = vmatpush.msra.mxu0 %v998
      %1351 = vmatpush.msra.mxu0 %v982
      %1352 = vmatpush.msra.mxu0 %v966
      %1353 = vmatpush.msra.mxu0 %v950
      %1354 = vmatmul.f32.gmra.mxu0 %v1036
      %v1355 = vpop.f32.mrf.mxu0
      %v1356 = vadd.f32 %v1018, %v1355
      %1357 = vdwg.mxu0
      %v1358 = vmax.f32 %v1056, 0.0
      %v1359 = vmax.f32 %v1076, 0.0
      %v1360 = vmax.f32 %v1096, 0.0
      %v1361 = vmax.f32 %v1116, 0.0
      %v1362 = vmax.f32 %v1136, 0.0
      %v1363 = vmax.f32 %v1156, 0.0
      %v1364 = vmax.f32 %v1176, 0.0
      %v1365 = vmax.f32 %v1196, 0.0
      %v1366 = vmax.f32 %v1216, 0.0
      %v1367 = vmax.f32 %v1236, 0.0
      %v1368 = vmax.f32 %v1256, 0.0
      %v1369 = vmax.f32 %v1276, 0.0
      %v1370 = vmax.f32 %v1296, 0.0
      %v1371 = vmax.f32 %v1316, 0.0
      %v1372 = vmax.f32 %v1336, 0.0
      %v1373 = vmax.f32 %v1356, 0.0
      %v1374 = vld [vmem:[%s12] sm:$0xff]
      %v1375 = vld [vmem:[%s12 + $0x8] sm:$0xff]
      %v1376 = vld [vmem:[%s12 + $0x10] sm:$0xff]
      %v1377 = vld [vmem:[%s12 + $0x18] sm:$0xff]
      %v1378 = vld [vmem:[%s12 + $0x20] sm:$0xff]
      %v1379 = vld [vmem:[%s12 + $0x28] sm:$0xff]
      %v1380 = vld [vmem:[%s12 + $0x30] sm:$0xff]
      %v1381 = vld [vmem:[%s12 + $0x38] sm:$0xff]
      %v1382 = vld [vmem:[%s12 + $0x40] sm:$0xff]
      %v1383 = vld [vmem:[%s12 + $0x48] sm:$0xff]
      %v1384 = vld [vmem:[%s12 + $0x50] sm:$0xff]
      %v1385 = vld [vmem:[%s12 + $0x58] sm:$0xff]
      %v1386 = vld [vmem:[%s12 + $0x60] sm:$0xff]
      %v1387 = vld [vmem:[%s12 + $0x68] sm:$0xff]
      %v1388 = vld [vmem:[%s12 + $0x70] sm:$0xff]
      %v1389 = vld [vmem:[%s12 + $0x78] sm:$0xff]
      %v1390 = vld [vmem:[%s12 + $0x80] sm:$0xff]
      %v1391 = vld [vmem:[%s12 + $0x88] sm:$0xff]
      %v1392 = vld [vmem:[%s12 + $0x90] sm:$0xff]
      %v1393 = vld [vmem:[%s12 + $0x98] sm:$0xff]
      %v1394 = vld [vmem:[%s12 + $0xa0] sm:$0xff]
      %v1395 = vld [vmem:[%s12 + $0xa8] sm:$0xff]
      %v1396 = vld [vmem:[%s12 + $0xb0] sm:$0xff]
      %v1397 = vld [vmem:[%s12 + $0xb8] sm:$0xff]
      %v1398 = vld [vmem:[%s12 + $0xc0] sm:$0xff]
      %v1399 = vld [vmem:[%s12 + $0xc8] sm:$0xff]
      %v1400 = vld [vmem:[%s12 + $0xd0] sm:$0xff]
      %v1401 = vld [vmem:[%s12 + $0xd8] sm:$0xff]
      %v1402 = vld [vmem:[%s12 + $0xe0] sm:$0xff]
      %v1403 = vld [vmem:[%s12 + $0xe8] sm:$0xff]
      %v1404 = vld [vmem:[%s12 + $0xf0] sm:$0xff]
      %v1405 = vld [vmem:[%s12 + $0xf8] sm:$0xff]
      %v1406 = vld [vmem:[%s12 + $0x100] sm:$0xff]
      %v1407 = vld [vmem:[%s12 + $0x108] sm:$0xff]
      %v1408 = vld [vmem:[%s12 + $0x110] sm:$0xff]
      %v1409 = vld [vmem:[%s12 + $0x118] sm:$0xff]
      %v1410 = vld [vmem:[%s12 + $0x120] sm:$0xff]
      %v1411 = vld [vmem:[%s12 + $0x128] sm:$0xff]
      %v1412 = vld [vmem:[%s12 + $0x130] sm:$0xff]
      %v1413 = vld [vmem:[%s12 + $0x138] sm:$0xff]
      %v1414 = vld [vmem:[%s12 + $0x140] sm:$0xff]
      %v1415 = vld [vmem:[%s12 + $0x148] sm:$0xff]
      %v1416 = vld [vmem:[%s12 + $0x150] sm:$0xff]
      %v1417 = vld [vmem:[%s12 + $0x158] sm:$0xff]
      %v1418 = vld [vmem:[%s12 + $0x160] sm:$0xff]
      %v1419 = vld [vmem:[%s12 + $0x168] sm:$0xff]
      %v1420 = vld [vmem:[%s12 + $0x170] sm:$0xff]
      %v1421 = vld [vmem:[%s12 + $0x178] sm:$0xff]
      %v1422 = vld [vmem:[%s12 + $0x180] sm:$0xff]
      %v1423 = vld [vmem:[%s12 + $0x188] sm:$0xff]
      %v1424 = vld [vmem:[%s12 + $0x190] sm:$0xff]
      %v1425 = vld [vmem:[%s12 + $0x198] sm:$0xff]
      %v1426 = vld [vmem:[%s12 + $0x1a0] sm:$0xff]
      %v1427 = vld [vmem:[%s12 + $0x1a8] sm:$0xff]
      %v1428 = vld [vmem:[%s12 + $0x1b0] sm:$0xff]
      %v1429 = vld [vmem:[%s12 + $0x1b8] sm:$0xff]
      %v1430 = vld [vmem:[%s12 + $0x1c0] sm:$0xff]
      %v1431 = vld [vmem:[%s12 + $0x1c8] sm:$0xff]
      %v1432 = vld [vmem:[%s12 + $0x1d0] sm:$0xff]
      %v1433 = vld [vmem:[%s12 + $0x1d8] sm:$0xff]
      %v1434 = vld [vmem:[%s12 + $0x1e0] sm:$0xff]
      %v1435 = vld [vmem:[%s12 + $0x1e8] sm:$0xff]
      %v1436 = vld [vmem:[%s12 + $0x1f0] sm:$0xff]
      %v1437 = vld [vmem:[%s12 + $0x1f8] sm:$0xff]
      %v1438 = vld [vmem:[%s12 + $0x200] sm:$0xff]
      %v1439 = vld [vmem:[%s12 + $0x208] sm:$0xff]
      %v1440 = vld [vmem:[%s12 + $0x210] sm:$0xff]
      %v1441 = vld [vmem:[%s12 + $0x218] sm:$0xff]
      %v1442 = vld [vmem:[%s12 + $0x220] sm:$0xff]
      %v1443 = vld [vmem:[%s12 + $0x228] sm:$0xff]
      %v1444 = vld [vmem:[%s12 + $0x230] sm:$0xff]
      %v1445 = vld [vmem:[%s12 + $0x238] sm:$0xff]
      %v1446 = vld [vmem:[%s12 + $0x240] sm:$0xff]
      %v1447 = vld [vmem:[%s12 + $0x248] sm:$0xff]
      %v1448 = vld [vmem:[%s12 + $0x250] sm:$0xff]
      %v1449 = vld [vmem:[%s12 + $0x258] sm:$0xff]
      %v1450 = vld [vmem:[%s12 + $0x260] sm:$0xff]
      %v1451 = vld [vmem:[%s12 + $0x268] sm:$0xff]
      %v1452 = vld [vmem:[%s12 + $0x270] sm:$0xff]
      %v1453 = vld [vmem:[%s12 + $0x278] sm:$0xff]
      %v1454 = vld [vmem:[%s12 + $0x280] sm:$0xff]
      %v1455 = vld [vmem:[%s12 + $0x288] sm:$0xff]
      %v1456 = vld [vmem:[%s12 + $0x290] sm:$0xff]
      %v1457 = vld [vmem:[%s12 + $0x298] sm:$0xff]
      %v1458 = vld [vmem:[%s12 + $0x2a0] sm:$0xff]
      %v1459 = vld [vmem:[%s12 + $0x2a8] sm:$0xff]
      %v1460 = vld [vmem:[%s12 + $0x2b0] sm:$0xff]
      %v1461 = vld [vmem:[%s12 + $0x2b8] sm:$0xff]
      %v1462 = vld [vmem:[%s12 + $0x2c0] sm:$0xff]
      %v1463 = vld [vmem:[%s12 + $0x2c8] sm:$0xff]
      %v1464 = vld [vmem:[%s12 + $0x2d0] sm:$0xff]
      %v1465 = vld [vmem:[%s12 + $0x2d8] sm:$0xff]
      %v1466 = vld [vmem:[%s12 + $0x2e0] sm:$0xff]
      %v1467 = vld [vmem:[%s12 + $0x2e8] sm:$0xff]
      %v1468 = vld [vmem:[%s12 + $0x2f0] sm:$0xff]
      %v1469 = vld [vmem:[%s12 + $0x2f8] sm:$0xff]
      %v1470 = vld [vmem:[%s12 + $0x300] sm:$0xff]
      %v1471 = vld [vmem:[%s12 + $0x308] sm:$0xff]
      %v1472 = vld [vmem:[%s12 + $0x310] sm:$0xff]
      %v1473 = vld [vmem:[%s12 + $0x318] sm:$0xff]
      %v1474 = vld [vmem:[%s12 + $0x320] sm:$0xff]
      %v1475 = vld [vmem:[%s12 + $0x328] sm:$0xff]
      %v1476 = vld [vmem:[%s12 + $0x330] sm:$0xff]
      %v1477 = vld [vmem:[%s12 + $0x338] sm:$0xff]
      %v1478 = vld [vmem:[%s12 + $0x340] sm:$0xff]
      %v1479 = vld [vmem:[%s12 + $0x348] sm:$0xff]
      %v1480 = vld [vmem:[%s12 + $0x350] sm:$0xff]
      %v1481 = vld [vmem:[%s12 + $0x358] sm:$0xff]
      %v1482 = vld [vmem:[%s12 + $0x360] sm:$0xff]
      %v1483 = vld [vmem:[%s12 + $0x368] sm:$0xff]
      %v1484 = vld [vmem:[%s12 + $0x370] sm:$0xff]
      %v1485 = vld [vmem:[%s12 + $0x378] sm:$0xff]
      %v1486 = vld [vmem:[%s12 + $0x380] sm:$0xff]
      %v1487 = vld [vmem:[%s12 + $0x388] sm:$0xff]
      %v1488 = vld [vmem:[%s12 + $0x390] sm:$0xff]
      %v1489 = vld [vmem:[%s12 + $0x398] sm:$0xff]
      %v1490 = vld [vmem:[%s12 + $0x3a0] sm:$0xff]
      %v1491 = vld [vmem:[%s12 + $0x3a8] sm:$0xff]
      %v1492 = vld [vmem:[%s12 + $0x3b0] sm:$0xff]
      %v1493 = vld [vmem:[%s12 + $0x3b8] sm:$0xff]
      %v1494 = vld [vmem:[%s12 + $0x3c0] sm:$0xff]
      %v1495 = vld [vmem:[%s12 + $0x3c8] sm:$0xff]
      %v1496 = vld [vmem:[%s12 + $0x3d0] sm:$0xff]
      %v1497 = vld [vmem:[%s12 + $0x3d8] sm:$0xff]
      %v1498 = vld [vmem:[%s12 + $0x3e0] sm:$0xff]
      %v1499 = vld [vmem:[%s12 + $0x3e8] sm:$0xff]
      %v1500 = vld [vmem:[%s12 + $0x3f0] sm:$0xff]
      %v1501 = vld [vmem:[%s12 + $0x3f8] sm:$0xff]
      %v1502 = vld [vmem:[%s12 + $0x400] sm:$0xff]
      %v1503 = vld [vmem:[%s12 + $0x408] sm:$0xff]
      %v1504 = vld [vmem:[%s12 + $0x410] sm:$0xff]
      %v1505 = vld [vmem:[%s12 + $0x418] sm:$0xff]
      %v1506 = vld [vmem:[%s12 + $0x420] sm:$0xff]
      %v1507 = vld [vmem:[%s12 + $0x428] sm:$0xff]
      %v1508 = vld [vmem:[%s12 + $0x430] sm:$0xff]
      %v1509 = vld [vmem:[%s12 + $0x438] sm:$0xff]
      %v1510 = vld [vmem:[%s12 + $0x440] sm:$0xff]
      %v1511 = vld [vmem:[%s12 + $0x448] sm:$0xff]
      %v1512 = vld [vmem:[%s12 + $0x450] sm:$0xff]
      %v1513 = vld [vmem:[%s12 + $0x458] sm:$0xff]
      %v1514 = vld [vmem:[%s12 + $0x460] sm:$0xff]
      %v1515 = vld [vmem:[%s12 + $0x468] sm:$0xff]
      %v1516 = vld [vmem:[%s12 + $0x470] sm:$0xff]
      %v1517 = vld [vmem:[%s12 + $0x478] sm:$0xff]
      %v1518 = vld [vmem:[%s12 + $0x480] sm:$0xff]
      %v1519 = vld [vmem:[%s12 + $0x488] sm:$0xff]
      %v1520 = vld [vmem:[%s12 + $0x490] sm:$0xff]
      %v1521 = vld [vmem:[%s12 + $0x498] sm:$0xff]
      %v1522 = vld [vmem:[%s12 + $0x4a0] sm:$0xff]
      %v1523 = vld [vmem:[%s12 + $0x4a8] sm:$0xff]
      %v1524 = vld [vmem:[%s12 + $0x4b0] sm:$0xff]
      %v1525 = vld [vmem:[%s12 + $0x4b8] sm:$0xff]
      %v1526 = vld [vmem:[%s12 + $0x4c0] sm:$0xff]
      %v1527 = vld [vmem:[%s12 + $0x4c8] sm:$0xff]
      %v1528 = vld [vmem:[%s12 + $0x4d0] sm:$0xff]
      %v1529 = vld [vmem:[%s12 + $0x4d8] sm:$0xff]
      %v1530 = vld [vmem:[%s12 + $0x4e0] sm:$0xff]
      %v1531 = vld [vmem:[%s12 + $0x4e8] sm:$0xff]
      %v1532 = vld [vmem:[%s12 + $0x4f0] sm:$0xff]
      %v1533 = vld [vmem:[%s12 + $0x4f8] sm:$0xff]
      %v1534 = vld [vmem:[%s12 + $0x500] sm:$0xff]
      %v1535 = vld [vmem:[%s12 + $0x508] sm:$0xff]
      %v1536 = vld [vmem:[%s12 + $0x510] sm:$0xff]
      %v1537 = vld [vmem:[%s12 + $0x518] sm:$0xff]
      %v1538 = vld [vmem:[%s12 + $0x520] sm:$0xff]
      %v1539 = vld [vmem:[%s12 + $0x528] sm:$0xff]
      %v1540 = vld [vmem:[%s12 + $0x530] sm:$0xff]
      %v1541 = vld [vmem:[%s12 + $0x538] sm:$0xff]
      %v1542 = vld [vmem:[%s12 + $0x540] sm:$0xff]
      %v1543 = vld [vmem:[%s12 + $0x548] sm:$0xff]
      %v1544 = vld [vmem:[%s12 + $0x550] sm:$0xff]
      %v1545 = vld [vmem:[%s12 + $0x558] sm:$0xff]
      %v1546 = vld [vmem:[%s12 + $0x560] sm:$0xff]
      %v1547 = vld [vmem:[%s12 + $0x568] sm:$0xff]
      %v1548 = vld [vmem:[%s12 + $0x570] sm:$0xff]
      %v1549 = vld [vmem:[%s12 + $0x578] sm:$0xff]
      %v1550 = vld [vmem:[%s12 + $0x580] sm:$0xff]
      %v1551 = vld [vmem:[%s12 + $0x588] sm:$0xff]
      %v1552 = vld [vmem:[%s12 + $0x590] sm:$0xff]
      %v1553 = vld [vmem:[%s12 + $0x598] sm:$0xff]
      %v1554 = vld [vmem:[%s12 + $0x5a0] sm:$0xff]
      %v1555 = vld [vmem:[%s12 + $0x5a8] sm:$0xff]
      %v1556 = vld [vmem:[%s12 + $0x5b0] sm:$0xff]
      %v1557 = vld [vmem:[%s12 + $0x5b8] sm:$0xff]
      %v1558 = vld [vmem:[%s12 + $0x5c0] sm:$0xff]
      %v1559 = vld [vmem:[%s12 + $0x5c8] sm:$0xff]
      %v1560 = vld [vmem:[%s12 + $0x5d0] sm:$0xff]
      %v1561 = vld [vmem:[%s12 + $0x5d8] sm:$0xff]
      %v1562 = vld [vmem:[%s12 + $0x5e0] sm:$0xff]
      %v1563 = vld [vmem:[%s12 + $0x5e8] sm:$0xff]
      %v1564 = vld [vmem:[%s12 + $0x5f0] sm:$0xff]
      %v1565 = vld [vmem:[%s12 + $0x5f8] sm:$0xff]
      %v1566 = vld [vmem:[%s12 + $0x600] sm:$0xff]
      %v1567 = vld [vmem:[%s12 + $0x608] sm:$0xff]
      %v1568 = vld [vmem:[%s12 + $0x610] sm:$0xff]
      %v1569 = vld [vmem:[%s12 + $0x618] sm:$0xff]
      %v1570 = vld [vmem:[%s12 + $0x620] sm:$0xff]
      %v1571 = vld [vmem:[%s12 + $0x628] sm:$0xff]
      %v1572 = vld [vmem:[%s12 + $0x630] sm:$0xff]
      %v1573 = vld [vmem:[%s12 + $0x638] sm:$0xff]
      %v1574 = vld [vmem:[%s12 + $0x640] sm:$0xff]
      %v1575 = vld [vmem:[%s12 + $0x648] sm:$0xff]
      %v1576 = vld [vmem:[%s12 + $0x650] sm:$0xff]
      %v1577 = vld [vmem:[%s12 + $0x658] sm:$0xff]
      %v1578 = vld [vmem:[%s12 + $0x660] sm:$0xff]
      %v1579 = vld [vmem:[%s12 + $0x668] sm:$0xff]
      %v1580 = vld [vmem:[%s12 + $0x670] sm:$0xff]
      %v1581 = vld [vmem:[%s12 + $0x678] sm:$0xff]
      %v1582 = vld [vmem:[%s12 + $0x680] sm:$0xff]
      %v1583 = vld [vmem:[%s12 + $0x688] sm:$0xff]
      %v1584 = vld [vmem:[%s12 + $0x690] sm:$0xff]
      %v1585 = vld [vmem:[%s12 + $0x698] sm:$0xff]
      %v1586 = vld [vmem:[%s12 + $0x6a0] sm:$0xff]
      %v1587 = vld [vmem:[%s12 + $0x6a8] sm:$0xff]
      %v1588 = vld [vmem:[%s12 + $0x6b0] sm:$0xff]
      %v1589 = vld [vmem:[%s12 + $0x6b8] sm:$0xff]
      %v1590 = vld [vmem:[%s12 + $0x6c0] sm:$0xff]
      %v1591 = vld [vmem:[%s12 + $0x6c8] sm:$0xff]
      %v1592 = vld [vmem:[%s12 + $0x6d0] sm:$0xff]
      %v1593 = vld [vmem:[%s12 + $0x6d8] sm:$0xff]
      %v1594 = vld [vmem:[%s12 + $0x6e0] sm:$0xff]
      %v1595 = vld [vmem:[%s12 + $0x6e8] sm:$0xff]
      %v1596 = vld [vmem:[%s12 + $0x6f0] sm:$0xff]
      %v1597 = vld [vmem:[%s12 + $0x6f8] sm:$0xff]
      %v1598 = vld [vmem:[%s12 + $0x700] sm:$0xff]
      %v1599 = vld [vmem:[%s12 + $0x708] sm:$0xff]
      %v1600 = vld [vmem:[%s12 + $0x710] sm:$0xff]
      %v1601 = vld [vmem:[%s12 + $0x718] sm:$0xff]
      %v1602 = vld [vmem:[%s12 + $0x720] sm:$0xff]
      %v1603 = vld [vmem:[%s12 + $0x728] sm:$0xff]
      %v1604 = vld [vmem:[%s12 + $0x730] sm:$0xff]
      %v1605 = vld [vmem:[%s12 + $0x738] sm:$0xff]
      %v1606 = vld [vmem:[%s12 + $0x740] sm:$0xff]
      %v1607 = vld [vmem:[%s12 + $0x748] sm:$0xff]
      %v1608 = vld [vmem:[%s12 + $0x750] sm:$0xff]
      %v1609 = vld [vmem:[%s12 + $0x758] sm:$0xff]
      %v1610 = vld [vmem:[%s12 + $0x760] sm:$0xff]
      %v1611 = vld [vmem:[%s12 + $0x768] sm:$0xff]
      %v1612 = vld [vmem:[%s12 + $0x770] sm:$0xff]
      %v1613 = vld [vmem:[%s12 + $0x778] sm:$0xff]
      %v1614 = vld [vmem:[%s12 + $0x780] sm:$0xff]
      %v1615 = vld [vmem:[%s12 + $0x788] sm:$0xff]
      %v1616 = vld [vmem:[%s12 + $0x790] sm:$0xff]
      %v1617 = vld [vmem:[%s12 + $0x798] sm:$0xff]
      %v1618 = vld [vmem:[%s12 + $0x7a0] sm:$0xff]
      %v1619 = vld [vmem:[%s12 + $0x7a8] sm:$0xff]
      %v1620 = vld [vmem:[%s12 + $0x7b0] sm:$0xff]
      %v1621 = vld [vmem:[%s12 + $0x7b8] sm:$0xff]
      %v1622 = vld [vmem:[%s12 + $0x7c0] sm:$0xff]
      %v1623 = vld [vmem:[%s12 + $0x7c8] sm:$0xff]
      %v1624 = vld [vmem:[%s12 + $0x7d0] sm:$0xff]
      %v1625 = vld [vmem:[%s12 + $0x7d8] sm:$0xff]
      %v1626 = vld [vmem:[%s12 + $0x7e0] sm:$0xff]
      %v1627 = vld [vmem:[%s12 + $0x7e8] sm:$0xff]
      %v1628 = vld [vmem:[%s12 + $0x7f0] sm:$0xff]
      %v1629 = vld [vmem:[%s12 + $0x7f8] sm:$0xff]
      %v1630 = vld [vmem:[%s13] sm:$0x1]
      %v1632 = vperm.slane %v1630, 0
      %1634 = vmatpush.msra.mxu0 %v1389
      %1635 = vmatpush.msra.mxu0 %v1388
      %1636 = vmatpush.msra.mxu0 %v1387
      %1637 = vmatpush.msra.mxu0 %v1386
      %1638 = vmatpush.msra.mxu0 %v1385
      %1639 = vmatpush.msra.mxu0 %v1384
      %1640 = vmatpush.msra.mxu0 %v1383
      %1641 = vmatpush.msra.mxu0 %v1382
      %1642 = vmatpush.msra.mxu0 %v1381
      %1643 = vmatpush.msra.mxu0 %v1380
      %1644 = vmatpush.msra.mxu0 %v1379
      %1645 = vmatpush.msra.mxu0 %v1378
      %1646 = vmatpush.msra.mxu0 %v1377
      %1647 = vmatpush.msra.mxu0 %v1376
      %1648 = vmatpush.msra.mxu0 %v1375
      %1649 = vmatpush.msra.mxu0 %v1374
      %1650 = vmatmul.f32.gmra.mxu0 %v1358
      %v1651 = vpop.f32.mrf.mxu0
      %v1652 = vadd.f32 %v1632, %v1651
      %1653 = vdwg.mxu0
      %1654 = vmatpush.msra.mxu0 %v1405
      %1655 = vmatpush.msra.mxu0 %v1404
      %1656 = vmatpush.msra.mxu0 %v1403
      %1657 = vmatpush.msra.mxu0 %v1402
      %1658 = vmatpush.msra.mxu0 %v1401
      %1659 = vmatpush.msra.mxu0 %v1400
      %1660 = vmatpush.msra.mxu0 %v1399
      %1661 = vmatpush.msra.mxu0 %v1398
      %1662 = vmatpush.msra.mxu0 %v1397
      %1663 = vmatpush.msra.mxu0 %v1396
      %1664 = vmatpush.msra.mxu0 %v1395
      %1665 = vmatpush.msra.mxu0 %v1394
      %1666 = vmatpush.msra.mxu0 %v1393
      %1667 = vmatpush.msra.mxu0 %v1392
      %1668 = vmatpush.msra.mxu0 %v1391
      %1669 = vmatpush.msra.mxu0 %v1390
      %1670 = vmatmul.f32.gmra.mxu0 %v1359
      %v1671 = vpop.f32.mrf.mxu0
      %v1672 = vadd.f32 %v1652, %v1671
      %1673 = vdwg.mxu0
      %1674 = vmatpush.msra.mxu0 %v1421
      %1675 = vmatpush.msra.mxu0 %v1420
      %1676 = vmatpush.msra.mxu0 %v1419
      %1677 = vmatpush.msra.mxu0 %v1418
      %1678 = vmatpush.msra.mxu0 %v1417
      %1679 = vmatpush.msra.mxu0 %v1416
      %1680 = vmatpush.msra.mxu0 %v1415
      %1681 = vmatpush.msra.mxu0 %v1414
      %1682 = vmatpush.msra.mxu0 %v1413
      %1683 = vmatpush.msra.mxu0 %v1412
      %1684 = vmatpush.msra.mxu0 %v1411
      %1685 = vmatpush.msra.mxu0 %v1410
      %1686 = vmatpush.msra.mxu0 %v1409
      %1687 = vmatpush.msra.mxu0 %v1408
      %1688 = vmatpush.msra.mxu0 %v1407
      %1689 = vmatpush.msra.mxu0 %v1406
      %1690 = vmatmul.f32.gmra.mxu0 %v1360
      %v1691 = vpop.f32.mrf.mxu0
      %v1692 = vadd.f32 %v1672, %v1691
      %1693 = vdwg.mxu0
      %1694 = vmatpush.msra.mxu0 %v1437
      %1695 = vmatpush.msra.mxu0 %v1436
      %1696 = vmatpush.msra.mxu0 %v1435
      %1697 = vmatpush.msra.mxu0 %v1434
      %1698 = vmatpush.msra.mxu0 %v1433
      %1699 = vmatpush.msra.mxu0 %v1432
      %1700 = vmatpush.msra.mxu0 %v1431
      %1701 = vmatpush.msra.mxu0 %v1430
      %1702 = vmatpush.msra.mxu0 %v1429
      %1703 = vmatpush.msra.mxu0 %v1428
      %1704 = vmatpush.msra.mxu0 %v1427
      %1705 = vmatpush.msra.mxu0 %v1426
      %1706 = vmatpush.msra.mxu0 %v1425
      %1707 = vmatpush.msra.mxu0 %v1424
      %1708 = vmatpush.msra.mxu0 %v1423
      %1709 = vmatpush.msra.mxu0 %v1422
      %1710 = vmatmul.f32.gmra.mxu0 %v1361
      %v1711 = vpop.f32.mrf.mxu0
      %v1712 = vadd.f32 %v1692, %v1711
      %1713 = vdwg.mxu0
      %1714 = vmatpush.msra.mxu0 %v1453
      %1715 = vmatpush.msra.mxu0 %v1452
      %1716 = vmatpush.msra.mxu0 %v1451
      %1717 = vmatpush.msra.mxu0 %v1450
      %1718 = vmatpush.msra.mxu0 %v1449
      %1719 = vmatpush.msra.mxu0 %v1448
      %1720 = vmatpush.msra.mxu0 %v1447
      %1721 = vmatpush.msra.mxu0 %v1446
      %1722 = vmatpush.msra.mxu0 %v1445
      %1723 = vmatpush.msra.mxu0 %v1444
      %1724 = vmatpush.msra.mxu0 %v1443
      %1725 = vmatpush.msra.mxu0 %v1442
      %1726 = vmatpush.msra.mxu0 %v1441
      %1727 = vmatpush.msra.mxu0 %v1440
      %1728 = vmatpush.msra.mxu0 %v1439
      %1729 = vmatpush.msra.mxu0 %v1438
      %1730 = vmatmul.f32.gmra.mxu0 %v1362
      %v1731 = vpop.f32.mrf.mxu0
      %v1732 = vadd.f32 %v1712, %v1731
      %1733 = vdwg.mxu0
      %1734 = vmatpush.msra.mxu0 %v1469
      %1735 = vmatpush.msra.mxu0 %v1468
      %1736 = vmatpush.msra.mxu0 %v1467
      %1737 = vmatpush.msra.mxu0 %v1466
      %1738 = vmatpush.msra.mxu0 %v1465
      %1739 = vmatpush.msra.mxu0 %v1464
      %1740 = vmatpush.msra.mxu0 %v1463
      %1741 = vmatpush.msra.mxu0 %v1462
      %1742 = vmatpush.msra.mxu0 %v1461
      %1743 = vmatpush.msra.mxu0 %v1460
      %1744 = vmatpush.msra.mxu0 %v1459
      %1745 = vmatpush.msra.mxu0 %v1458
      %1746 = vmatpush.msra.mxu0 %v1457
      %1747 = vmatpush.msra.mxu0 %v1456
      %1748 = vmatpush.msra.mxu0 %v1455
      %1749 = vmatpush.msra.mxu0 %v1454
      %1750 = vmatmul.f32.gmra.mxu0 %v1363
      %v1751 = vpop.f32.mrf.mxu0
      %v1752 = vadd.f32 %v1732, %v1751
      %1753 = vdwg.mxu0
      %1754 = vmatpush.msra.mxu0 %v1485
      %1755 = vmatpush.msra.mxu0 %v1484
      %1756 = vmatpush.msra.mxu0 %v1483
      %1757 = vmatpush.msra.mxu0 %v1482
      %1758 = vmatpush.msra.mxu0 %v1481
      %1759 = vmatpush.msra.mxu0 %v1480
      %1760 = vmatpush.msra.mxu0 %v1479
      %1761 = vmatpush.msra.mxu0 %v1478
      %1762 = vmatpush.msra.mxu0 %v1477
      %1763 = vmatpush.msra.mxu0 %v1476
      %1764 = vmatpush.msra.mxu0 %v1475
      %1765 = vmatpush.msra.mxu0 %v1474
      %1766 = vmatpush.msra.mxu0 %v1473
      %1767 = vmatpush.msra.mxu0 %v1472
      %1768 = vmatpush.msra.mxu0 %v1471
      %1769 = vmatpush.msra.mxu0 %v1470
      %1770 = vmatmul.f32.gmra.mxu0 %v1364
      %v1771 = vpop.f32.mrf.mxu0
      %v1772 = vadd.f32 %v1752, %v1771
      %1773 = vdwg.mxu0
      %1774 = vmatpush.msra.mxu0 %v1501
      %1775 = vmatpush.msra.mxu0 %v1500
      %1776 = vmatpush.msra.mxu0 %v1499
      %1777 = vmatpush.msra.mxu0 %v1498
      %1778 = vmatpush.msra.mxu0 %v1497
      %1779 = vmatpush.msra.mxu0 %v1496
      %1780 = vmatpush.msra.mxu0 %v1495
      %1781 = vmatpush.msra.mxu0 %v1494
      %1782 = vmatpush.msra.mxu0 %v1493
      %1783 = vmatpush.msra.mxu0 %v1492
      %1784 = vmatpush.msra.mxu0 %v1491
      %1785 = vmatpush.msra.mxu0 %v1490
      %1786 = vmatpush.msra.mxu0 %v1489
      %1787 = vmatpush.msra.mxu0 %v1488
      %1788 = vmatpush.msra.mxu0 %v1487
      %1789 = vmatpush.msra.mxu0 %v1486
      %1790 = vmatmul.f32.gmra.mxu0 %v1365
      %v1791 = vpop.f32.mrf.mxu0
      %v1792 = vadd.f32 %v1772, %v1791
      %1793 = vdwg.mxu0
      %1794 = vmatpush.msra.mxu0 %v1517
      %1795 = vmatpush.msra.mxu0 %v1516
      %1796 = vmatpush.msra.mxu0 %v1515
      %1797 = vmatpush.msra.mxu0 %v1514
      %1798 = vmatpush.msra.mxu0 %v1513
      %1799 = vmatpush.msra.mxu0 %v1512
      %1800 = vmatpush.msra.mxu0 %v1511
      %1801 = vmatpush.msra.mxu0 %v1510
      %1802 = vmatpush.msra.mxu0 %v1509
      %1803 = vmatpush.msra.mxu0 %v1508
      %1804 = vmatpush.msra.mxu0 %v1507
      %1805 = vmatpush.msra.mxu0 %v1506
      %1806 = vmatpush.msra.mxu0 %v1505
      %1807 = vmatpush.msra.mxu0 %v1504
      %1808 = vmatpush.msra.mxu0 %v1503
      %1809 = vmatpush.msra.mxu0 %v1502
      %1810 = vmatmul.f32.gmra.mxu0 %v1366
      %v1811 = vpop.f32.mrf.mxu0
      %v1812 = vadd.f32 %v1792, %v1811
      %1813 = vdwg.mxu0
      %1814 = vmatpush.msra.mxu0 %v1533
      %1815 = vmatpush.msra.mxu0 %v1532
      %1816 = vmatpush.msra.mxu0 %v1531
      %1817 = vmatpush.msra.mxu0 %v1530
      %1818 = vmatpush.msra.mxu0 %v1529
      %1819 = vmatpush.msra.mxu0 %v1528
      %1820 = vmatpush.msra.mxu0 %v1527
      %1821 = vmatpush.msra.mxu0 %v1526
      %1822 = vmatpush.msra.mxu0 %v1525
      %1823 = vmatpush.msra.mxu0 %v1524
      %1824 = vmatpush.msra.mxu0 %v1523
      %1825 = vmatpush.msra.mxu0 %v1522
      %1826 = vmatpush.msra.mxu0 %v1521
      %1827 = vmatpush.msra.mxu0 %v1520
      %1828 = vmatpush.msra.mxu0 %v1519
      %1829 = vmatpush.msra.mxu0 %v1518
      %1830 = vmatmul.f32.gmra.mxu0 %v1367
      %v1831 = vpop.f32.mrf.mxu0
      %v1832 = vadd.f32 %v1812, %v1831
      %1833 = vdwg.mxu0
      %1834 = vmatpush.msra.mxu0 %v1549
      %1835 = vmatpush.msra.mxu0 %v1548
      %1836 = vmatpush.msra.mxu0 %v1547
      %1837 = vmatpush.msra.mxu0 %v1546
      %1838 = vmatpush.msra.mxu0 %v1545
      %1839 = vmatpush.msra.mxu0 %v1544
      %1840 = vmatpush.msra.mxu0 %v1543
      %1841 = vmatpush.msra.mxu0 %v1542
      %1842 = vmatpush.msra.mxu0 %v1541
      %1843 = vmatpush.msra.mxu0 %v1540
      %1844 = vmatpush.msra.mxu0 %v1539
      %1845 = vmatpush.msra.mxu0 %v1538
      %1846 = vmatpush.msra.mxu0 %v1537
      %1847 = vmatpush.msra.mxu0 %v1536
      %1848 = vmatpush.msra.mxu0 %v1535
      %1849 = vmatpush.msra.mxu0 %v1534
      %1850 = vmatmul.f32.gmra.mxu0 %v1368
      %v1851 = vpop.f32.mrf.mxu0
      %v1852 = vadd.f32 %v1832, %v1851
      %1853 = vdwg.mxu0
      %1854 = vmatpush.msra.mxu0 %v1565
      %1855 = vmatpush.msra.mxu0 %v1564
      %1856 = vmatpush.msra.mxu0 %v1563
      %1857 = vmatpush.msra.mxu0 %v1562
      %1858 = vmatpush.msra.mxu0 %v1561
      %1859 = vmatpush.msra.mxu0 %v1560
      %1860 = vmatpush.msra.mxu0 %v1559
      %1861 = vmatpush.msra.mxu0 %v1558
      %1862 = vmatpush.msra.mxu0 %v1557
      %1863 = vmatpush.msra.mxu0 %v1556
      %1864 = vmatpush.msra.mxu0 %v1555
      %1865 = vmatpush.msra.mxu0 %v1554
      %1866 = vmatpush.msra.mxu0 %v1553
      %1867 = vmatpush.msra.mxu0 %v1552
      %1868 = vmatpush.msra.mxu0 %v1551
      %1869 = vmatpush.msra.mxu0 %v1550
      %1870 = vmatmul.f32.gmra.mxu0 %v1369
      %v1871 = vpop.f32.mrf.mxu0
      %v1872 = vadd.f32 %v1852, %v1871
      %1873 = vdwg.mxu0
      %1874 = vmatpush.msra.mxu0 %v1581
      %1875 = vmatpush.msra.mxu0 %v1580
      %1876 = vmatpush.msra.mxu0 %v1579
      %1877 = vmatpush.msra.mxu0 %v1578
      %1878 = vmatpush.msra.mxu0 %v1577
      %1879 = vmatpush.msra.mxu0 %v1576
      %1880 = vmatpush.msra.mxu0 %v1575
      %1881 = vmatpush.msra.mxu0 %v1574
      %1882 = vmatpush.msra.mxu0 %v1573
      %1883 = vmatpush.msra.mxu0 %v1572
      %1884 = vmatpush.msra.mxu0 %v1571
      %1885 = vmatpush.msra.mxu0 %v1570
      %1886 = vmatpush.msra.mxu0 %v1569
      %1887 = vmatpush.msra.mxu0 %v1568
      %1888 = vmatpush.msra.mxu0 %v1567
      %1889 = vmatpush.msra.mxu0 %v1566
      %1890 = vmatmul.f32.gmra.mxu0 %v1370
      %v1891 = vpop.f32.mrf.mxu0
      %v1892 = vadd.f32 %v1872, %v1891
      %1893 = vdwg.mxu0
      %1894 = vmatpush.msra.mxu0 %v1597
      %1895 = vmatpush.msra.mxu0 %v1596
      %1896 = vmatpush.msra.mxu0 %v1595
      %1897 = vmatpush.msra.mxu0 %v1594
      %1898 = vmatpush.msra.mxu0 %v1593
      %1899 = vmatpush.msra.mxu0 %v1592
      %1900 = vmatpush.msra.mxu0 %v1591
      %1901 = vmatpush.msra.mxu0 %v1590
      %1902 = vmatpush.msra.mxu0 %v1589
      %1903 = vmatpush.msra.mxu0 %v1588
      %1904 = vmatpush.msra.mxu0 %v1587
      %1905 = vmatpush.msra.mxu0 %v1586
      %1906 = vmatpush.msra.mxu0 %v1585
      %1907 = vmatpush.msra.mxu0 %v1584
      %1908 = vmatpush.msra.mxu0 %v1583
      %1909 = vmatpush.msra.mxu0 %v1582
      %1910 = vmatmul.f32.gmra.mxu0 %v1371
      %v1911 = vpop.f32.mrf.mxu0
      %v1912 = vadd.f32 %v1892, %v1911
      %1913 = vdwg.mxu0
      %1914 = vmatpush.msra.mxu0 %v1613
      %1915 = vmatpush.msra.mxu0 %v1612
      %1916 = vmatpush.msra.mxu0 %v1611
      %1917 = vmatpush.msra.mxu0 %v1610
      %1918 = vmatpush.msra.mxu0 %v1609
      %1919 = vmatpush.msra.mxu0 %v1608
      %1920 = vmatpush.msra.mxu0 %v1607
      %1921 = vmatpush.msra.mxu0 %v1606
      %1922 = vmatpush.msra.mxu0 %v1605
      %1923 = vmatpush.msra.mxu0 %v1604
      %1924 = vmatpush.msra.mxu0 %v1603
      %1925 = vmatpush.msra.mxu0 %v1602
      %1926 = vmatpush.msra.mxu0 %v1601
      %1927 = vmatpush.msra.mxu0 %v1600
      %1928 = vmatpush.msra.mxu0 %v1599
      %1929 = vmatpush.msra.mxu0 %v1598
      %1930 = vmatmul.f32.gmra.mxu0 %v1372
      %v1931 = vpop.f32.mrf.mxu0
      %v1932 = vadd.f32 %v1912, %v1931
      %1933 = vdwg.mxu0
      %1934 = vmatpush.msra.mxu0 %v1629
      %1935 = vmatpush.msra.mxu0 %v1628
      %1936 = vmatpush.msra.mxu0 %v1627
      %1937 = vmatpush.msra.mxu0 %v1626
      %1938 = vmatpush.msra.mxu0 %v1625
      %1939 = vmatpush.msra.mxu0 %v1624
      %1940 = vmatpush.msra.mxu0 %v1623
      %1941 = vmatpush.msra.mxu0 %v1622
      %1942 = vmatpush.msra.mxu0 %v1621
      %1943 = vmatpush.msra.mxu0 %v1620
      %1944 = vmatpush.msra.mxu0 %v1619
      %1945 = vmatpush.msra.mxu0 %v1618
      %1946 = vmatpush.msra.mxu0 %v1617
      %1947 = vmatpush.msra.mxu0 %v1616
      %1948 = vmatpush.msra.mxu0 %v1615
      %1949 = vmatpush.msra.mxu0 %v1614
      %1950 = vmatmul.f32.gmra.mxu0 %v1373
      %v1951 = vpop.f32.mrf.mxu0
      %v1952 = vadd.f32 %v1932, %v1951
      %1953 = vdwg.mxu0
      %v1954 = vadd.f32 %v934, %v1952
      %v1955 = vld [vmem:[%s14] sm:$0x1]
      %v1956 = vld [vmem:[%s15] sm:$0x1]
      %v1957 = vsel %vm561, %v1954, 0.0
      %1958 = vadd.xlane.f32.xlu0 %v1957
      %v1959 = vpop.xlane.xlu0 %1958
      %v1960 = vmul.f32 %v1959, %v907
      %v1961 = vsub.f32 %v1954, %v1960
      %v1962 = vmul.f32 %v1961, %v1961
      %v1963 = vsel %vm561, %v1962, 0.0
      %1964 = vadd.xlane.f32.xlu0 %v1963
      %v1965 = vpop.xlane.xlu0 %1964
      %v1966 = vmul.f32 %v1965, %v907
      %v1967 = vadd.f32 %v1966, 1e-05
      %v1968 = vrsqrt.pop %v1967
      %v1969 = vmul.f32 %v1968, %v1967
      %v1970 = vmul.f32 %v1969, %v1968
      %v1971 = vmul.f32 0.5, %v1970
      %v1972 = vsub.f32 1.5, %v1971
      %v1973 = vmul.f32 %v1968, %v1972
      %vm1974 = vweird.f32 %v1967
      %vm1975 = vweird.f32 %v1968
      %vm1976 = vmor %vm1974, %vm1975
      %v1977 = vsel %vm1976, %v1968, %v1973
      %v1978 = vmul.f32 %v1961, %v1977
      %v1980 = vperm.slane %v1955, 0
      %v1982 = vmul.f32 %v1978, %v1980
      %v1984 = vperm.slane %v1956, 0
      %v1986 = vadd.f32 %v1982, %v1984
      %s1987 = scalar_lea.vmem %s4, 32
      %v1988 = vld [vmem:[%s1987] sm:$0xff]
      %v1989 = vld [vmem:[%s1987 + $0x8] sm:$0xff]
      %v1990 = vld [vmem:[%s1987 + $0x10] sm:$0xff]
      %v1991 = vld [vmem:[%s1987 + $0x18] sm:$0xff]
      %s1992 = scalar_lea.vmem %s5, 1
      %v1993 = vld [vmem:[%s1992] sm:$0x1]
      %v1995 = vperm.slane %v1993, 0
      %v1998 = vsel %vm561, %v1986, 0
      %2000 = vmatpush.msra.mxu0 0.0
      %2001 = vmatpush.msra.mxu0 0.0
      %2002 = vmatpush.msra.mxu0 0.0
      %2003 = vmatpush.msra.mxu0 0.0
      %2004 = vmatpush.msra.mxu0 0.0
      %2005 = vmatpush.msra.mxu0 0.0
      %2006 = vmatpush.msra.mxu0 0.0
      %2007 = vmatpush.msra.mxu0 0.0
      %2008 = vmatpush.msra.mxu0 0.0
      %2009 = vmatpush.msra.mxu0 0.0
      %2010 = vmatpush.msra.mxu0 0.0
      %2011 = vmatpush.msra.mxu0 0.0
      %2012 = vmatpush.msra.mxu0 %v1991
      %2013 = vmatpush.msra.mxu0 %v1990
      %2014 = vmatpush.msra.mxu0 %v1989
      %2015 = vmatpush.msra.mxu0 %v1988
      %2016 = vmatmul.f32.gmra.mxu0 %v1998
      %v2017 = vpop.f32.mrf.mxu0
      %v2018 = vadd.f32 %v1995, %v2017
      %2019 = vdwg.mxu0
      %v2020 = vmul.f32 %v2018, 0.35355338
      %2022 = vrot.lane.b32.xlu0 %v2018, 96
      %v2023 = vpop.permute.xlu0 %2022
      %v2025 = vsel %vm589, %v2020, 0
      %v2027 = vsel %vm589, %v2023, 0
      %2029 = vmatpush.xpose.msra.mxu0 0.0
      %2030 = vmatpush.xpose.msra.mxu0 0.0
      %2031 = vmatpush.xpose.msra.mxu0 0.0
      %2032 = vmatpush.xpose.msra.mxu0 0.0
      %2033 = vmatpush.xpose.msra.mxu0 0.0
      %2034 = vmatpush.xpose.msra.mxu0 0.0
      %2035 = vmatpush.xpose.msra.mxu0 0.0
      %2036 = vmatpush.xpose.msra.mxu0 0.0
      %2037 = vmatpush.xpose.msra.mxu0 0.0
      %2038 = vmatpush.xpose.msra.mxu0 0.0
      %2039 = vmatpush.xpose.msra.mxu0 0.0
      %2040 = vmatpush.xpose.msra.mxu0 0.0
      %2041 = vmatpush.xpose.msra.mxu0 0.0
      %2042 = vmatpush.xpose.msra.mxu0 0.0
      %2043 = vmatpush.xpose.msra.mxu0 0.0
      %2044 = vmatpush.xpose.msra.mxu0 %v2027
      %2045 = vmatmul.f32.gmra.mxu0 %v2025
      %v2046 = vpop.f32.mrf.mxu0
      %v2047 = vadd.f32 0.0, %v2046
      %2048 = vdwg.mxu0
      %v2049 = vsel %vm589, %v2047, -inf
      %2050 = vmax.xlane.f32.xlu0 %v2049
      %v2051 = vpop.xlane.xlu0 %2050
      %v2052 = vsub.f32 %v2047, %v2051
      %v2053 = vmul.f32 %v2052, 1.442695
      %v2054 = vpow.pop %v2053
      %v2055 = vsel %vm589, %v2054, 0.0
      %2056 = vadd.xlane.f32.xlu0 %v2055
      %v2057 = vpop.xlane.xlu0 %2056
      %v2058 = vrcp.pop %v2057
      %v2059 = vmul.f32 %v2054, %v2058
      %2060 = vrot.lane.b32.xlu0 %v2018, 64
      %v2061 = vpop.permute.xlu0 %2060
      %v2064 = vsel %vm589, %v2059, 0
      %2066 = vmatpush.msra.mxu0 0.0
      %2067 = vmatpush.msra.mxu0 0.0
      %2068 = vmatpush.msra.mxu0 0.0
      %2069 = vmatpush.msra.mxu0 0.0
      %2070 = vmatpush.msra.mxu0 0.0
      %2071 = vmatpush.msra.mxu0 0.0
      %2072 = vmatpush.msra.mxu0 0.0
      %2073 = vmatpush.msra.mxu0 0.0
      %2074 = vmatpush.msra.mxu0 0.0
      %2075 = vmatpush.msra.mxu0 0.0
      %2076 = vmatpush.msra.mxu0 0.0
      %2077 = vmatpush.msra.mxu0 0.0
      %2078 = vmatpush.msra.mxu0 0.0
      %2079 = vmatpush.msra.mxu0 0.0
      %2080 = vmatpush.msra.mxu0 0.0
      %2081 = vmatpush.msra.mxu0 %v2061
      %2082 = vmatmul.f32.gmra.mxu0 %v2064
      %v2083 = vpop.f32.mrf.mxu0
      %v2084 = vadd.f32 0.0, %v2083
      %2085 = vdwg.mxu0
      %2086 = vrot.lane.b32.xlu0 %v2020, 120
      %v2087 = vpop.permute.xlu0 %2086
      %2088 = vrot.lane.b32.xlu0 %v2018, 88
      %v2089 = vpop.permute.xlu0 %2088
      %v2090 = vsel %vm589, %v2087, 0
      %v2092 = vsel %vm589, %v2089, 0
      %2094 = vmatpush.xpose.msra.mxu0 0.0
      %2095 = vmatpush.xpose.msra.mxu0 0.0
      %2096 = vmatpush.xpose.msra.mxu0 0.0
      %2097 = vmatpush.xpose.msra.mxu0 0.0
      %2098 = vmatpush.xpose.msra.mxu0 0.0
      %2099 = vmatpush.xpose.msra.mxu0 0.0
      %2100 = vmatpush.xpose.msra.mxu0 0.0
      %2101 = vmatpush.xpose.msra.mxu0 0.0
      %2102 = vmatpush.xpose.msra.mxu0 0.0
      %2103 = vmatpush.xpose.msra.mxu0 0.0
      %2104 = vmatpush.xpose.msra.mxu0 0.0
      %2105 = vmatpush.xpose.msra.mxu0 0.0
      %2106 = vmatpush.xpose.msra.mxu0 0.0
      %2107 = vmatpush.xpose.msra.mxu0 0.0
      %2108 = vmatpush.xpose.msra.mxu0 0.0
      %2109 = vmatpush.xpose.msra.mxu0 %v2092
      %2110 = vmatmul.f32.gmra.mxu0 %v2090
      %v2111 = vpop.f32.mrf.mxu0
      %v2112 = vadd.f32 0.0, %v2111
      %2113 = vdwg.mxu0
      %v2114 = vsel %vm589, %v2112, -inf
      %2115 = vmax.xlane.f32.xlu0 %v2114
      %v2116 = vpop.xlane.xlu0 %2115
      %v2117 = vsub.f32 %v2112, %v2116
      %v2118 = vmul.f32 %v2117, 1.442695
      %v2119 = vpow.pop %v2118
      %v2120 = vsel %vm589, %v2119, 0.0
      %2121 = vadd.xlane.f32.xlu0 %v2120
      %v2122 = vpop.xlane.xlu0 %2121
      %v2123 = vrcp.pop %v2122
      %v2124 = vmul.f32 %v2119, %v2123
      %2125 = vrot.lane.b32.xlu0 %v2018, 56
      %v2126 = vpop.permute.xlu0 %2125
      %v2129 = vsel %vm589, %v2124, 0
      %2131 = vmatpush.msra.mxu0 0.0
      %2132 = vmatpush.msra.mxu0 0.0
      %2133 = vmatpush.msra.mxu0 0.0
      %2134 = vmatpush.msra.mxu0 0.0
      %2135 = vmatpush.msra.mxu0 0.0
      %2136 = vmatpush.msra.mxu0 0.0
      %2137 = vmatpush.msra.mxu0 0.0
      %2138 = vmatpush.msra.mxu0 0.0
      %2139 = vmatpush.msra.mxu0 0.0
      %2140 = vmatpush.msra.mxu0 0.0
      %2141 = vmatpush.msra.mxu0 0.0
      %2142 = vmatpush.msra.mxu0 0.0
      %2143 = vmatpush.msra.mxu0 0.0
      %2144 = vmatpush.msra.mxu0 0.0
      %2145 = vmatpush.msra.mxu0 0.0
      %2146 = vmatpush.msra.mxu0 %v2126
      %2147 = vmatmul.f32.gmra.mxu0 %v2129
      %v2148 = vpop.f32.mrf.mxu0
      %v2149 = vadd.f32 0.0, %v2148
      %2150 = vdwg.mxu0
      %2151 = vrot.lane.b32.xlu0 %v2020, 112
      %v2152 = vpop.permute.xlu0 %2151
      %2153 = vrot.lane.b32.xlu0 %v2018, 80
      %v2154 = vpop.permute.xlu0 %2153
      %v2155 = vsel %vm589, %v2152, 0
      %v2157 = vsel %vm589, %v2154, 0
      %2159 = vmatpush.xpose.msra.mxu0 0.0
      %2160 = vmatpush.xpose.msra.mxu0 0.0
      %2161 = vmatpush.xpose.msra.mxu0 0.0
      %2162 = vmatpush.xpose.msra.mxu0 0.0
      %2163 = vmatpush.xpose.msra.mxu0 0.0
      %2164 = vmatpush.xpose.msra.mxu0 0.0
      %2165 = vmatpush.xpose.msra.mxu0 0.0
      %2166 = vmatpush.xpose.msra.mxu0 0.0
      %2167 = vmatpush.xpose.msra.mxu0 0.0
      %2168 = vmatpush.xpose.msra.mxu0 0.0
      %2169 = vmatpush.xpose.msra.mxu0 0.0
      %2170 = vmatpush.xpose.msra.mxu0 0.0
      %2171 = vmatpush.xpose.msra.mxu0 0.0
      %2172 = vmatpush.xpose.msra.mxu0 0.0
      %2173 = vmatpush.xpose.msra.mxu0 0.0
      %2174 = vmatpush.xpose.msra.mxu0 %v2157
      %2175 = vmatmul.f32.gmra.mxu0 %v2155
      %v2176 = vpop.f32.mrf.mxu0
      %v2177 = vadd.f32 0.0, %v2176
      %2178 = vdwg.mxu0
      %v2179 = vsel %vm589, %v2177, -inf
      %2180 = vmax.xlane.f32.xlu0 %v2179
      %v2181 = vpop.xlane.xlu0 %2180
      %v2182 = vsub.f32 %v2177, %v2181
      %v2183 = vmul.f32 %v2182, 1.442695
      %v2184 = vpow.pop %v2183
      %v2185 = vsel %vm589, %v2184, 0.0
      %2186 = vadd.xlane.f32.xlu0 %v2185
      %v2187 = vpop.xlane.xlu0 %2186
      %v2188 = vrcp.pop %v2187
      %v2189 = vmul.f32 %v2184, %v2188
      %2190 = vrot.lane.b32.xlu0 %v2018, 48
      %v2191 = vpop.permute.xlu0 %2190
      %v2194 = vsel %vm589, %v2189, 0
      %2196 = vmatpush.msra.mxu0 0.0
      %2197 = vmatpush.msra.mxu0 0.0
      %2198 = vmatpush.msra.mxu0 0.0
      %2199 = vmatpush.msra.mxu0 0.0
      %2200 = vmatpush.msra.mxu0 0.0
      %2201 = vmatpush.msra.mxu0 0.0
      %2202 = vmatpush.msra.mxu0 0.0
      %2203 = vmatpush.msra.mxu0 0.0
      %2204 = vmatpush.msra.mxu0 0.0
      %2205 = vmatpush.msra.mxu0 0.0
      %2206 = vmatpush.msra.mxu0 0.0
      %2207 = vmatpush.msra.mxu0 0.0
      %2208 = vmatpush.msra.mxu0 0.0
      %2209 = vmatpush.msra.mxu0 0.0
      %2210 = vmatpush.msra.mxu0 0.0
      %2211 = vmatpush.msra.mxu0 %v2191
      %2212 = vmatmul.f32.gmra.mxu0 %v2194
      %v2213 = vpop.f32.mrf.mxu0
      %v2214 = vadd.f32 0.0, %v2213
      %2215 = vdwg.mxu0
      %2216 = vrot.lane.b32.xlu0 %v2020, 104
      %v2217 = vpop.permute.xlu0 %2216
      %2218 = vrot.lane.b32.xlu0 %v2018, 72
      %v2219 = vpop.permute.xlu0 %2218
      %v2220 = vsel %vm589, %v2217, 0
      %v2222 = vsel %vm589, %v2219, 0
      %2224 = vmatpush.xpose.msra.mxu0 0.0
      %2225 = vmatpush.xpose.msra.mxu0 0.0
      %2226 = vmatpush.xpose.msra.mxu0 0.0
      %2227 = vmatpush.xpose.msra.mxu0 0.0
      %2228 = vmatpush.xpose.msra.mxu0 0.0
      %2229 = vmatpush.xpose.msra.mxu0 0.0
      %2230 = vmatpush.xpose.msra.mxu0 0.0
      %2231 = vmatpush.xpose.msra.mxu0 0.0
      %2232 = vmatpush.xpose.msra.mxu0 0.0
      %2233 = vmatpush.xpose.msra.mxu0 0.0
      %2234 = vmatpush.xpose.msra.mxu0 0.0
      %2235 = vmatpush.xpose.msra.mxu0 0.0
      %2236 = vmatpush.xpose.msra.mxu0 0.0
      %2237 = vmatpush.xpose.msra.mxu0 0.0
      %2238 = vmatpush.xpose.msra.mxu0 0.0
      %2239 = vmatpush.xpose.msra.mxu0 %v2222
      %2240 = vmatmul.f32.gmra.mxu0 %v2220
      %v2241 = vpop.f32.mrf.mxu0
      %v2242 = vadd.f32 0.0, %v2241
      %2243 = vdwg.mxu0
      %v2244 = vsel %vm589, %v2242, -inf
      %2245 = vmax.xlane.f32.xlu0 %v2244
      %v2246 = vpop.xlane.xlu0 %2245
      %v2247 = vsub.f32 %v2242, %v2246
      %v2248 = vmul.f32 %v2247, 1.442695
      %v2249 = vpow.pop %v2248
      %v2250 = vsel %vm589, %v2249, 0.0
      %2251 = vadd.xlane.f32.xlu0 %v2250
      %v2252 = vpop.xlane.xlu0 %2251
      %v2253 = vrcp.pop %v2252
      %v2254 = vmul.f32 %v2249, %v2253
      %2255 = vrot.lane.b32.xlu0 %v2018, 40
      %v2256 = vpop.permute.xlu0 %2255
      %v2259 = vsel %vm589, %v2254, 0
      %2261 = vmatpush.msra.mxu0 0.0
      %2262 = vmatpush.msra.mxu0 0.0
      %2263 = vmatpush.msra.mxu0 0.0
      %2264 = vmatpush.msra.mxu0 0.0
      %2265 = vmatpush.msra.mxu0 0.0
      %2266 = vmatpush.msra.mxu0 0.0
      %2267 = vmatpush.msra.mxu0 0.0
      %2268 = vmatpush.msra.mxu0 0.0
      %2269 = vmatpush.msra.mxu0 0.0
      %2270 = vmatpush.msra.mxu0 0.0
      %2271 = vmatpush.msra.mxu0 0.0
      %2272 = vmatpush.msra.mxu0 0.0
      %2273 = vmatpush.msra.mxu0 0.0
      %2274 = vmatpush.msra.mxu0 0.0
      %2275 = vmatpush.msra.mxu0 0.0
      %2276 = vmatpush.msra.mxu0 %v2256
      %2277 = vmatmul.f32.gmra.mxu0 %v2259
      %v2278 = vpop.f32.mrf.mxu0
      %v2279 = vadd.f32 0.0, %v2278
      %2280 = vdwg.mxu0
      %2282 = vrot.lane.b32.xlu0 %v2149, 8
      %v2283 = vpop.permute.xlu0 %2282
      %2286 = vrot.lane.b32.xlu0 %v2214, 16
      %v2287 = vpop.permute.xlu0 %2286
      %2290 = vrot.lane.b32.xlu0 %v2279, 24
      %v2291 = vpop.permute.xlu0 %2290
      %v2293 = vsel %vm589, %v2084, %v2283
      %v2294 = vsel %vm860, %v2293, %v2287
      %v2295 = vsel %vm862, %v2294, %v2291
      %s2296 = scalar_lea.vmem %s6, 32
      %v2297 = vld [vmem:[%s2296] sm:$0xff]
      %v2298 = vld [vmem:[%s2296 + $0x8] sm:$0xff]
      %v2299 = vld [vmem:[%s2296 + $0x10] sm:$0xff]
      %v2300 = vld [vmem:[%s2296 + $0x18] sm:$0xff]
      %s2301 = scalar_lea.vmem %s7, 1
      %v2302 = vld [vmem:[%s2301] sm:$0x1]
      %v2304 = vperm.slane %v2302, 0
      %v2307 = vsel %vm561, %v2295, 0
      %2309 = vmatpush.msra.mxu0 0.0
      %2310 = vmatpush.msra.mxu0 0.0
      %2311 = vmatpush.msra.mxu0 0.0
      %2312 = vmatpush.msra.mxu0 0.0
      %2313 = vmatpush.msra.mxu0 0.0
      %2314 = vmatpush.msra.mxu0 0.0
      %2315 = vmatpush.msra.mxu0 0.0
      %2316 = vmatpush.msra.mxu0 0.0
      %2317 = vmatpush.msra.mxu0 0.0
      %2318 = vmatpush.msra.mxu0 0.0
      %2319 = vmatpush.msra.mxu0 0.0
      %2320 = vmatpush.msra.mxu0 0.0
      %2321 = vmatpush.msra.mxu0 %v2300
      %2322 = vmatpush.msra.mxu0 %v2299
      %2323 = vmatpush.msra.mxu0 %v2298
      %2324 = vmatpush.msra.mxu0 %v2297
      %2325 = vmatmul.f32.gmra.mxu0 %v2307
      %v2326 = vpop.f32.mrf.mxu0
      %v2327 = vadd.f32 %v2304, %v2326
      %2328 = vdwg.mxu0
      %v2329 = vadd.f32 %v1986, %v2327
      %s2330 = scalar_lea.vmem %s8, 1
      %v2331 = vld [vmem:[%s2330] sm:$0x1]
      %s2332 = scalar_lea.vmem %s9, 1
      %v2333 = vld [vmem:[%s2332] sm:$0x1]
      %v2334 = vsel %vm561, %v2329, 0.0
      %2335 = vadd.xlane.f32.xlu0 %v2334
      %v2336 = vpop.xlane.xlu0 %2335
      %v2337 = vmul.f32 %v2336, %v907
      %v2338 = vsub.f32 %v2329, %v2337
      %v2339 = vmul.f32 %v2338, %v2338
      %v2340 = vsel %vm561, %v2339, 0.0
      %2341 = vadd.xlane.f32.xlu0 %v2340
      %v2342 = vpop.xlane.xlu0 %2341
      %v2343 = vmul.f32 %v2342, %v907
      %v2344 = vadd.f32 %v2343, 1e-05
      %v2345 = vrsqrt.pop %v2344
      %v2346 = vmul.f32 %v2345, %v2344
      %v2347 = vmul.f32 %v2346, %v2345
      %v2348 = vmul.f32 0.5, %v2347
      %v2349 = vsub.f32 1.5, %v2348
      %v2350 = vmul.f32 %v2345, %v2349
      %vm2351 = vweird.f32 %v2344
      %vm2352 = vweird.f32 %v2345
      %vm2353 = vmor %vm2351, %vm2352
      %v2354 = vsel %vm2353, %v2345, %v2350
      %v2355 = vmul.f32 %v2338, %v2354
      %v2357 = vperm.slane %v2331, 0
      %v2359 = vmul.f32 %v2355, %v2357
      %v2361 = vperm.slane %v2333, 0
      %v2363 = vadd.f32 %v2359, %v2361
      %s2364 = scalar_lea.vmem %s10, 512
      %v2365 = vld [vmem:[%s2364] sm:$0xff]
      %v2366 = vld [vmem:[%s2364 + $0x8] sm:$0xff]
      %v2367 = vld [vmem:[%s2364 + $0x10] sm:$0xff]
      %v2368 = vld [vmem:[%s2364 + $0x18] sm:$0xff]
      %v2369 = vld [vmem:[%s2364 + $0x20] sm:$0xff]
      %v2370 = vld [vmem:[%s2364 + $0x28] sm:$0xff]
      %v2371 = vld [vmem:[%s2364 + $0x30] sm:$0xff]
      %v2372 = vld [vmem:[%s2364 + $0x38] sm:$0xff]
      %v2373 = vld [vmem:[%s2364 + $0x40] sm:$0xff]
      %v2374 = vld [vmem:[%s2364 + $0x48] sm:$0xff]
      %v2375 = vld [vmem:[%s2364 + $0x50] sm:$0xff]
      %v2376 = vld [vmem:[%s2364 + $0x58] sm:$0xff]
      %v2377 = vld [vmem:[%s2364 + $0x60] sm:$0xff]
      %v2378 = vld [vmem:[%s2364 + $0x68] sm:$0xff]
      %v2379 = vld [vmem:[%s2364 + $0x70] sm:$0xff]
      %v2380 = vld [vmem:[%s2364 + $0x78] sm:$0xff]
      %v2381 = vld [vmem:[%s2364 + $0x80] sm:$0xff]
      %v2382 = vld [vmem:[%s2364 + $0x88] sm:$0xff]
      %v2383 = vld [vmem:[%s2364 + $0x90] sm:$0xff]
      %v2384 = vld [vmem:[%s2364 + $0x98] sm:$0xff]
      %v2385 = vld [vmem:[%s2364 + $0xa0] sm:$0xff]
      %v2386 = vld [vmem:[%s2364 + $0xa8] sm:$0xff]
      %v2387 = vld [vmem:[%s2364 + $0xb0] sm:$0xff]
      %v2388 = vld [vmem:[%s2364 + $0xb8] sm:$0xff]
      %v2389 = vld [vmem:[%s2364 + $0xc0] sm:$0xff]
      %v2390 = vld [vmem:[%s2364 + $0xc8] sm:$0xff]
      %v2391 = vld [vmem:[%s2364 + $0xd0] sm:$0xff]
      %v2392 = vld [vmem:[%s2364 + $0xd8] sm:$0xff]
      %v2393 = vld [vmem:[%s2364 + $0xe0] sm:$0xff]
      %v2394 = vld [vmem:[%s2364 + $0xe8] sm:$0xff]
      %v2395 = vld [vmem:[%s2364 + $0xf0] sm:$0xff]
      %v2396 = vld [vmem:[%s2364 + $0xf8] sm:$0xff]
      %v2397 = vld [vmem:[%s2364 + $0x100] sm:$0xff]
      %v2398 = vld [vmem:[%s2364 + $0x108] sm:$0xff]
      %v2399 = vld [vmem:[%s2364 + $0x110] sm:$0xff]
      %v2400 = vld [vmem:[%s2364 + $0x118] sm:$0xff]
      %v2401 = vld [vmem:[%s2364 + $0x120] sm:$0xff]
      %v2402 = vld [vmem:[%s2364 + $0x128] sm:$0xff]
      %v2403 = vld [vmem:[%s2364 + $0x130] sm:$0xff]
      %v2404 = vld [vmem:[%s2364 + $0x138] sm:$0xff]
      %v2405 = vld [vmem:[%s2364 + $0x140] sm:$0xff]
      %v2406 = vld [vmem:[%s2364 + $0x148] sm:$0xff]
      %v2407 = vld [vmem:[%s2364 + $0x150] sm:$0xff]
      %v2408 = vld [vmem:[%s2364 + $0x158] sm:$0xff]
      %v2409 = vld [vmem:[%s2364 + $0x160] sm:$0xff]
      %v2410 = vld [vmem:[%s2364 + $0x168] sm:$0xff]
      %v2411 = vld [vmem:[%s2364 + $0x170] sm:$0xff]
      %v2412 = vld [vmem:[%s2364 + $0x178] sm:$0xff]
      %v2413 = vld [vmem:[%s2364 + $0x180] sm:$0xff]
      %v2414 = vld [vmem:[%s2364 + $0x188] sm:$0xff]
      %v2415 = vld [vmem:[%s2364 + $0x190] sm:$0xff]
      %v2416 = vld [vmem:[%s2364 + $0x198] sm:$0xff]
      %v2417 = vld [vmem:[%s2364 + $0x1a0] sm:$0xff]
      %v2418 = vld [vmem:[%s2364 + $0x1a8] sm:$0xff]
      %v2419 = vld [vmem:[%s2364 + $0x1b0] sm:$0xff]
      %v2420 = vld [vmem:[%s2364 + $0x1b8] sm:$0xff]
      %v2421 = vld [vmem:[%s2364 + $0x1c0] sm:$0xff]
      %v2422 = vld [vmem:[%s2364 + $0x1c8] sm:$0xff]
      %v2423 = vld [vmem:[%s2364 + $0x1d0] sm:$0xff]
      %v2424 = vld [vmem:[%s2364 + $0x1d8] sm:$0xff]
      %v2425 = vld [vmem:[%s2364 + $0x1e0] sm:$0xff]
      %v2426 = vld [vmem:[%s2364 + $0x1e8] sm:$0xff]
      %v2427 = vld [vmem:[%s2364 + $0x1f0] sm:$0xff]
      %v2428 = vld [vmem:[%s2364 + $0x1f8] sm:$0xff]
      %s2429 = scalar_lea.vmem %s11, 16
      %v2430 = vld [vmem:[%s2429] sm:$0xff]
      %v2431 = vld [vmem:[%s2429 + $0x8] sm:$0xff]
      %v2434 = vperm.slane %v2430, 0
      %v2435 = vperm.slane %v2430, 1
      %v2436 = vperm.slane %v2430, 2
      %v2437 = vperm.slane %v2430, 3
      %v2438 = vperm.slane %v2430, 4
      %v2439 = vperm.slane %v2430, 5
      %v2440 = vperm.slane %v2430, 6
      %v2441 = vperm.slane %v2430, 7
      %v2442 = vperm.slane %v2431, 0
      %v2443 = vperm.slane %v2431, 1
      %v2444 = vperm.slane %v2431, 2
      %v2445 = vperm.slane %v2431, 3
      %v2446 = vperm.slane %v2431, 4
      %v2447 = vperm.slane %v2431, 5
      %v2448 = vperm.slane %v2431, 6
      %v2449 = vperm.slane %v2431, 7
      %v2467 = vsel %vm561, %v2363, 0
      %2469 = vmatpush.msra.mxu0 0.0
      %2470 = vmatpush.msra.mxu0 0.0
      %2471 = vmatpush.msra.mxu0 0.0
      %2472 = vmatpush.msra.mxu0 0.0
      %2473 = vmatpush.msra.mxu0 0.0
      %2474 = vmatpush.msra.mxu0 0.0
      %2475 = vmatpush.msra.mxu0 0.0
      %2476 = vmatpush.msra.mxu0 0.0
      %2477 = vmatpush.msra.mxu0 0.0
      %2478 = vmatpush.msra.mxu0 0.0
      %2479 = vmatpush.msra.mxu0 0.0
      %2480 = vmatpush.msra.mxu0 0.0
      %2481 = vmatpush.msra.mxu0 %v2413
      %2482 = vmatpush.msra.mxu0 %v2397
      %2483 = vmatpush.msra.mxu0 %v2381
      %2484 = vmatpush.msra.mxu0 %v2365
      %2485 = vmatmul.f32.gmra.mxu0 %v2467
      %v2486 = vpop.f32.mrf.mxu0
      %v2487 = vadd.f32 %v2434, %v2486
      %2488 = vdwg.mxu0
      %2489 = vmatpush.msra.mxu0 0.0
      %2490 = vmatpush.msra.mxu0 0.0
      %2491 = vmatpush.msra.mxu0 0.0
      %2492 = vmatpush.msra.mxu0 0.0
      %2493 = vmatpush.msra.mxu0 0.0
      %2494 = vmatpush.msra.mxu0 0.0
      %2495 = vmatpush.msra.mxu0 0.0
      %2496 = vmatpush.msra.mxu0 0.0
      %2497 = vmatpush.msra.mxu0 0.0
      %2498 = vmatpush.msra.mxu0 0.0
      %2499 = vmatpush.msra.mxu0 0.0
      %2500 = vmatpush.msra.mxu0 0.0
      %2501 = vmatpush.msra.mxu0 %v2414
      %2502 = vmatpush.msra.mxu0 %v2398
      %2503 = vmatpush.msra.mxu0 %v2382
      %2504 = vmatpush.msra.mxu0 %v2366
      %2505 = vmatmul.f32.gmra.mxu0 %v2467
      %v2506 = vpop.f32.mrf.mxu0
      %v2507 = vadd.f32 %v2435, %v2506
      %2508 = vdwg.mxu0
      %2509 = vmatpush.msra.mxu0 0.0
      %2510 = vmatpush.msra.mxu0 0.0
      %2511 = vmatpush.msra.mxu0 0.0
      %2512 = vmatpush.msra.mxu0 0.0
      %2513 = vmatpush.msra.mxu0 0.0
      %2514 = vmatpush.msra.mxu0 0.0
      %2515 = vmatpush.msra.mxu0 0.0
      %2516 = vmatpush.msra.mxu0 0.0
      %2517 = vmatpush.msra.mxu0 0.0
      %2518 = vmatpush.msra.mxu0 0.0
      %2519 = vmatpush.msra.mxu0 0.0
      %2520 = vmatpush.msra.mxu0 0.0
      %2521 = vmatpush.msra.mxu0 %v2415
      %2522 = vmatpush.msra.mxu0 %v2399
      %2523 = vmatpush.msra.mxu0 %v2383
      %2524 = vmatpush.msra.mxu0 %v2367
      %2525 = vmatmul.f32.gmra.mxu0 %v2467
      %v2526 = vpop.f32.mrf.mxu0
      %v2527 = vadd.f32 %v2436, %v2526
      %2528 = vdwg.mxu0
      %2529 = vmatpush.msra.mxu0 0.0
      %2530 = vmatpush.msra.mxu0 0.0
      %2531 = vmatpush.msra.mxu0 0.0
      %2532 = vmatpush.msra.mxu0 0.0
      %2533 = vmatpush.msra.mxu0 0.0
      %2534 = vmatpush.msra.mxu0 0.0
      %2535 = vmatpush.msra.mxu0 0.0
      %2536 = vmatpush.msra.mxu0 0.0
      %2537 = vmatpush.msra.mxu0 0.0
      %2538 = vmatpush.msra.mxu0 0.0
      %2539 = vmatpush.msra.mxu0 0.0
      %2540 = vmatpush.msra.mxu0 0.0
      %2541 = vmatpush.msra.mxu0 %v2416
      %2542 = vmatpush.msra.mxu0 %v2400
      %2543 = vmatpush.msra.mxu0 %v2384
      %2544 = vmatpush.msra.mxu0 %v2368
      %2545 = vmatmul.f32.gmra.mxu0 %v2467
      %v2546 = vpop.f32.mrf.mxu0
      %v2547 = vadd.f32 %v2437, %v2546
      %2548 = vdwg.mxu0
      %2549 = vmatpush.msra.mxu0 0.0
      %2550 = vmatpush.msra.mxu0 0.0
      %2551 = vmatpush.msra.mxu0 0.0
      %2552 = vmatpush.msra.mxu0 0.0
      %2553 = vmatpush.msra.mxu0 0.0
      %2554 = vmatpush.msra.mxu0 0.0
      %2555 = vmatpush.msra.mxu0 0.0
      %2556 = vmatpush.msra.mxu0 0.0
      %2557 = vmatpush.msra.mxu0 0.0
      %2558 = vmatpush.msra.mxu0 0.0
      %2559 = vmatpush.msra.mxu0 0.0
      %2560 = vmatpush.msra.mxu0 0.0
      %2561 = vmatpush.msra.mxu0 %v2417
      %2562 = vmatpush.msra.mxu0 %v2401
      %2563 = vmatpush.msra.mxu0 %v2385
      %2564 = vmatpush.msra.mxu0 %v2369
      %2565 = vmatmul.f32.gmra.mxu0 %v2467
      %v2566 = vpop.f32.mrf.mxu0
      %v2567 = vadd.f32 %v2438, %v2566
      %2568 = vdwg.mxu0
      %2569 = vmatpush.msra.mxu0 0.0
      %2570 = vmatpush.msra.mxu0 0.0
      %2571 = vmatpush.msra.mxu0 0.0
      %2572 = vmatpush.msra.mxu0 0.0
      %2573 = vmatpush.msra.mxu0 0.0
      %2574 = vmatpush.msra.mxu0 0.0
      %2575 = vmatpush.msra.mxu0 0.0
      %2576 = vmatpush.msra.mxu0 0.0
      %2577 = vmatpush.msra.mxu0 0.0
      %2578 = vmatpush.msra.mxu0 0.0
      %2579 = vmatpush.msra.mxu0 0.0
      %2580 = vmatpush.msra.mxu0 0.0
      %2581 = vmatpush.msra.mxu0 %v2418
      %2582 = vmatpush.msra.mxu0 %v2402
      %2583 = vmatpush.msra.mxu0 %v2386
      %2584 = vmatpush.msra.mxu0 %v2370
      %2585 = vmatmul.f32.gmra.mxu0 %v2467
      %v2586 = vpop.f32.mrf.mxu0
      %v2587 = vadd.f32 %v2439, %v2586
      %2588 = vdwg.mxu0
      %2589 = vmatpush.msra.mxu0 0.0
      %2590 = vmatpush.msra.mxu0 0.0
      %2591 = vmatpush.msra.mxu0 0.0
      %2592 = vmatpush.msra.mxu0 0.0
      %2593 = vmatpush.msra.mxu0 0.0
      %2594 = vmatpush.msra.mxu0 0.0
      %2595 = vmatpush.msra.mxu0 0.0
      %2596 = vmatpush.msra.mxu0 0.0
      %2597 = vmatpush.msra.mxu0 0.0
      %2598 = vmatpush.msra.mxu0 0.0
      %2599 = vmatpush.msra.mxu0 0.0
      %2600 = vmatpush.msra.mxu0 0.0
      %2601 = vmatpush.msra.mxu0 %v2419
      %2602 = vmatpush.msra.mxu0 %v2403
      %2603 = vmatpush.msra.mxu0 %v2387
      %2604 = vmatpush.msra.mxu0 %v2371
      %2605 = vmatmul.f32.gmra.mxu0 %v2467
      %v2606 = vpop.f32.mrf.mxu0
      %v2607 = vadd.f32 %v2440, %v2606
      %2608 = vdwg.mxu0
      %2609 = vmatpush.msra.mxu0 0.0
      %2610 = vmatpush.msra.mxu0 0.0
      %2611 = vmatpush.msra.mxu0 0.0
      %2612 = vmatpush.msra.mxu0 0.0
      %2613 = vmatpush.msra.mxu0 0.0
      %2614 = vmatpush.msra.mxu0 0.0
      %2615 = vmatpush.msra.mxu0 0.0
      %2616 = vmatpush.msra.mxu0 0.0
      %2617 = vmatpush.msra.mxu0 0.0
      %2618 = vmatpush.msra.mxu0 0.0
      %2619 = vmatpush.msra.mxu0 0.0
      %2620 = vmatpush.msra.mxu0 0.0
      %2621 = vmatpush.msra.mxu0 %v2420
      %2622 = vmatpush.msra.mxu0 %v2404
      %2623 = vmatpush.msra.mxu0 %v2388
      %2624 = vmatpush.msra.mxu0 %v2372
      %2625 = vmatmul.f32.gmra.mxu0 %v2467
      %v2626 = vpop.f32.mrf.mxu0
      %v2627 = vadd.f32 %v2441, %v2626
      %2628 = vdwg.mxu0
      %2629 = vmatpush.msra.mxu0 0.0
      %2630 = vmatpush.msra.mxu0 0.0
      %2631 = vmatpush.msra.mxu0 0.0
      %2632 = vmatpush.msra.mxu0 0.0
      %2633 = vmatpush.msra.mxu0 0.0
      %2634 = vmatpush.msra.mxu0 0.0
      %2635 = vmatpush.msra.mxu0 0.0
      %2636 = vmatpush.msra.mxu0 0.0
      %2637 = vmatpush.msra.mxu0 0.0
      %2638 = vmatpush.msra.mxu0 0.0
      %2639 = vmatpush.msra.mxu0 0.0
      %2640 = vmatpush.msra.mxu0 0.0
      %2641 = vmatpush.msra.mxu0 %v2421
      %2642 = vmatpush.msra.mxu0 %v2405
      %2643 = vmatpush.msra.mxu0 %v2389
      %2644 = vmatpush.msra.mxu0 %v2373
      %2645 = vmatmul.f32.gmra.mxu0 %v2467
      %v2646 = vpop.f32.mrf.mxu0
      %v2647 = vadd.f32 %v2442, %v2646
      %2648 = vdwg.mxu0
      %2649 = vmatpush.msra.mxu0 0.0
      %2650 = vmatpush.msra.mxu0 0.0
      %2651 = vmatpush.msra.mxu0 0.0
      %2652 = vmatpush.msra.mxu0 0.0
      %2653 = vmatpush.msra.mxu0 0.0
      %2654 = vmatpush.msra.mxu0 0.0
      %2655 = vmatpush.msra.mxu0 0.0
      %2656 = vmatpush.msra.mxu0 0.0
      %2657 = vmatpush.msra.mxu0 0.0
      %2658 = vmatpush.msra.mxu0 0.0
      %2659 = vmatpush.msra.mxu0 0.0
      %2660 = vmatpush.msra.mxu0 0.0
      %2661 = vmatpush.msra.mxu0 %v2422
      %2662 = vmatpush.msra.mxu0 %v2406
      %2663 = vmatpush.msra.mxu0 %v2390
      %2664 = vmatpush.msra.mxu0 %v2374
      %2665 = vmatmul.f32.gmra.mxu0 %v2467
      %v2666 = vpop.f32.mrf.mxu0
      %v2667 = vadd.f32 %v2443, %v2666
      %2668 = vdwg.mxu0
      %2669 = vmatpush.msra.mxu0 0.0
      %2670 = vmatpush.msra.mxu0 0.0
      %2671 = vmatpush.msra.mxu0 0.0
      %2672 = vmatpush.msra.mxu0 0.0
      %2673 = vmatpush.msra.mxu0 0.0
      %2674 = vmatpush.msra.mxu0 0.0
      %2675 = vmatpush.msra.mxu0 0.0
      %2676 = vmatpush.msra.mxu0 0.0
      %2677 = vmatpush.msra.mxu0 0.0
      %2678 = vmatpush.msra.mxu0 0.0
      %2679 = vmatpush.msra.mxu0 0.0
      %2680 = vmatpush.msra.mxu0 0.0
      %2681 = vmatpush.msra.mxu0 %v2423
      %2682 = vmatpush.msra.mxu0 %v2407
      %2683 = vmatpush.msra.mxu0 %v2391
      %2684 = vmatpush.msra.mxu0 %v2375
      %2685 = vmatmul.f32.gmra.mxu0 %v2467
      %v2686 = vpop.f32.mrf.mxu0
      %v2687 = vadd.f32 %v2444, %v2686
      %2688 = vdwg.mxu0
      %2689 = vmatpush.msra.mxu0 0.0
      %2690 = vmatpush.msra.mxu0 0.0
      %2691 = vmatpush.msra.mxu0 0.0
      %2692 = vmatpush.msra.mxu0 0.0
      %2693 = vmatpush.msra.mxu0 0.0
      %2694 = vmatpush.msra.mxu0 0.0
      %2695 = vmatpush.msra.mxu0 0.0
      %2696 = vmatpush.msra.mxu0 0.0
      %2697 = vmatpush.msra.mxu0 0.0
      %2698 = vmatpush.msra.mxu0 0.0
      %2699 = vmatpush.msra.mxu0 0.0
      %2700 = vmatpush.msra.mxu0 0.0
      %2701 = vmatpush.msra.mxu0 %v2424
      %2702 = vmatpush.msra.mxu0 %v2408
      %2703 = vmatpush.msra.mxu0 %v2392
      %2704 = vmatpush.msra.mxu0 %v2376
      %2705 = vmatmul.f32.gmra.mxu0 %v2467
      %v2706 = vpop.f32.mrf.mxu0
      %v2707 = vadd.f32 %v2445, %v2706
      %2708 = vdwg.mxu0
      %2709 = vmatpush.msra.mxu0 0.0
      %2710 = vmatpush.msra.mxu0 0.0
      %2711 = vmatpush.msra.mxu0 0.0
      %2712 = vmatpush.msra.mxu0 0.0
      %2713 = vmatpush.msra.mxu0 0.0
      %2714 = vmatpush.msra.mxu0 0.0
      %2715 = vmatpush.msra.mxu0 0.0
      %2716 = vmatpush.msra.mxu0 0.0
      %2717 = vmatpush.msra.mxu0 0.0
      %2718 = vmatpush.msra.mxu0 0.0
      %2719 = vmatpush.msra.mxu0 0.0
      %2720 = vmatpush.msra.mxu0 0.0
      %2721 = vmatpush.msra.mxu0 %v2425
      %2722 = vmatpush.msra.mxu0 %v2409
      %2723 = vmatpush.msra.mxu0 %v2393
      %2724 = vmatpush.msra.mxu0 %v2377
      %2725 = vmatmul.f32.gmra.mxu0 %v2467
      %v2726 = vpop.f32.mrf.mxu0
      %v2727 = vadd.f32 %v2446, %v2726
      %2728 = vdwg.mxu0
      %2729 = vmatpush.msra.mxu0 0.0
      %2730 = vmatpush.msra.mxu0 0.0
      %2731 = vmatpush.msra.mxu0 0.0
      %2732 = vmatpush.msra.mxu0 0.0
      %2733 = vmatpush.msra.mxu0 0.0
      %2734 = vmatpush.msra.mxu0 0.0
      %2735 = vmatpush.msra.mxu0 0.0
      %2736 = vmatpush.msra.mxu0 0.0
      %2737 = vmatpush.msra.mxu0 0.0
      %2738 = vmatpush.msra.mxu0 0.0
      %2739 = vmatpush.msra.mxu0 0.0
      %2740 = vmatpush.msra.mxu0 0.0
      %2741 = vmatpush.msra.mxu0 %v2426
      %2742 = vmatpush.msra.mxu0 %v2410
      %2743 = vmatpush.msra.mxu0 %v2394
      %2744 = vmatpush.msra.mxu0 %v2378
      %2745 = vmatmul.f32.gmra.mxu0 %v2467
      %v2746 = vpop.f32.mrf.mxu0
      %v2747 = vadd.f32 %v2447, %v2746
      %2748 = vdwg.mxu0
      %2749 = vmatpush.msra.mxu0 0.0
      %2750 = vmatpush.msra.mxu0 0.0
      %2751 = vmatpush.msra.mxu0 0.0
      %2752 = vmatpush.msra.mxu0 0.0
      %2753 = vmatpush.msra.mxu0 0.0
      %2754 = vmatpush.msra.mxu0 0.0
      %2755 = vmatpush.msra.mxu0 0.0
      %2756 = vmatpush.msra.mxu0 0.0
      %2757 = vmatpush.msra.mxu0 0.0
      %2758 = vmatpush.msra.mxu0 0.0
      %2759 = vmatpush.msra.mxu0 0.0
      %2760 = vmatpush.msra.mxu0 0.0
      %2761 = vmatpush.msra.mxu0 %v2427
      %2762 = vmatpush.msra.mxu0 %v2411
      %2763 = vmatpush.msra.mxu0 %v2395
      %2764 = vmatpush.msra.mxu0 %v2379
      %2765 = vmatmul.f32.gmra.mxu0 %v2467
      %v2766 = vpop.f32.mrf.mxu0
      %v2767 = vadd.f32 %v2448, %v2766
      %2768 = vdwg.mxu0
      %2769 = vmatpush.msra.mxu0 0.0
      %2770 = vmatpush.msra.mxu0 0.0
      %2771 = vmatpush.msra.mxu0 0.0
      %2772 = vmatpush.msra.mxu0 0.0
      %2773 = vmatpush.msra.mxu0 0.0
      %2774 = vmatpush.msra.mxu0 0.0
      %2775 = vmatpush.msra.mxu0 0.0
      %2776 = vmatpush.msra.mxu0 0.0
      %2777 = vmatpush.msra.mxu0 0.0
      %2778 = vmatpush.msra.mxu0 0.0
      %2779 = vmatpush.msra.mxu0 0.0
      %2780 = vmatpush.msra.mxu0 0.0
      %2781 = vmatpush.msra.mxu0 %v2428
      %2782 = vmatpush.msra.mxu0 %v2412
      %2783 = vmatpush.msra.mxu0 %v2396
      %2784 = vmatpush.msra.mxu0 %v2380
      %2785 = vmatmul.f32.gmra.mxu0 %v2467
      %v2786 = vpop.f32.mrf.mxu0
      %v2787 = vadd.f32 %v2449, %v2786
      %2788 = vdwg.mxu0
      %v2789 = vmax.f32 %v2487, 0.0
      %v2790 = vmax.f32 %v2507, 0.0
      %v2791 = vmax.f32 %v2527, 0.0
      %v2792 = vmax.f32 %v2547, 0.0
      %v2793 = vmax.f32 %v2567, 0.0
      %v2794 = vmax.f32 %v2587, 0.0
      %v2795 = vmax.f32 %v2607, 0.0
      %v2796 = vmax.f32 %v2627, 0.0
      %v2797 = vmax.f32 %v2647, 0.0
      %v2798 = vmax.f32 %v2667, 0.0
      %v2799 = vmax.f32 %v2687, 0.0
      %v2800 = vmax.f32 %v2707, 0.0
      %v2801 = vmax.f32 %v2727, 0.0
      %v2802 = vmax.f32 %v2747, 0.0
      %v2803 = vmax.f32 %v2767, 0.0
      %v2804 = vmax.f32 %v2787, 0.0
      %s2805 = scalar_lea.vmem %s12, 2048
      %v2806 = vld [vmem:[%s2805] sm:$0xff]
      %v2807 = vld [vmem:[%s2805 + $0x8] sm:$0xff]
      %v2808 = vld [vmem:[%s2805 + $0x10] sm:$0xff]
      %v2809 = vld [vmem:[%s2805 + $0x18] sm:$0xff]
      %v2810 = vld [vmem:[%s2805 + $0x20] sm:$0xff]
      %v2811 = vld [vmem:[%s2805 + $0x28] sm:$0xff]
      %v2812 = vld [vmem:[%s2805 + $0x30] sm:$0xff]
      %v2813 = vld [vmem:[%s2805 + $0x38] sm:$0xff]
      %v2814 = vld [vmem:[%s2805 + $0x40] sm:$0xff]
      %v2815 = vld [vmem:[%s2805 + $0x48] sm:$0xff]
      %v2816 = vld [vmem:[%s2805 + $0x50] sm:$0xff]
      %v2817 = vld [vmem:[%s2805 + $0x58] sm:$0xff]
      %v2818 = vld [vmem:[%s2805 + $0x60] sm:$0xff]
      %v2819 = vld [vmem:[%s2805 + $0x68] sm:$0xff]
      %v2820 = vld [vmem:[%s2805 + $0x70] sm:$0xff]
      %v2821 = vld [vmem:[%s2805 + $0x78] sm:$0xff]
      %v2822 = vld [vmem:[%s2805 + $0x80] sm:$0xff]
      %v2823 = vld [vmem:[%s2805 + $0x88] sm:$0xff]
      %v2824 = vld [vmem:[%s2805 + $0x90] sm:$0xff]
      %v2825 = vld [vmem:[%s2805 + $0x98] sm:$0xff]
      %v2826 = vld [vmem:[%s2805 + $0xa0] sm:$0xff]
      %v2827 = vld [vmem:[%s2805 + $0xa8] sm:$0xff]
      %v2828 = vld [vmem:[%s2805 + $0xb0] sm:$0xff]
      %v2829 = vld [vmem:[%s2805 + $0xb8] sm:$0xff]
      %v2830 = vld [vmem:[%s2805 + $0xc0] sm:$0xff]
      %v2831 = vld [vmem:[%s2805 + $0xc8] sm:$0xff]
      %v2832 = vld [vmem:[%s2805 + $0xd0] sm:$0xff]
      %v2833 = vld [vmem:[%s2805 + $0xd8] sm:$0xff]
      %v2834 = vld [vmem:[%s2805 + $0xe0] sm:$0xff]
      %v2835 = vld [vmem:[%s2805 + $0xe8] sm:$0xff]
      %v2836 = vld [vmem:[%s2805 + $0xf0] sm:$0xff]
      %v2837 = vld [vmem:[%s2805 + $0xf8] sm:$0xff]
      %v2838 = vld [vmem:[%s2805 + $0x100] sm:$0xff]
      %v2839 = vld [vmem:[%s2805 + $0x108] sm:$0xff]
      %v2840 = vld [vmem:[%s2805 + $0x110] sm:$0xff]
      %v2841 = vld [vmem:[%s2805 + $0x118] sm:$0xff]
      %v2842 = vld [vmem:[%s2805 + $0x120] sm:$0xff]
      %v2843 = vld [vmem:[%s2805 + $0x128] sm:$0xff]
      %v2844 = vld [vmem:[%s2805 + $0x130] sm:$0xff]
      %v2845 = vld [vmem:[%s2805 + $0x138] sm:$0xff]
      %v2846 = vld [vmem:[%s2805 + $0x140] sm:$0xff]
      %v2847 = vld [vmem:[%s2805 + $0x148] sm:$0xff]
      %v2848 = vld [vmem:[%s2805 + $0x150] sm:$0xff]
      %v2849 = vld [vmem:[%s2805 + $0x158] sm:$0xff]
      %v2850 = vld [vmem:[%s2805 + $0x160] sm:$0xff]
      %v2851 = vld [vmem:[%s2805 + $0x168] sm:$0xff]
      %v2852 = vld [vmem:[%s2805 + $0x170] sm:$0xff]
      %v2853 = vld [vmem:[%s2805 + $0x178] sm:$0xff]
      %v2854 = vld [vmem:[%s2805 + $0x180] sm:$0xff]
      %v2855 = vld [vmem:[%s2805 + $0x188] sm:$0xff]
      %v2856 = vld [vmem:[%s2805 + $0x190] sm:$0xff]
      %v2857 = vld [vmem:[%s2805 + $0x198] sm:$0xff]
      %v2858 = vld [vmem:[%s2805 + $0x1a0] sm:$0xff]
      %v2859 = vld [vmem:[%s2805 + $0x1a8] sm:$0xff]
      %v2860 = vld [vmem:[%s2805 + $0x1b0] sm:$0xff]
      %v2861 = vld [vmem:[%s2805 + $0x1b8] sm:$0xff]
      %v2862 = vld [vmem:[%s2805 + $0x1c0] sm:$0xff]
      %v2863 = vld [vmem:[%s2805 + $0x1c8] sm:$0xff]
      %v2864 = vld [vmem:[%s2805 + $0x1d0] sm:$0xff]
      %v2865 = vld [vmem:[%s2805 + $0x1d8] sm:$0xff]
      %v2866 = vld [vmem:[%s2805 + $0x1e0] sm:$0xff]
      %v2867 = vld [vmem:[%s2805 + $0x1e8] sm:$0xff]
      %v2868 = vld [vmem:[%s2805 + $0x1f0] sm:$0xff]
      %v2869 = vld [vmem:[%s2805 + $0x1f8] sm:$0xff]
      %v2870 = vld [vmem:[%s2805 + $0x200] sm:$0xff]
      %v2871 = vld [vmem:[%s2805 + $0x208] sm:$0xff]
      %v2872 = vld [vmem:[%s2805 + $0x210] sm:$0xff]
      %v2873 = vld [vmem:[%s2805 + $0x218] sm:$0xff]
      %v2874 = vld [vmem:[%s2805 + $0x220] sm:$0xff]
      %v2875 = vld [vmem:[%s2805 + $0x228] sm:$0xff]
      %v2876 = vld [vmem:[%s2805 + $0x230] sm:$0xff]
      %v2877 = vld [vmem:[%s2805 + $0x238] sm:$0xff]
      %v2878 = vld [vmem:[%s2805 + $0x240] sm:$0xff]
      %v2879 = vld [vmem:[%s2805 + $0x248] sm:$0xff]
      %v2880 = vld [vmem:[%s2805 + $0x250] sm:$0xff]
      %v2881 = vld [vmem:[%s2805 + $0x258] sm:$0xff]
      %v2882 = vld [vmem:[%s2805 + $0x260] sm:$0xff]
      %v2883 = vld [vmem:[%s2805 + $0x268] sm:$0xff]
      %v2884 = vld [vmem:[%s2805 + $0x270] sm:$0xff]
      %v2885 = vld [vmem:[%s2805 + $0x278] sm:$0xff]
      %v2886 = vld [vmem:[%s2805 + $0x280] sm:$0xff]
      %v2887 = vld [vmem:[%s2805 + $0x288] sm:$0xff]
      %v2888 = vld [vmem:[%s2805 + $0x290] sm:$0xff]
      %v2889 = vld [vmem:[%s2805 + $0x298] sm:$0xff]
      %v2890 = vld [vmem:[%s2805 + $0x2a0] sm:$0xff]
      %v2891 = vld [vmem:[%s2805 + $0x2a8] sm:$0xff]
      %v2892 = vld [vmem:[%s2805 + $0x2b0] sm:$0xff]
      %v2893 = vld [vmem:[%s2805 + $0x2b8] sm:$0xff]
      %v2894 = vld [vmem:[%s2805 + $0x2c0] sm:$0xff]
      %v2895 = vld [vmem:[%s2805 + $0x2c8] sm:$0xff]
      %v2896 = vld [vmem:[%s2805 + $0x2d0] sm:$0xff]
      %v2897 = vld [vmem:[%s2805 + $0x2d8] sm:$0xff]
      %v2898 = vld [vmem:[%s2805 + $0x2e0] sm:$0xff]
      %v2899 = vld [vmem:[%s2805 + $0x2e8] sm:$0xff]
      %v2900 = vld [vmem:[%s2805 + $0x2f0] sm:$0xff]
      %v2901 = vld [vmem:[%s2805 + $0x2f8] sm:$0xff]
      %v2902 = vld [vmem:[%s2805 + $0x300] sm:$0xff]
      %v2903 = vld [vmem:[%s2805 + $0x308] sm:$0xff]
      %v2904 = vld [vmem:[%s2805 + $0x310] sm:$0xff]
      %v2905 = vld [vmem:[%s2805 + $0x318] sm:$0xff]
      %v2906 = vld [vmem:[%s2805 + $0x320] sm:$0xff]
      %v2907 = vld [vmem:[%s2805 + $0x328] sm:$0xff]
      %v2908 = vld [vmem:[%s2805 + $0x330] sm:$0xff]
      %v2909 = vld [vmem:[%s2805 + $0x338] sm:$0xff]
      %v2910 = vld [vmem:[%s2805 + $0x340] sm:$0xff]
      %v2911 = vld [vmem:[%s2805 + $0x348] sm:$0xff]
      %v2912 = vld [vmem:[%s2805 + $0x350] sm:$0xff]
      %v2913 = vld [vmem:[%s2805 + $0x358] sm:$0xff]
      %v2914 = vld [vmem:[%s2805 + $0x360] sm:$0xff]
      %v2915 = vld [vmem:[%s2805 + $0x368] sm:$0xff]
      %v2916 = vld [vmem:[%s2805 + $0x370] sm:$0xff]
      %v2917 = vld [vmem:[%s2805 + $0x378] sm:$0xff]
      %v2918 = vld [vmem:[%s2805 + $0x380] sm:$0xff]
      %v2919 = vld [vmem:[%s2805 + $0x388] sm:$0xff]
      %v2920 = vld [vmem:[%s2805 + $0x390] sm:$0xff]
      %v2921 = vld [vmem:[%s2805 + $0x398] sm:$0xff]
      %v2922 = vld [vmem:[%s2805 + $0x3a0] sm:$0xff]
      %v2923 = vld [vmem:[%s2805 + $0x3a8] sm:$0xff]
      %v2924 = vld [vmem:[%s2805 + $0x3b0] sm:$0xff]
      %v2925 = vld [vmem:[%s2805 + $0x3b8] sm:$0xff]
      %v2926 = vld [vmem:[%s2805 + $0x3c0] sm:$0xff]
      %v2927 = vld [vmem:[%s2805 + $0x3c8] sm:$0xff]
      %v2928 = vld [vmem:[%s2805 + $0x3d0] sm:$0xff]
      %v2929 = vld [vmem:[%s2805 + $0x3d8] sm:$0xff]
      %v2930 = vld [vmem:[%s2805 + $0x3e0] sm:$0xff]
      %v2931 = vld [vmem:[%s2805 + $0x3e8] sm:$0xff]
      %v2932 = vld [vmem:[%s2805 + $0x3f0] sm:$0xff]
      %v2933 = vld [vmem:[%s2805 + $0x3f8] sm:$0xff]
      %v2934 = vld [vmem:[%s2805 + $0x400] sm:$0xff]
      %v2935 = vld [vmem:[%s2805 + $0x408] sm:$0xff]
      %v2936 = vld [vmem:[%s2805 + $0x410] sm:$0xff]
      %v2937 = vld [vmem:[%s2805 + $0x418] sm:$0xff]
      %v2938 = vld [vmem:[%s2805 + $0x420] sm:$0xff]
      %v2939 = vld [vmem:[%s2805 + $0x428] sm:$0xff]
      %v2940 = vld [vmem:[%s2805 + $0x430] sm:$0xff]
      %v2941 = vld [vmem:[%s2805 + $0x438] sm:$0xff]
      %v2942 = vld [vmem:[%s2805 + $0x440] sm:$0xff]
      %v2943 = vld [vmem:[%s2805 + $0x448] sm:$0xff]
      %v2944 = vld [vmem:[%s2805 + $0x450] sm:$0xff]
      %v2945 = vld [vmem:[%s2805 + $0x458] sm:$0xff]
      %v2946 = vld [vmem:[%s2805 + $0x460] sm:$0xff]
      %v2947 = vld [vmem:[%s2805 + $0x468] sm:$0xff]
      %v2948 = vld [vmem:[%s2805 + $0x470] sm:$0xff]
      %v2949 = vld [vmem:[%s2805 + $0x478] sm:$0xff]
      %v2950 = vld [vmem:[%s2805 + $0x480] sm:$0xff]
      %v2951 = vld [vmem:[%s2805 + $0x488] sm:$0xff]
      %v2952 = vld [vmem:[%s2805 + $0x490] sm:$0xff]
      %v2953 = vld [vmem:[%s2805 + $0x498] sm:$0xff]
      %v2954 = vld [vmem:[%s2805 + $0x4a0] sm:$0xff]
      %v2955 = vld [vmem:[%s2805 + $0x4a8] sm:$0xff]
      %v2956 = vld [vmem:[%s2805 + $0x4b0] sm:$0xff]
      %v2957 = vld [vmem:[%s2805 + $0x4b8] sm:$0xff]
      %v2958 = vld [vmem:[%s2805 + $0x4c0] sm:$0xff]
      %v2959 = vld [vmem:[%s2805 + $0x4c8] sm:$0xff]
      %v2960 = vld [vmem:[%s2805 + $0x4d0] sm:$0xff]
      %v2961 = vld [vmem:[%s2805 + $0x4d8] sm:$0xff]
      %v2962 = vld [vmem:[%s2805 + $0x4e0] sm:$0xff]
      %v2963 = vld [vmem:[%s2805 + $0x4e8] sm:$0xff]
      %v2964 = vld [vmem:[%s2805 + $0x4f0] sm:$0xff]
      %v2965 = vld [vmem:[%s2805 + $0x4f8] sm:$0xff]
      %v2966 = vld [vmem:[%s2805 + $0x500] sm:$0xff]
      %v2967 = vld [vmem:[%s2805 + $0x508] sm:$0xff]
      %v2968 = vld [vmem:[%s2805 + $0x510] sm:$0xff]
      %v2969 = vld [vmem:[%s2805 + $0x518] sm:$0xff]
      %v2970 = vld [vmem:[%s2805 + $0x520] sm:$0xff]
      %v2971 = vld [vmem:[%s2805 + $0x528] sm:$0xff]
      %v2972 = vld [vmem:[%s2805 + $0x530] sm:$0xff]
      %v2973 = vld [vmem:[%s2805 + $0x538] sm:$0xff]
      %v2974 = vld [vmem:[%s2805 + $0x540] sm:$0xff]
      %v2975 = vld [vmem:[%s2805 + $0x548] sm:$0xff]
      %v2976 = vld [vmem:[%s2805 + $0x550] sm:$0xff]
      %v2977 = vld [vmem:[%s2805 + $0x558] sm:$0xff]
      %v2978 = vld [vmem:[%s2805 + $0x560] sm:$0xff]
      %v2979 = vld [vmem:[%s2805 + $0x568] sm:$0xff]
      %v2980 = vld [vmem:[%s2805 + $0x570] sm:$0xff]
      %v2981 = vld [vmem:[%s2805 + $0x578] sm:$0xff]
      %v2982 = vld [vmem:[%s2805 + $0x580] sm:$0xff]
      %v2983 = vld [vmem:[%s2805 + $0x588] sm:$0xff]
      %v2984 = vld [vmem:[%s2805 + $0x590] sm:$0xff]
      %v2985 = vld [vmem:[%s2805 + $0x598] sm:$0xff]
      %v2986 = vld [vmem:[%s2805 + $0x5a0] sm:$0xff]
      %v2987 = vld [vmem:[%s2805 + $0x5a8] sm:$0xff]
      %v2988 = vld [vmem:[%s2805 + $0x5b0] sm:$0xff]
      %v2989 = vld [vmem:[%s2805 + $0x5b8] sm:$0xff]
      %v2990 = vld [vmem:[%s2805 + $0x5c0] sm:$0xff]
      %v2991 = vld [vmem:[%s2805 + $0x5c8] sm:$0xff]
      %v2992 = vld [vmem:[%s2805 + $0x5d0] sm:$0xff]
      %v2993 = vld [vmem:[%s2805 + $0x5d8] sm:$0xff]
      %v2994 = vld [vmem:[%s2805 + $0x5e0] sm:$0xff]
      %v2995 = vld [vmem:[%s2805 + $0x5e8] sm:$0xff]
      %v2996 = vld [vmem:[%s2805 + $0x5f0] sm:$0xff]
      %v2997 = vld [vmem:[%s2805 + $0x5f8] sm:$0xff]
      %v2998 = vld [vmem:[%s2805 + $0x600] sm:$0xff]
      %v2999 = vld [vmem:[%s2805 + $0x608] sm:$0xff]
      %v3000 = vld [vmem:[%s2805 + $0x610] sm:$0xff]
      %v3001 = vld [vmem:[%s2805 + $0x618] sm:$0xff]
      %v3002 = vld [vmem:[%s2805 + $0x620] sm:$0xff]
      %v3003 = vld [vmem:[%s2805 + $0x628] sm:$0xff]
      %v3004 = vld [vmem:[%s2805 + $0x630] sm:$0xff]
      %v3005 = vld [vmem:[%s2805 + $0x638] sm:$0xff]
      %v3006 = vld [vmem:[%s2805 + $0x640] sm:$0xff]
      %v3007 = vld [vmem:[%s2805 + $0x648] sm:$0xff]
      %v3008 = vld [vmem:[%s2805 + $0x650] sm:$0xff]
      %v3009 = vld [vmem:[%s2805 + $0x658] sm:$0xff]
      %v3010 = vld [vmem:[%s2805 + $0x660] sm:$0xff]
      %v3011 = vld [vmem:[%s2805 + $0x668] sm:$0xff]
      %v3012 = vld [vmem:[%s2805 + $0x670] sm:$0xff]
      %v3013 = vld [vmem:[%s2805 + $0x678] sm:$0xff]
      %v3014 = vld [vmem:[%s2805 + $0x680] sm:$0xff]
      %v3015 = vld [vmem:[%s2805 + $0x688] sm:$0xff]
      %v3016 = vld [vmem:[%s2805 + $0x690] sm:$0xff]
      %v3017 = vld [vmem:[%s2805 + $0x698] sm:$0xff]
      %v3018 = vld [vmem:[%s2805 + $0x6a0] sm:$0xff]
      %v3019 = vld [vmem:[%s2805 + $0x6a8] sm:$0xff]
      %v3020 = vld [vmem:[%s2805 + $0x6b0] sm:$0xff]
      %v3021 = vld [vmem:[%s2805 + $0x6b8] sm:$0xff]
      %v3022 = vld [vmem:[%s2805 + $0x6c0] sm:$0xff]
      %v3023 = vld [vmem:[%s2805 + $0x6c8] sm:$0xff]
      %v3024 = vld [vmem:[%s2805 + $0x6d0] sm:$0xff]
      %v3025 = vld [vmem:[%s2805 + $0x6d8] sm:$0xff]
      %v3026 = vld [vmem:[%s2805 + $0x6e0] sm:$0xff]
      %v3027 = vld [vmem:[%s2805 + $0x6e8] sm:$0xff]
      %v3028 = vld [vmem:[%s2805 + $0x6f0] sm:$0xff]
      %v3029 = vld [vmem:[%s2805 + $0x6f8] sm:$0xff]
      %v3030 = vld [vmem:[%s2805 + $0x700] sm:$0xff]
      %v3031 = vld [vmem:[%s2805 + $0x708] sm:$0xff]
      %v3032 = vld [vmem:[%s2805 + $0x710] sm:$0xff]
      %v3033 = vld [vmem:[%s2805 + $0x718] sm:$0xff]
      %v3034 = vld [vmem:[%s2805 + $0x720] sm:$0xff]
      %v3035 = vld [vmem:[%s2805 + $0x728] sm:$0xff]
      %v3036 = vld [vmem:[%s2805 + $0x730] sm:$0xff]
      %v3037 = vld [vmem:[%s2805 + $0x738] sm:$0xff]
      %v3038 = vld [vmem:[%s2805 + $0x740] sm:$0xff]
      %v3039 = vld [vmem:[%s2805 + $0x748] sm:$0xff]
      %v3040 = vld [vmem:[%s2805 + $0x750] sm:$0xff]
      %v3041 = vld [vmem:[%s2805 + $0x758] sm:$0xff]
      %v3042 = vld [vmem:[%s2805 + $0x760] sm:$0xff]
      %v3043 = vld [vmem:[%s2805 + $0x768] sm:$0xff]
      %v3044 = vld [vmem:[%s2805 + $0x770] sm:$0xff]
      %v3045 = vld [vmem:[%s2805 + $0x778] sm:$0xff]
      %v3046 = vld [vmem:[%s2805 + $0x780] sm:$0xff]
      %v3047 = vld [vmem:[%s2805 + $0x788] sm:$0xff]
      %v3048 = vld [vmem:[%s2805 + $0x790] sm:$0xff]
      %v3049 = vld [vmem:[%s2805 + $0x798] sm:$0xff]
      %v3050 = vld [vmem:[%s2805 + $0x7a0] sm:$0xff]
      %v3051 = vld [vmem:[%s2805 + $0x7a8] sm:$0xff]
      %v3052 = vld [vmem:[%s2805 + $0x7b0] sm:$0xff]
      %v3053 = vld [vmem:[%s2805 + $0x7b8] sm:$0xff]
      %v3054 = vld [vmem:[%s2805 + $0x7c0] sm:$0xff]
      %v3055 = vld [vmem:[%s2805 + $0x7c8] sm:$0xff]
      %v3056 = vld [vmem:[%s2805 + $0x7d0] sm:$0xff]
      %v3057 = vld [vmem:[%s2805 + $0x7d8] sm:$0xff]
      %v3058 = vld [vmem:[%s2805 + $0x7e0] sm:$0xff]
      %v3059 = vld [vmem:[%s2805 + $0x7e8] sm:$0xff]
      %v3060 = vld [vmem:[%s2805 + $0x7f0] sm:$0xff]
      %v3061 = vld [vmem:[%s2805 + $0x7f8] sm:$0xff]
      %s3062 = scalar_lea.vmem %s13, 1
      %v3063 = vld [vmem:[%s3062] sm:$0x1]
      %v3065 = vperm.slane %v3063, 0
      %3067 = vmatpush.msra.mxu0 %v2821
      %3068 = vmatpush.msra.mxu0 %v2820
      %3069 = vmatpush.msra.mxu0 %v2819
      %3070 = vmatpush.msra.mxu0 %v2818
      %3071 = vmatpush.msra.mxu0 %v2817
      %3072 = vmatpush.msra.mxu0 %v2816
      %3073 = vmatpush.msra.mxu0 %v2815
      %3074 = vmatpush.msra.mxu0 %v2814
      %3075 = vmatpush.msra.mxu0 %v2813
      %3076 = vmatpush.msra.mxu0 %v2812
      %3077 = vmatpush.msra.mxu0 %v2811
      %3078 = vmatpush.msra.mxu0 %v2810
      %3079 = vmatpush.msra.mxu0 %v2809
      %3080 = vmatpush.msra.mxu0 %v2808
      %3081 = vmatpush.msra.mxu0 %v2807
      %3082 = vmatpush.msra.mxu0 %v2806
      %3083 = vmatmul.f32.gmra.mxu0 %v2789
      %v3084 = vpop.f32.mrf.mxu0
      %v3085 = vadd.f32 %v3065, %v3084
      %3086 = vdwg.mxu0
      %3087 = vmatpush.msra.mxu0 %v2837
      %3088 = vmatpush.msra.mxu0 %v2836
      %3089 = vmatpush.msra.mxu0 %v2835
      %3090 = vmatpush.msra.mxu0 %v2834
      %3091 = vmatpush.msra.mxu0 %v2833
      %3092 = vmatpush.msra.mxu0 %v2832
      %3093 = vmatpush.msra.mxu0 %v2831
      %3094 = vmatpush.msra.mxu0 %v2830
      %3095 = vmatpush.msra.mxu0 %v2829
      %3096 = vmatpush.msra.mxu0 %v2828
      %3097 = vmatpush.msra.mxu0 %v2827
      %3098 = vmatpush.msra.mxu0 %v2826
      %3099 = vmatpush.msra.mxu0 %v2825
      %3100 = vmatpush.msra.mxu0 %v2824
      %3101 = vmatpush.msra.mxu0 %v2823
      %3102 = vmatpush.msra.mxu0 %v2822
      %3103 = vmatmul.f32.gmra.mxu0 %v2790
      %v3104 = vpop.f32.mrf.mxu0
      %v3105 = vadd.f32 %v3085, %v3104
      %3106 = vdwg.mxu0
      %3107 = vmatpush.msra.mxu0 %v2853
      %3108 = vmatpush.msra.mxu0 %v2852
      %3109 = vmatpush.msra.mxu0 %v2851
      %3110 = vmatpush.msra.mxu0 %v2850
      %3111 = vmatpush.msra.mxu0 %v2849
      %3112 = vmatpush.msra.mxu0 %v2848
      %3113 = vmatpush.msra.mxu0 %v2847
      %3114 = vmatpush.msra.mxu0 %v2846
      %3115 = vmatpush.msra.mxu0 %v2845
      %3116 = vmatpush.msra.mxu0 %v2844
      %3117 = vmatpush.msra.mxu0 %v2843
      %3118 = vmatpush.msra.mxu0 %v2842
      %3119 = vmatpush.msra.mxu0 %v2841
      %3120 = vmatpush.msra.mxu0 %v2840
      %3121 = vmatpush.msra.mxu0 %v2839
      %3122 = vmatpush.msra.mxu0 %v2838
      %3123 = vmatmul.f32.gmra.mxu0 %v2791
      %v3124 = vpop.f32.mrf.mxu0
      %v3125 = vadd.f32 %v3105, %v3124
      %3126 = vdwg.mxu0
      %3127 = vmatpush.msra.mxu0 %v2869
      %3128 = vmatpush.msra.mxu0 %v2868
      %3129 = vmatpush.msra.mxu0 %v2867
      %3130 = vmatpush.msra.mxu0 %v2866
      %3131 = vmatpush.msra.mxu0 %v2865
      %3132 = vmatpush.msra.mxu0 %v2864
      %3133 = vmatpush.msra.mxu0 %v2863
      %3134 = vmatpush.msra.mxu0 %v2862
      %3135 = vmatpush.msra.mxu0 %v2861
      %3136 = vmatpush.msra.mxu0 %v2860
      %3137 = vmatpush.msra.mxu0 %v2859
      %3138 = vmatpush.msra.mxu0 %v2858
      %3139 = vmatpush.msra.mxu0 %v2857
      %3140 = vmatpush.msra.mxu0 %v2856
      %3141 = vmatpush.msra.mxu0 %v2855
      %3142 = vmatpush.msra.mxu0 %v2854
      %3143 = vmatmul.f32.gmra.mxu0 %v2792
      %v3144 = vpop.f32.mrf.mxu0
      %v3145 = vadd.f32 %v3125, %v3144
      %3146 = vdwg.mxu0
      %3147 = vmatpush.msra.mxu0 %v2885
      %3148 = vmatpush.msra.mxu0 %v2884
      %3149 = vmatpush.msra.mxu0 %v2883
      %3150 = vmatpush.msra.mxu0 %v2882
      %3151 = vmatpush.msra.mxu0 %v2881
      %3152 = vmatpush.msra.mxu0 %v2880
      %3153 = vmatpush.msra.mxu0 %v2879
      %3154 = vmatpush.msra.mxu0 %v2878
      %3155 = vmatpush.msra.mxu0 %v2877
      %3156 = vmatpush.msra.mxu0 %v2876
      %3157 = vmatpush.msra.mxu0 %v2875
      %3158 = vmatpush.msra.mxu0 %v2874
      %3159 = vmatpush.msra.mxu0 %v2873
      %3160 = vmatpush.msra.mxu0 %v2872
      %3161 = vmatpush.msra.mxu0 %v2871
      %3162 = vmatpush.msra.mxu0 %v2870
      %3163 = vmatmul.f32.gmra.mxu0 %v2793
      %v3164 = vpop.f32.mrf.mxu0
      %v3165 = vadd.f32 %v3145, %v3164
      %3166 = vdwg.mxu0
      %3167 = vmatpush.msra.mxu0 %v2901
      %3168 = vmatpush.msra.mxu0 %v2900
      %3169 = vmatpush.msra.mxu0 %v2899
      %3170 = vmatpush.msra.mxu0 %v2898
      %3171 = vmatpush.msra.mxu0 %v2897
      %3172 = vmatpush.msra.mxu0 %v2896
      %3173 = vmatpush.msra.mxu0 %v2895
      %3174 = vmatpush.msra.mxu0 %v2894
      %3175 = vmatpush.msra.mxu0 %v2893
      %3176 = vmatpush.msra.mxu0 %v2892
      %3177 = vmatpush.msra.mxu0 %v2891
      %3178 = vmatpush.msra.mxu0 %v2890
      %3179 = vmatpush.msra.mxu0 %v2889
      %3180 = vmatpush.msra.mxu0 %v2888
      %3181 = vmatpush.msra.mxu0 %v2887
      %3182 = vmatpush.msra.mxu0 %v2886
      %3183 = vmatmul.f32.gmra.mxu0 %v2794
      %v3184 = vpop.f32.mrf.mxu0
      %v3185 = vadd.f32 %v3165, %v3184
      %3186 = vdwg.mxu0
      %3187 = vmatpush.msra.mxu0 %v2917
      %3188 = vmatpush.msra.mxu0 %v2916
      %3189 = vmatpush.msra.mxu0 %v2915
      %3190 = vmatpush.msra.mxu0 %v2914
      %3191 = vmatpush.msra.mxu0 %v2913
      %3192 = vmatpush.msra.mxu0 %v2912
      %3193 = vmatpush.msra.mxu0 %v2911
      %3194 = vmatpush.msra.mxu0 %v2910
      %3195 = vmatpush.msra.mxu0 %v2909
      %3196 = vmatpush.msra.mxu0 %v2908
      %3197 = vmatpush.msra.mxu0 %v2907
      %3198 = vmatpush.msra.mxu0 %v2906
      %3199 = vmatpush.msra.mxu0 %v2905
      %3200 = vmatpush.msra.mxu0 %v2904
      %3201 = vmatpush.msra.mxu0 %v2903
      %3202 = vmatpush.msra.mxu0 %v2902
      %3203 = vmatmul.f32.gmra.mxu0 %v2795
      %v3204 = vpop.f32.mrf.mxu0
      %v3205 = vadd.f32 %v3185, %v3204
      %3206 = vdwg.mxu0
      %3207 = vmatpush.msra.mxu0 %v2933
      %3208 = vmatpush.msra.mxu0 %v2932
      %3209 = vmatpush.msra.mxu0 %v2931
      %3210 = vmatpush.msra.mxu0 %v2930
      %3211 = vmatpush.msra.mxu0 %v2929
      %3212 = vmatpush.msra.mxu0 %v2928
      %3213 = vmatpush.msra.mxu0 %v2927
      %3214 = vmatpush.msra.mxu0 %v2926
      %3215 = vmatpush.msra.mxu0 %v2925
      %3216 = vmatpush.msra.mxu0 %v2924
      %3217 = vmatpush.msra.mxu0 %v2923
      %3218 = vmatpush.msra.mxu0 %v2922
      %3219 = vmatpush.msra.mxu0 %v2921
      %3220 = vmatpush.msra.mxu0 %v2920
      %3221 = vmatpush.msra.mxu0 %v2919
      %3222 = vmatpush.msra.mxu0 %v2918
      %3223 = vmatmul.f32.gmra.mxu0 %v2796
      %v3224 = vpop.f32.mrf.mxu0
      %v3225 = vadd.f32 %v3205, %v3224
      %3226 = vdwg.mxu0
      %3227 = vmatpush.msra.mxu0 %v2949
      %3228 = vmatpush.msra.mxu0 %v2948
      %3229 = vmatpush.msra.mxu0 %v2947
      %3230 = vmatpush.msra.mxu0 %v2946
      %3231 = vmatpush.msra.mxu0 %v2945
      %3232 = vmatpush.msra.mxu0 %v2944
      %3233 = vmatpush.msra.mxu0 %v2943
      %3234 = vmatpush.msra.mxu0 %v2942
      %3235 = vmatpush.msra.mxu0 %v2941
      %3236 = vmatpush.msra.mxu0 %v2940
      %3237 = vmatpush.msra.mxu0 %v2939
      %3238 = vmatpush.msra.mxu0 %v2938
      %3239 = vmatpush.msra.mxu0 %v2937
      %3240 = vmatpush.msra.mxu0 %v2936
      %3241 = vmatpush.msra.mxu0 %v2935
      %3242 = vmatpush.msra.mxu0 %v2934
      %3243 = vmatmul.f32.gmra.mxu0 %v2797
      %v3244 = vpop.f32.mrf.mxu0
      %v3245 = vadd.f32 %v3225, %v3244
      %3246 = vdwg.mxu0
      %3247 = vmatpush.msra.mxu0 %v2965
      %3248 = vmatpush.msra.mxu0 %v2964
      %3249 = vmatpush.msra.mxu0 %v2963
      %3250 = vmatpush.msra.mxu0 %v2962
      %3251 = vmatpush.msra.mxu0 %v2961
      %3252 = vmatpush.msra.mxu0 %v2960
      %3253 = vmatpush.msra.mxu0 %v2959
      %3254 = vmatpush.msra.mxu0 %v2958
      %3255 = vmatpush.msra.mxu0 %v2957
      %3256 = vmatpush.msra.mxu0 %v2956
      %3257 = vmatpush.msra.mxu0 %v2955
      %3258 = vmatpush.msra.mxu0 %v2954
      %3259 = vmatpush.msra.mxu0 %v2953
      %3260 = vmatpush.msra.mxu0 %v2952
      %3261 = vmatpush.msra.mxu0 %v2951
      %3262 = vmatpush.msra.mxu0 %v2950
      %3263 = vmatmul.f32.gmra.mxu0 %v2798
      %v3264 = vpop.f32.mrf.mxu0
      %v3265 = vadd.f32 %v3245, %v3264
      %3266 = vdwg.mxu0
      %3267 = vmatpush.msra.mxu0 %v2981
      %3268 = vmatpush.msra.mxu0 %v2980
      %3269 = vmatpush.msra.mxu0 %v2979
      %3270 = vmatpush.msra.mxu0 %v2978
      %3271 = vmatpush.msra.mxu0 %v2977
      %3272 = vmatpush.msra.mxu0 %v2976
      %3273 = vmatpush.msra.mxu0 %v2975
      %3274 = vmatpush.msra.mxu0 %v2974
      %3275 = vmatpush.msra.mxu0 %v2973
      %3276 = vmatpush.msra.mxu0 %v2972
      %3277 = vmatpush.msra.mxu0 %v2971
      %3278 = vmatpush.msra.mxu0 %v2970
      %3279 = vmatpush.msra.mxu0 %v2969
      %3280 = vmatpush.msra.mxu0 %v2968
      %3281 = vmatpush.msra.mxu0 %v2967
      %3282 = vmatpush.msra.mxu0 %v2966
      %3283 = vmatmul.f32.gmra.mxu0 %v2799
      %v3284 = vpop.f32.mrf.mxu0
      %v3285 = vadd.f32 %v3265, %v3284
      %3286 = vdwg.mxu0
      %3287 = vmatpush.msra.mxu0 %v2997
      %3288 = vmatpush.msra.mxu0 %v2996
      %3289 = vmatpush.msra.mxu0 %v2995
      %3290 = vmatpush.msra.mxu0 %v2994
      %3291 = vmatpush.msra.mxu0 %v2993
      %3292 = vmatpush.msra.mxu0 %v2992
      %3293 = vmatpush.msra.mxu0 %v2991
      %3294 = vmatpush.msra.mxu0 %v2990
      %3295 = vmatpush.msra.mxu0 %v2989
      %3296 = vmatpush.msra.mxu0 %v2988
      %3297 = vmatpush.msra.mxu0 %v2987
      %3298 = vmatpush.msra.mxu0 %v2986
      %3299 = vmatpush.msra.mxu0 %v2985
      %3300 = vmatpush.msra.mxu0 %v2984
      %3301 = vmatpush.msra.mxu0 %v2983
      %3302 = vmatpush.msra.mxu0 %v2982
      %3303 = vmatmul.f32.gmra.mxu0 %v2800
      %v3304 = vpop.f32.mrf.mxu0
      %v3305 = vadd.f32 %v3285, %v3304
      %3306 = vdwg.mxu0
      %3307 = vmatpush.msra.mxu0 %v3013
      %3308 = vmatpush.msra.mxu0 %v3012
      %3309 = vmatpush.msra.mxu0 %v3011
      %3310 = vmatpush.msra.mxu0 %v3010
      %3311 = vmatpush.msra.mxu0 %v3009
      %3312 = vmatpush.msra.mxu0 %v3008
      %3313 = vmatpush.msra.mxu0 %v3007
      %3314 = vmatpush.msra.mxu0 %v3006
      %3315 = vmatpush.msra.mxu0 %v3005
      %3316 = vmatpush.msra.mxu0 %v3004
      %3317 = vmatpush.msra.mxu0 %v3003
      %3318 = vmatpush.msra.mxu0 %v3002
      %3319 = vmatpush.msra.mxu0 %v3001
      %3320 = vmatpush.msra.mxu0 %v3000
      %3321 = vmatpush.msra.mxu0 %v2999
      %3322 = vmatpush.msra.mxu0 %v2998
      %3323 = vmatmul.f32.gmra.mxu0 %v2801
      %v3324 = vpop.f32.mrf.mxu0
      %v3325 = vadd.f32 %v3305, %v3324
      %3326 = vdwg.mxu0
      %3327 = vmatpush.msra.mxu0 %v3029
      %3328 = vmatpush.msra.mxu0 %v3028
      %3329 = vmatpush.msra.mxu0 %v3027
      %3330 = vmatpush.msra.mxu0 %v3026
      %3331 = vmatpush.msra.mxu0 %v3025
      %3332 = vmatpush.msra.mxu0 %v3024
      %3333 = vmatpush.msra.mxu0 %v3023
      %3334 = vmatpush.msra.mxu0 %v3022
      %3335 = vmatpush.msra.mxu0 %v3021
      %3336 = vmatpush.msra.mxu0 %v3020
      %3337 = vmatpush.msra.mxu0 %v3019
      %3338 = vmatpush.msra.mxu0 %v3018
      %3339 = vmatpush.msra.mxu0 %v3017
      %3340 = vmatpush.msra.mxu0 %v3016
      %3341 = vmatpush.msra.mxu0 %v3015
      %3342 = vmatpush.msra.mxu0 %v3014
      %3343 = vmatmul.f32.gmra.mxu0 %v2802
      %v3344 = vpop.f32.mrf.mxu0
      %v3345 = vadd.f32 %v3325, %v3344
      %3346 = vdwg.mxu0
      %3347 = vmatpush.msra.mxu0 %v3045
      %3348 = vmatpush.msra.mxu0 %v3044
      %3349 = vmatpush.msra.mxu0 %v3043
      %3350 = vmatpush.msra.mxu0 %v3042
      %3351 = vmatpush.msra.mxu0 %v3041
      %3352 = vmatpush.msra.mxu0 %v3040
      %3353 = vmatpush.msra.mxu0 %v3039
      %3354 = vmatpush.msra.mxu0 %v3038
      %3355 = vmatpush.msra.mxu0 %v3037
      %3356 = vmatpush.msra.mxu0 %v3036
      %3357 = vmatpush.msra.mxu0 %v3035
      %3358 = vmatpush.msra.mxu0 %v3034
      %3359 = vmatpush.msra.mxu0 %v3033
      %3360 = vmatpush.msra.mxu0 %v3032
      %3361 = vmatpush.msra.mxu0 %v3031
      %3362 = vmatpush.msra.mxu0 %v3030
      %3363 = vmatmul.f32.gmra.mxu0 %v2803
      %v3364 = vpop.f32.mrf.mxu0
      %v3365 = vadd.f32 %v3345, %v3364
      %3366 = vdwg.mxu0
      %3367 = vmatpush.msra.mxu0 %v3061
      %3368 = vmatpush.msra.mxu0 %v3060
      %3369 = vmatpush.msra.mxu0 %v3059
      %3370 = vmatpush.msra.mxu0 %v3058
      %3371 = vmatpush.msra.mxu0 %v3057
      %3372 = vmatpush.msra.mxu0 %v3056
      %3373 = vmatpush.msra.mxu0 %v3055
      %3374 = vmatpush.msra.mxu0 %v3054
      %3375 = vmatpush.msra.mxu0 %v3053
      %3376 = vmatpush.msra.mxu0 %v3052
      %3377 = vmatpush.msra.mxu0 %v3051
      %3378 = vmatpush.msra.mxu0 %v3050
      %3379 = vmatpush.msra.mxu0 %v3049
      %3380 = vmatpush.msra.mxu0 %v3048
      %3381 = vmatpush.msra.mxu0 %v3047
      %3382 = vmatpush.msra.mxu0 %v3046
      %3383 = vmatmul.f32.gmra.mxu0 %v2804
      %v3384 = vpop.f32.mrf.mxu0
      %v3385 = vadd.f32 %v3365, %v3384
      %3386 = vdwg.mxu0
      %v3387 = vadd.f32 %v2363, %v3385
      %s3388 = scalar_lea.vmem %s14, 1
      %v3389 = vld [vmem:[%s3388] sm:$0x1]
      %s3390 = scalar_lea.vmem %s15, 1
      %v3391 = vld [vmem:[%s3390] sm:$0x1]
      %v3392 = vsel %vm561, %v3387, 0.0
      %3393 = vadd.xlane.f32.xlu0 %v3392
      %v3394 = vpop.xlane.xlu0 %3393
      %v3395 = vmul.f32 %v3394, %v907
      %v3396 = vsub.f32 %v3387, %v3395
      %v3397 = vmul.f32 %v3396, %v3396
      %v3398 = vsel %vm561, %v3397, 0.0
      %3399 = vadd.xlane.f32.xlu0 %v3398
      %v3400 = vpop.xlane.xlu0 %3399
      %v3401 = vmul.f32 %v3400, %v907
      %v3402 = vadd.f32 %v3401, 1e-05
      %v3403 = vrsqrt.pop %v3402
      %v3404 = vmul.f32 %v3403, %v3402
      %v3405 = vmul.f32 %v3404, %v3403
      %v3406 = vmul.f32 0.5, %v3405
      %v3407 = vsub.f32 1.5, %v3406
      %v3408 = vmul.f32 %v3403, %v3407
      %vm3409 = vweird.f32 %v3402
      %vm3410 = vweird.f32 %v3403
      %vm3411 = vmor %vm3409, %vm3410
      %v3412 = vsel %vm3411, %v3403, %v3408
      %v3413 = vmul.f32 %v3396, %v3412
      %v3415 = vperm.slane %v3389, 0
      %v3417 = vmul.f32 %v3413, %v3415
      %v3419 = vperm.slane %v3391, 0
      %v3421 = vadd.f32 %v3417, %v3419
      %3422 = vst.msk [vmem:[%s516] sm:$0xff] %vm561, %v3421
      %p3423 = scmp.lt.s32.totalorder %s27, 1
      %s3424 = scalar_select %p3423, %s27, 1
      %s3425 = smul.addr %s3424, 8
      %s3426 = scalar_lea.vmem %s16, %s3425
      // Predicated region
      $region85: #{transformer_forward.2} parent=83 // pred_check
        %p3427 = pneg %p386
      $region86: #{transformer_forward.2} parent=83 // pred_check_branch
        %3429 = sbr.rel (%p3427) target = $region88
      $region87: #{transformer_forward.2} parent=83 // pred_region
        _
      $region88: #{transformer_forward.2} parent=83 // pred_fallthru
        _
    $region84: #{transformer_forward.2} parent=5 // pred_fallthru
      _
    %p3430 = scmp.le.s32.totalorder 2, %s22
    // Predicated region
    $region89: #{transformer_forward.2} parent=5 // pred_check
      %p3431 = pneg %p3430
    $region90: #{transformer_forward.2} parent=5 // pred_check_branch
      %3433 = sbr.rel (%p3431) target = $region92
    $region91: #{transformer_forward.2} parent=5 // pred_region
      %s3434 = ssub.s32 %s22, 2
      // Predicated region
      $region93: #{transformer_forward.2} parent=91 // pred_check
        %p3435 = pneg %p392
      $region94: #{transformer_forward.2} parent=91 // pred_check_branch
        %3437 = sbr.rel (%p3435) target = $region96
      $region95: #{transformer_forward.2} parent=91 // pred_region
        %p3438 = scmp.lt.s32.totalorder %s28, 1
        %s3439 = scalar_select %p3438, %s28, 1
        %s3440 = smul.addr %s3439, 8
        %s3441 = scalar_lea.vmem %s16, %s3440
      $region96: #{transformer_forward.2} parent=91 // pred_fallthru
        _
    $region92: #{transformer_forward.2} parent=5 // pred_fallthru
      _
  $region6: #{transformer_forward.2} parent=0 // loop_footer
    %s26 = sadd.s32 1, %s22
  $region7: #{transformer_forward.2} parent=0 // loop_footer_branch
    %21 = sbr.rel target = $region3
  $region8: #{transformer_forward.2} parent=0 // loop_exit
    _

</llo_original>
